<compile_context>
chip_gen: v6e
topology: v6e:2x2x1
jax: 0.10.0
libtpu: 0.0.40
codegen_flags: <defaults>
</compile_context>

<pallas_src>
import math

import jax
import jax.numpy as jnp
from jax import lax
from jax.experimental import pallas as pl
from jax.experimental.pallas import tpu as pltpu


# ----------------------------- static model dims -----------------------------
SEQ_LEN = 8          # L
BATCH = 2            # N
E0 = 64              # attention_0_0 embed dim (seq-first)
E1 = 40              # attention_1_0 embed dim (batch-first)
HEADS = 4
HD0 = E0 // HEADS    # 16
HD1 = E1 // HEADS    # 10
HD1P = 16            # padded head dim for attention_1_0 (lane-aligned)
E1P = HEADS * HD1P   # 64

# Packed-parameter slab layout (row offsets are multiples of 8 -> aligned).
P0_BIAS_ROW = 2 * E0                 # 128
P0_ROWS, P0_COLS = 136, 8 * E0       # (136, 512): [QKV W | out W] + bias row
P1_QKV_BIAS_ROW = E1                 # 40
P1_OUT_W_ROW = 48                    # first multiple of 8 >= 41
P1_OUT_B_ROW = P1_OUT_W_ROW + E1P    # 112
P1_ROWS, P1_COLS = 120, 3 * E1P      # (120, 192)


# --------------------------------- kernel ------------------------------------
def _model_kernel(x_ref, y_ref, p0_ref, p1_ref, x_out_ref, y_out_ref):
    L = SEQ_LEN

    # ---------- attention_0_0 : E=64, both batches packed along lanes ----------
    # Fused QKV for both batches: one (8,128)x(128,384) matmul against a
    # block-diagonal weight (q-scale already folded in host-side).
    x = x_ref[...]                                                   # (8, 128)
    qkv0 = jnp.dot(x, p0_ref[0:2 * E0, 0:6 * E0],
                   preferred_element_type=jnp.float32) \
        + p0_ref[P0_BIAS_ROW:P0_BIAS_ROW + 1, 0:6 * E0]              # (8, 384)

    ones_col = jnp.ones((L, 1), jnp.float32)
    ctx0_parts = []
    for n in range(BATCH):                       # static unroll, N=2
        for h in range(HEADS):                   # static unroll, H=4
            lo = n * E0 + h * HD0
            qh = qkv0[:, lo:lo + HD0]                                # pre-scaled
            kh = qkv0[:, 2 * E0 + lo:2 * E0 + lo + HD0]
            vh = qkv0[:, 4 * E0 + lo:4 * E0 + lo + HD0]
            s = lax.dot_general(qh, kh, (((1,), (1,)), ((), ())),
                                preferred_element_type=jnp.float32)  # (8, 8)
            p = jnp.exp(s - jnp.max(s, axis=-1, keepdims=True))
            # Row-sum via MXU (ones column appended to V) instead of an XLU sum.
            o = jnp.dot(p, jnp.concatenate([vh, ones_col], axis=-1),
                        preferred_element_type=jnp.float32)          # (8, 17)
            ctx0_parts.append(
                o[:, :HD0] * pl.reciprocal(o[:, HD0:HD0 + 1], approx=False))
    ctx0 = jnp.concatenate(ctx0_parts, axis=-1)                      # (8, 128)
    # Block-diagonal out-projection for both batches in one matmul.
    out0 = jnp.dot(ctx0, p0_ref[0:2 * E0, 6 * E0:8 * E0],
                   preferred_element_type=jnp.float32) \
        + p0_ref[P0_BIAS_ROW:P0_BIAS_ROW + 1, 6 * E0:8 * E0]         # (8, 128)
    x_out_ref[...] = out0.astype(x_out_ref.dtype)                    # lane-dense

    # ---------- attention_1_0 : E=40, heads zero-padded to 16 lanes ------------
    # Both batches stacked along sublanes -> one (16,40)x(40,192) QKV matmul.
    y = y_ref[...]                                                   # (16, 40)
    qkv1 = jnp.dot(y, p1_ref[0:E1, :],
                   preferred_element_type=jnp.float32) \
        + p1_ref[P1_QKV_BIAS_ROW:P1_QKV_BIAS_ROW + 1, :]             # (16, 192)

    ctx1_rows = []
    for n in range(BATCH):
        parts = []
        r0 = n * L
        for h in range(HEADS):
            c0 = h * HD1P
            qh = qkv1[r0:r0 + L, c0:c0 + HD1P]                       # pre-scaled
            kh = qkv1[r0:r0 + L, E1P + c0:E1P + c0 + HD1P]
            vh = qkv1[r0:r0 + L, 2 * E1P + c0:2 * E1P + c0 + HD1P]
            s = lax.dot_general(qh, kh, (((1,), (1,)), ((), ())),
                                preferred_element_type=jnp.float32)  # (8, 8)
            p = jnp.exp(s - jnp.max(s, axis=-1, keepdims=True))
            # V's pad lane HD1 carries a baked-in 1.0, so the PV matmul also
            # yields the softmax row-sum; leftover pad lanes are killed by the
            # zero rows of the padded out-projection weight.
            o = jnp.dot(p, vh, preferred_element_type=jnp.float32)   # (8, 16)
            parts.append(o * pl.reciprocal(o[:, HD1:HD1 + 1], approx=False))
        ctx1_rows.append(jnp.concatenate(parts, axis=-1))            # (8, 64)
    ctx1 = jnp.concatenate(ctx1_rows, axis=0)                        # (16, 64)
    out1 = jnp.dot(ctx1, p1_ref[P1_OUT_W_ROW:P1_OUT_W_ROW + E1P, 0:E1],
                   preferred_element_type=jnp.float32) \
        + p1_ref[P1_OUT_B_ROW:P1_OUT_B_ROW + 1, 0:E1]                # (16, 40)
    y_out_ref[...] = out1.astype(y_out_ref.dtype)


# --------------------------- host-side param packing -------------------------
def _block_diag2(a):
    z = jnp.zeros_like(a)
    return jnp.concatenate(
        [jnp.concatenate([a, z], axis=1), jnp.concatenate([z, a], axis=1)],
        axis=0)


def _pack_params0(w_in, b_in, w_out, b_out):
    """attention_0_0 params -> one (136, 512) slab (q-scale folded in)."""
    scale = 1.0 / math.sqrt(HD0)
    wq, wk, wv = w_in[0:E0], w_in[E0:2 * E0], w_in[2 * E0:3 * E0]
    bq, bk, bv = b_in[0:E0], b_in[E0:2 * E0], b_in[2 * E0:3 * E0]
    w_qkv = jnp.concatenate(
        [_block_diag2((wq * scale).T), _block_diag2(wk.T), _block_diag2(wv.T)],
        axis=1)                                                      # (128, 384)
    b_qkv = jnp.concatenate(
        [jnp.tile(bq * scale, 2), jnp.tile(bk, 2), jnp.tile(bv, 2)])  # (384,)
    w_o = _block_diag2(w_out.T)                                      # (128, 128)
    b_o = jnp.tile(b_out, 2)                                         # (128,)

    p0 = jnp.zeros((P0_ROWS, P0_COLS), jnp.float32)
    p0 = p0.at[0:2 * E0, 0:6 * E0].set(w_qkv)
    p0 = p0.at[P0_BIAS_ROW, 0:6 * E0].set(b_qkv)
    p0 = p0.at[0:2 * E0, 6 * E0:8 * E0].set(w_o)
    p0 = p0.at[P0_BIAS_ROW, 6 * E0:8 * E0].set(b_o)
    return p0


def _pack_params1(w_in, b_in, w_out, b_out):
    """attention_1_0 params -> one (120, 192) slab (heads padded 10 -> 16)."""
    scale = 1.0 / math.sqrt(HD1)

    def pad_w_t(w):       # (40, 40) torch rows=out feats -> (40, 64) padded heads
        wt = w.T.reshape(E1, HEADS, HD1)
        return jnp.pad(wt, ((0, 0), (0, 0), (0, HD1P - HD1))).reshape(E1, E1P)

    def pad_b(b):
        return jnp.pad(b.reshape(HEADS, HD1), ((0, 0), (0, HD1P - HD1)))

    wq, wk, wv = w_in[0:E1], w_in[E1:2 * E1], w_in[2 * E1:3 * E1]
    bq, bk, bv = b_in[0:E1], b_in[E1:2 * E1], b_in[2 * E1:3 * E1]

    w_qkv = jnp.concatenate([pad_w_t(wq) * scale, pad_w_t(wk), pad_w_t(wv)],
                            axis=1)                                  # (40, 192)
    bq_p = (pad_b(bq) * scale).reshape(E1P)
    bk_p = pad_b(bk).reshape(E1P)
    # Ones lane at per-head index HD1 -> PV matmul also produces the softmax sum.
    bv_p = pad_b(bv).at[:, HD1].set(1.0).reshape(E1P)
    b_qkv = jnp.concatenate([bq_p, bk_p, bv_p])                      # (192,)

    w_o = jnp.pad(w_out.T.reshape(HEADS, HD1, E1),
                  ((0, 0), (0, HD1P - HD1), (0, 0))).reshape(E1P, E1)  # (64, 40)

    p1 = jnp.zeros((P1_ROWS, P1_COLS), jnp.float32)
    p1 = p1.at[0:E1, :].set(w_qkv)
    p1 = p1.at[P1_QKV_BIAS_ROW, :].set(b_qkv)
    p1 = p1.at[P1_OUT_W_ROW:P1_OUT_W_ROW + E1P, 0:E1].set(w_o)
    p1 = p1.at[P1_OUT_B_ROW, 0:E1].set(b_out)
    return p1


# --------------------------------- wrapper ------------------------------------
def model_forward(x_lne, y_nle, params0, params1):
    """x_lne: (L, N, 64) seq-first; y_nle: (N, L, 40) batch-first."""
    assert x_lne.shape == (SEQ_LEN, BATCH, E0)
    assert y_nle.shape == (BATCH, SEQ_LEN, E1)

    p0 = _pack_params0(*params0)
    p1 = _pack_params1(*params1)

    # Free (layout-preserving) reshapes only — no transposes.
    x2 = x_lne.reshape(SEQ_LEN, BATCH * E0)      # (8, 128) lane-dense slab
    y2 = y_nle.reshape(BATCH * SEQ_LEN, E1)      # (16, 40) sublane-stacked

    vmem = pltpu.MemorySpace.VMEM
    x0_flat, y0_flat = pl.pallas_call(
        _model_kernel,
        out_shape=(jax.ShapeDtypeStruct((SEQ_LEN, BATCH * E0), jnp.float32),
                   jax.ShapeDtypeStruct((BATCH * SEQ_LEN, E1), jnp.float32)),
        in_specs=[pl.BlockSpec(memory_space=vmem) for _ in range(4)],
        out_specs=(pl.BlockSpec(memory_space=vmem),
                   pl.BlockSpec(memory_space=vmem)),
    )(x2, y2, p0, p1)

    return (x0_flat.reshape(SEQ_LEN, BATCH, E0),
            y0_flat.reshape(BATCH, SEQ_LEN, E1))


# ------------------------------ pure-JAX reference ----------------------------
def mha_reference(x_nle, w_in, b_in, w_out, b_out, num_heads):
    """Matches torch.nn.MultiheadAttention(batch_first=True) semantics."""
    N, L, E = x_nle.shape
    hd = E // num_heads
    wq, wk, wv = w_in[:E], w_in[E:2 * E], w_in[2 * E:]
    bq, bk, bv = b_in[:E], b_in[E:2 * E], b_in[2 * E:]
    q = x_nle @ wq.T + bq
    k = x_nle @ wk.T + bk
    v = x_nle @ wv.T + bv

    def split(t):
        return t.reshape(N, L, num_heads, hd).transpose(0, 2, 1, 3)

    qh = split(q) * (1.0 / math.sqrt(hd))
    kh, vh = split(k), split(v)
    s = jnp.einsum("nhqd,nhkd->nhqk", qh, kh)
    p = jax.nn.softmax(s, axis=-1)
    ctx = jnp.einsum("nhqk,nhkd->nhqd", p, vh)
    ctx = ctx.transpose(0, 2, 1, 3).reshape(N, L, E)
    return ctx @ w_out.T + b_out


def make_mha_params(key, embed_dim):
    ks = jax.random.split(key, 4)
    std = 0.05
    w_in = jax.random.normal(ks[0], (3 * embed_dim, embed_dim), jnp.float32) * std
    b_in = jax.random.normal(ks[1], (3 * embed_dim,), jnp.float32) * std
    w_out = jax.random.normal(ks[2], (embed_dim, embed_dim), jnp.float32) * std
    b_out = jax.random.normal(ks[3], (embed_dim,), jnp.float32) * std
    return (w_in, b_in, w_out, b_out)


if __name__ == "__main__":
    key = jax.random.PRNGKey(0)
    k_x, k_y, k_p0, k_p1 = jax.random.split(key, 4)

    x = jax.random.normal(k_x, (SEQ_LEN, BATCH, E0), jnp.float32)   # seq-first
    y = jax.random.normal(k_y, (BATCH, SEQ_LEN, E1), jnp.float32)   # batch-first

    params0 = make_mha_params(k_p0, E0)
    params1 = make_mha_params(k_p1, E1)

    fwd = jax.jit(model_forward)
    x0, y0 = fwd(x, y, params0, params1)
    x0, y0 = jax.block_until_ready((x0, y0))

    # Correctness check against pure-JAX reference (same math as torch MHA).
    x0_ref = jnp.transpose(
        mha_reference(jnp.transpose(x, (1, 0, 2)), *params0, num_heads=HEADS),
        (1, 0, 2))
    y0_ref = mha_reference(y, *params1, num_heads=HEADS)

    assert x0.shape == (SEQ_LEN, BATCH, E0) and y0.shape == (BATCH, SEQ_LEN, E1)
    # Exact reciprocal is used in the softmax now; remaining tolerance covers
    # the MXU's default f32 matmul precision (same in kernel and reference).
    assert jnp.allclose(x0, x0_ref, atol=2e-3, rtol=2e-3), \
        float(jnp.max(jnp.abs(x0 - x0_ref)))
    assert jnp.allclose(y0, y0_ref, atol=2e-3, rtol=2e-3), \
        float(jnp.max(jnp.abs(y0 - y0_ref)))

    print("KERNEL_OK")
</pallas_src>

<mosaic_0001>
module attributes {stable_mosaic.version = 11 : i64} {
  func.func @_model_kernel(%arg0: memref<8x128xf32, #tpu.memory_space<vmem>>, %arg1: memref<16x40xf32, #tpu.memory_space<vmem>>, %arg2: memref<136x512xf32, #tpu.memory_space<vmem>>, %arg3: memref<120x192xf32, #tpu.memory_space<vmem>>, %arg4: memref<8x128xf32, #tpu.memory_space<vmem>>, %arg5: memref<16x40xf32, #tpu.memory_space<vmem>>) attributes {dimension_semantics = [], scalar_prefetch = 0 : i64, scratch_operands = 0 : i64, tpu.core_type = #tpu.core_type<tc>} {
    %c0 = arith.constant 0 : index
    %c0_0 = arith.constant 0 : index
    %0 = vector.load %arg0[%c0, %c0_0] : memref<8x128xf32, #tpu.memory_space<vmem>>, vector<8x128xf32>
    %c0_1 = arith.constant 0 : index
    %c0_2 = arith.constant 0 : index
    %1 = vector.load %arg2[%c0_1, %c0_2] : memref<136x512xf32, #tpu.memory_space<vmem>>, vector<128x384xf32>
    %cst = arith.constant dense<0.000000e+00> : vector<8x384xf32>
    %2 = tpu.matmul %0, %1, %cst {dimension_numbers = #tpu.dot_dimension_numbers<[1], [0], [0], [1], [0, 0, 1, 1], [], []>} : vector<8x128xf32>, vector<128x384xf32>, vector<8x384xf32> -> vector<8x384xf32>
    %c128 = arith.constant 128 : index
    %c0_3 = arith.constant 0 : index
    %3 = vector.load %arg2[%c128, %c0_3] : memref<136x512xf32, #tpu.memory_space<vmem>>, vector<1x384xf32>
    %4 = vector.broadcast %3 : vector<1x384xf32> to vector<8x384xf32>
    %5 = arith.addf %2, %4 : vector<8x384xf32>
    %cst_4 = arith.constant 1.000000e+00 : f32
    %6 = vector.broadcast %cst_4 : f32 to vector<8x1xf32>
    %7 = vector.extract_strided_slice %5 {offsets = [0, 0], sizes = [8, 16], strides = [1, 1]} : vector<8x384xf32> to vector<8x16xf32>
    %8 = vector.extract_strided_slice %5 {offsets = [0, 128], sizes = [8, 16], strides = [1, 1]} : vector<8x384xf32> to vector<8x16xf32>
    %9 = vector.extract_strided_slice %5 {offsets = [0, 256], sizes = [8, 16], strides = [1, 1]} : vector<8x384xf32> to vector<8x16xf32>
    %cst_5 = arith.constant dense<0.000000e+00> : vector<8x8xf32>
    %10 = tpu.matmul %7, %8, %cst_5 {dimension_numbers = #tpu.dot_dimension_numbers<[1], [1], [0], [0], [0, 0, 1, 0], [], []>} : vector<8x16xf32>, vector<8x16xf32>, vector<8x8xf32> -> vector<8x8xf32>
    %cst_6 = arith.constant dense<0xFF800000> : vector<8xf32>
    %11 = vector.multi_reduction <maximumf>, %10, %cst_6 [1] : vector<8x8xf32> to vector<8xf32>
    %12 = vector.shape_cast %11 : vector<8xf32> to vector<8x1xf32>
    %13 = vector.broadcast %12 : vector<8x1xf32> to vector<8x8xf32>
    %14 = arith.subf %10, %13 : vector<8x8xf32>
    %15 = math.exp %14 : vector<8x8xf32>
    %16 = tpu.concatenate %9, %6 in 1 : vector<8x16xf32>, vector<8x1xf32> -> vector<8x17xf32>
    %cst_7 = arith.constant dense<0.000000e+00> : vector<8x17xf32>
    %17 = tpu.matmul %15, %16, %cst_7 {dimension_numbers = #tpu.dot_dimension_numbers<[1], [0], [0], [1], [0, 0, 1, 1], [], []>} : vector<8x8xf32>, vector<8x17xf32>, vector<8x17xf32> -> vector<8x17xf32>
    %18 = vector.extract_strided_slice %17 {offsets = [0, 0], sizes = [8, 16], strides = [1, 1]} : vector<8x17xf32> to vector<8x16xf32>
    %19 = vector.extract_strided_slice %17 {offsets = [0, 16], sizes = [8, 1], strides = [1, 1]} : vector<8x17xf32> to vector<8x1xf32>
    %20 = tpu.reciprocal %19 : vector<8x1xf32> -> vector<8x1xf32>
    %21 = vector.broadcast %20 : vector<8x1xf32> to vector<8x16xf32>
    %22 = arith.mulf %18, %21 : vector<8x16xf32>
    %23 = vector.extract_strided_slice %5 {offsets = [0, 16], sizes = [8, 16], strides = [1, 1]} : vector<8x384xf32> to vector<8x16xf32>
    %24 = vector.extract_strided_slice %5 {offsets = [0, 144], sizes = [8, 16], strides = [1, 1]} : vector<8x384xf32> to vector<8x16xf32>
    %25 = vector.extract_strided_slice %5 {offsets = [0, 272], sizes = [8, 16], strides = [1, 1]} : vector<8x384xf32> to vector<8x16xf32>
    %cst_8 = arith.constant dense<0.000000e+00> : vector<8x8xf32>
    %26 = tpu.matmul %23, %24, %cst_8 {dimension_numbers = #tpu.dot_dimension_numbers<[1], [1], [0], [0], [0, 0, 1, 0], [], []>} : vector<8x16xf32>, vector<8x16xf32>, vector<8x8xf32> -> vector<8x8xf32>
    %cst_9 = arith.constant dense<0xFF800000> : vector<8xf32>
    %27 = vector.multi_reduction <maximumf>, %26, %cst_9 [1] : vector<8x8xf32> to vector<8xf32>
    %28 = vector.shape_cast %27 : vector<8xf32> to vector<8x1xf32>
    %29 = vector.broadcast %28 : vector<8x1xf32> to vector<8x8xf32>
    %30 = arith.subf %26, %29 : vector<8x8xf32>
    %31 = math.exp %30 : vector<8x8xf32>
    %32 = tpu.concatenate %25, %6 in 1 : vector<8x16xf32>, vector<8x1xf32> -> vector<8x17xf32>
    %cst_10 = arith.constant dense<0.000000e+00> : vector<8x17xf32>
    %33 = tpu.matmul %31, %32, %cst_10 {dimension_numbers = #tpu.dot_dimension_numbers<[1], [0], [0], [1], [0, 0, 1, 1], [], []>} : vector<8x8xf32>, vector<8x17xf32>, vector<8x17xf32> -> vector<8x17xf32>
    %34 = vector.extract_strided_slice %33 {offsets = [0, 0], sizes = [8, 16], strides = [1, 1]} : vector<8x17xf32> to vector<8x16xf32>
    %35 = vector.extract_strided_slice %33 {offsets = [0, 16], sizes = [8, 1], strides = [1, 1]} : vector<8x17xf32> to vector<8x1xf32>
    %36 = tpu.reciprocal %35 : vector<8x1xf32> -> vector<8x1xf32>
    %37 = vector.broadcast %36 : vector<8x1xf32> to vector<8x16xf32>
    %38 = arith.mulf %34, %37 : vector<8x16xf32>
    %39 = vector.extract_strided_slice %5 {offsets = [0, 32], sizes = [8, 16], strides = [1, 1]} : vector<8x384xf32> to vector<8x16xf32>
    %40 = vector.extract_strided_slice %5 {offsets = [0, 160], sizes = [8, 16], strides = [1, 1]} : vector<8x384xf32> to vector<8x16xf32>
    %41 = vector.extract_strided_slice %5 {offsets = [0, 288], sizes = [8, 16], strides = [1, 1]} : vector<8x384xf32> to vector<8x16xf32>
    %cst_11 = arith.constant dense<0.000000e+00> : vector<8x8xf32>
    %42 = tpu.matmul %39, %40, %cst_11 {dimension_numbers = #tpu.dot_dimension_numbers<[1], [1], [0], [0], [0, 0, 1, 0], [], []>} : vector<8x16xf32>, vector<8x16xf32>, vector<8x8xf32> -> vector<8x8xf32>
    %cst_12 = arith.constant dense<0xFF800000> : vector<8xf32>
    %43 = vector.multi_reduction <maximumf>, %42, %cst_12 [1] : vector<8x8xf32> to vector<8xf32>
    %44 = vector.shape_cast %43 : vector<8xf32> to vector<8x1xf32>
    %45 = vector.broadcast %44 : vector<8x1xf32> to vector<8x8xf32>
    %46 = arith.subf %42, %45 : vector<8x8xf32>
    %47 = math.exp %46 : vector<8x8xf32>
    %48 = tpu.concatenate %41, %6 in 1 : vector<8x16xf32>, vector<8x1xf32> -> vector<8x17xf32>
    %cst_13 = arith.constant dense<0.000000e+00> : vector<8x17xf32>
    %49 = tpu.matmul %47, %48, %cst_13 {dimension_numbers = #tpu.dot_dimension_numbers<[1], [0], [0], [1], [0, 0, 1, 1], [], []>} : vector<8x8xf32>, vector<8x17xf32>, vector<8x17xf32> -> vector<8x17xf32>
    %50 = vector.extract_strided_slice %49 {offsets = [0, 0], sizes = [8, 16], strides = [1, 1]} : vector<8x17xf32> to vector<8x16xf32>
    %51 = vector.extract_strided_slice %49 {offsets = [0, 16], sizes = [8, 1], strides = [1, 1]} : vector<8x17xf32> to vector<8x1xf32>
    %52 = tpu.reciprocal %51 : vector<8x1xf32> -> vector<8x1xf32>
    %53 = vector.broadcast %52 : vector<8x1xf32> to vector<8x16xf32>
    %54 = arith.mulf %50, %53 : vector<8x16xf32>
    %55 = vector.extract_strided_slice %5 {offsets = [0, 48], sizes = [8, 16], strides = [1, 1]} : vector<8x384xf32> to vector<8x16xf32>
    %56 = vector.extract_strided_slice %5 {offsets = [0, 176], sizes = [8, 16], strides = [1, 1]} : vector<8x384xf32> to vector<8x16xf32>
    %57 = vector.extract_strided_slice %5 {offsets = [0, 304], sizes = [8, 16], strides = [1, 1]} : vector<8x384xf32> to vector<8x16xf32>
    %cst_14 = arith.constant dense<0.000000e+00> : vector<8x8xf32>
    %58 = tpu.matmul %55, %56, %cst_14 {dimension_numbers = #tpu.dot_dimension_numbers<[1], [1], [0], [0], [0, 0, 1, 0], [], []>} : vector<8x16xf32>, vector<8x16xf32>, vector<8x8xf32> -> vector<8x8xf32>
    %cst_15 = arith.constant dense<0xFF800000> : vector<8xf32>
    %59 = vector.multi_reduction <maximumf>, %58, %cst_15 [1] : vector<8x8xf32> to vector<8xf32>
    %60 = vector.shape_cast %59 : vector<8xf32> to vector<8x1xf32>
    %61 = vector.broadcast %60 : vector<8x1xf32> to vector<8x8xf32>
    %62 = arith.subf %58, %61 : vector<8x8xf32>
    %63 = math.exp %62 : vector<8x8xf32>
    %64 = tpu.concatenate %57, %6 in 1 : vector<8x16xf32>, vector<8x1xf32> -> vector<8x17xf32>
    %cst_16 = arith.constant dense<0.000000e+00> : vector<8x17xf32>
    %65 = tpu.matmul %63, %64, %cst_16 {dimension_numbers = #tpu.dot_dimension_numbers<[1], [0], [0], [1], [0, 0, 1, 1], [], []>} : vector<8x8xf32>, vector<8x17xf32>, vector<8x17xf32> -> vector<8x17xf32>
    %66 = vector.extract_strided_slice %65 {offsets = [0, 0], sizes = [8, 16], strides = [1, 1]} : vector<8x17xf32> to vector<8x16xf32>
    %67 = vector.extract_strided_slice %65 {offsets = [0, 16], sizes = [8, 1], strides = [1, 1]} : vector<8x17xf32> to vector<8x1xf32>
    %68 = tpu.reciprocal %67 : vector<8x1xf32> -> vector<8x1xf32>
    %69 = vector.broadcast %68 : vector<8x1xf32> to vector<8x16xf32>
    %70 = arith.mulf %66, %69 : vector<8x16xf32>
    %71 = vector.extract_strided_slice %5 {offsets = [0, 64], sizes = [8, 16], strides = [1, 1]} : vector<8x384xf32> to vector<8x16xf32>
    %72 = vector.extract_strided_slice %5 {offsets = [0, 192], sizes = [8, 16], strides = [1, 1]} : vector<8x384xf32> to vector<8x16xf32>
    %73 = vector.extract_strided_slice %5 {offsets = [0, 320], sizes = [8, 16], strides = [1, 1]} : vector<8x384xf32> to vector<8x16xf32>
    %cst_17 = arith.constant dense<0.000000e+00> : vector<8x8xf32>
    %74 = tpu.matmul %71, %72, %cst_17 {dimension_numbers = #tpu.dot_dimension_numbers<[1], [1], [0], [0], [0, 0, 1, 0], [], []>} : vector<8x16xf32>, vector<8x16xf32>, vector<8x8xf32> -> vector<8x8xf32>
    %cst_18 = arith.constant dense<0xFF800000> : vector<8xf32>
    %75 = vector.multi_reduction <maximumf>, %74, %cst_18 [1] : vector<8x8xf32> to vector<8xf32>
    %76 = vector.shape_cast %75 : vector<8xf32> to vector<8x1xf32>
    %77 = vector.broadcast %76 : vector<8x1xf32> to vector<8x8xf32>
    %78 = arith.subf %74, %77 : vector<8x8xf32>
    %79 = math.exp %78 : vector<8x8xf32>
    %80 = tpu.concatenate %73, %6 in 1 : vector<8x16xf32>, vector<8x1xf32> -> vector<8x17xf32>
    %cst_19 = arith.constant dense<0.000000e+00> : vector<8x17xf32>
    %81 = tpu.matmul %79, %80, %cst_19 {dimension_numbers = #tpu.dot_dimension_numbers<[1], [0], [0], [1], [0, 0, 1, 1], [], []>} : vector<8x8xf32>, vector<8x17xf32>, vector<8x17xf32> -> vector<8x17xf32>
    %82 = vector.extract_strided_slice %81 {offsets = [0, 0], sizes = [8, 16], strides = [1, 1]} : vector<8x17xf32> to vector<8x16xf32>
    %83 = vector.extract_strided_slice %81 {offsets = [0, 16], sizes = [8, 1], strides = [1, 1]} : vector<8x17xf32> to vector<8x1xf32>
    %84 = tpu.reciprocal %83 : vector<8x1xf32> -> vector<8x1xf32>
    %85 = vector.broadcast %84 : vector<8x1xf32> to vector<8x16xf32>
    %86 = arith.mulf %82, %85 : vector<8x16xf32>
    %87 = vector.extract_strided_slice %5 {offsets = [0, 80], sizes = [8, 16], strides = [1, 1]} : vector<8x384xf32> to vector<8x16xf32>
    %88 = vector.extract_strided_slice %5 {offsets = [0, 208], sizes = [8, 16], strides = [1, 1]} : vector<8x384xf32> to vector<8x16xf32>
    %89 = vector.extract_strided_slice %5 {offsets = [0, 336], sizes = [8, 16], strides = [1, 1]} : vector<8x384xf32> to vector<8x16xf32>
    %cst_20 = arith.constant dense<0.000000e+00> : vector<8x8xf32>
    %90 = tpu.matmul %87, %88, %cst_20 {dimension_numbers = #tpu.dot_dimension_numbers<[1], [1], [0], [0], [0, 0, 1, 0], [], []>} : vector<8x16xf32>, vector<8x16xf32>, vector<8x8xf32> -> vector<8x8xf32>
    %cst_21 = arith.constant dense<0xFF800000> : vector<8xf32>
    %91 = vector.multi_reduction <maximumf>, %90, %cst_21 [1] : vector<8x8xf32> to vector<8xf32>
    %92 = vector.shape_cast %91 : vector<8xf32> to vector<8x1xf32>
    %93 = vector.broadcast %92 : vector<8x1xf32> to vector<8x8xf32>
    %94 = arith.subf %90, %93 : vector<8x8xf32>
    %95 = math.exp %94 : vector<8x8xf32>
    %96 = tpu.concatenate %89, %6 in 1 : vector<8x16xf32>, vector<8x1xf32> -> vector<8x17xf32>
    %cst_22 = arith.constant dense<0.000000e+00> : vector<8x17xf32>
    %97 = tpu.matmul %95, %96, %cst_22 {dimension_numbers = #tpu.dot_dimension_numbers<[1], [0], [0], [1], [0, 0, 1, 1], [], []>} : vector<8x8xf32>, vector<8x17xf32>, vector<8x17xf32> -> vector<8x17xf32>
    %98 = vector.extract_strided_slice %97 {offsets = [0, 0], sizes = [8, 16], strides = [1, 1]} : vector<8x17xf32> to vector<8x16xf32>
    %99 = vector.extract_strided_slice %97 {offsets = [0, 16], sizes = [8, 1], strides = [1, 1]} : vector<8x17xf32> to vector<8x1xf32>
    %100 = tpu.reciprocal %99 : vector<8x1xf32> -> vector<8x1xf32>
    %101 = vector.broadcast %100 : vector<8x1xf32> to vector<8x16xf32>
    %102 = arith.mulf %98, %101 : vector<8x16xf32>
    %103 = vector.extract_strided_slice %5 {offsets = [0, 96], sizes = [8, 16], strides = [1, 1]} : vector<8x384xf32> to vector<8x16xf32>
    %104 = vector.extract_strided_slice %5 {offsets = [0, 224], sizes = [8, 16], strides = [1, 1]} : vector<8x384xf32> to vector<8x16xf32>
    %105 = vector.extract_strided_slice %5 {offsets = [0, 352], sizes = [8, 16], strides = [1, 1]} : vector<8x384xf32> to vector<8x16xf32>
    %cst_23 = arith.constant dense<0.000000e+00> : vector<8x8xf32>
    %106 = tpu.matmul %103, %104, %cst_23 {dimension_numbers = #tpu.dot_dimension_numbers<[1], [1], [0], [0], [0, 0, 1, 0], [], []>} : vector<8x16xf32>, vector<8x16xf32>, vector<8x8xf32> -> vector<8x8xf32>
    %cst_24 = arith.constant dense<0xFF800000> : vector<8xf32>
    %107 = vector.multi_reduction <maximumf>, %106, %cst_24 [1] : vector<8x8xf32> to vector<8xf32>
    %108 = vector.shape_cast %107 : vector<8xf32> to vector<8x1xf32>
    %109 = vector.broadcast %108 : vector<8x1xf32> to vector<8x8xf32>
    %110 = arith.subf %106, %109 : vector<8x8xf32>
    %111 = math.exp %110 : vector<8x8xf32>
    %112 = tpu.concatenate %105, %6 in 1 : vector<8x16xf32>, vector<8x1xf32> -> vector<8x17xf32>
    %cst_25 = arith.constant dense<0.000000e+00> : vector<8x17xf32>
    %113 = tpu.matmul %111, %112, %cst_25 {dimension_numbers = #tpu.dot_dimension_numbers<[1], [0], [0], [1], [0, 0, 1, 1], [], []>} : vector<8x8xf32>, vector<8x17xf32>, vector<8x17xf32> -> vector<8x17xf32>
    %114 = vector.extract_strided_slice %113 {offsets = [0, 0], sizes = [8, 16], strides = [1, 1]} : vector<8x17xf32> to vector<8x16xf32>
    %115 = vector.extract_strided_slice %113 {offsets = [0, 16], sizes = [8, 1], strides = [1, 1]} : vector<8x17xf32> to vector<8x1xf32>
    %116 = tpu.reciprocal %115 : vector<8x1xf32> -> vector<8x1xf32>
    %117 = vector.broadcast %116 : vector<8x1xf32> to vector<8x16xf32>
    %118 = arith.mulf %114, %117 : vector<8x16xf32>
    %119 = vector.extract_strided_slice %5 {offsets = [0, 112], sizes = [8, 16], strides = [1, 1]} : vector<8x384xf32> to vector<8x16xf32>
    %120 = vector.extract_strided_slice %5 {offsets = [0, 240], sizes = [8, 16], strides = [1, 1]} : vector<8x384xf32> to vector<8x16xf32>
    %121 = vector.extract_strided_slice %5 {offsets = [0, 368], sizes = [8, 16], strides = [1, 1]} : vector<8x384xf32> to vector<8x16xf32>
    %cst_26 = arith.constant dense<0.000000e+00> : vector<8x8xf32>
    %122 = tpu.matmul %119, %120, %cst_26 {dimension_numbers = #tpu.dot_dimension_numbers<[1], [1], [0], [0], [0, 0, 1, 0], [], []>} : vector<8x16xf32>, vector<8x16xf32>, vector<8x8xf32> -> vector<8x8xf32>
    %cst_27 = arith.constant dense<0xFF800000> : vector<8xf32>
    %123 = vector.multi_reduction <maximumf>, %122, %cst_27 [1] : vector<8x8xf32> to vector<8xf32>
    %124 = vector.shape_cast %123 : vector<8xf32> to vector<8x1xf32>
    %125 = vector.broadcast %124 : vector<8x1xf32> to vector<8x8xf32>
    %126 = arith.subf %122, %125 : vector<8x8xf32>
    %127 = math.exp %126 : vector<8x8xf32>
    %128 = tpu.concatenate %121, %6 in 1 : vector<8x16xf32>, vector<8x1xf32> -> vector<8x17xf32>
    %cst_28 = arith.constant dense<0.000000e+00> : vector<8x17xf32>
    %129 = tpu.matmul %127, %128, %cst_28 {dimension_numbers = #tpu.dot_dimension_numbers<[1], [0], [0], [1], [0, 0, 1, 1], [], []>} : vector<8x8xf32>, vector<8x17xf32>, vector<8x17xf32> -> vector<8x17xf32>
    %130 = vector.extract_strided_slice %129 {offsets = [0, 0], sizes = [8, 16], strides = [1, 1]} : vector<8x17xf32> to vector<8x16xf32>
    %131 = vector.extract_strided_slice %129 {offsets = [0, 16], sizes = [8, 1], strides = [1, 1]} : vector<8x17xf32> to vector<8x1xf32>
    %132 = tpu.reciprocal %131 : vector<8x1xf32> -> vector<8x1xf32>
    %133 = vector.broadcast %132 : vector<8x1xf32> to vector<8x16xf32>
    %134 = arith.mulf %130, %133 : vector<8x16xf32>
    %135 = tpu.concatenate %22, %38, %54, %70, %86, %102, %118, %134 in 1 : vector<8x16xf32>, vector<8x16xf32>, vector<8x16xf32>, vector<8x16xf32>, vector<8x16xf32>, vector<8x16xf32>, vector<8x16xf32>, vector<8x16xf32> -> vector<8x128xf32>
    %c0_29 = arith.constant 0 : index
    %c384 = arith.constant 384 : index
    %136 = vector.load %arg2[%c0_29, %c384] : memref<136x512xf32, #tpu.memory_space<vmem>>, vector<128x128xf32>
    %cst_30 = arith.constant dense<0.000000e+00> : vector<8x128xf32>
    %137 = tpu.matmul %135, %136, %cst_30 {dimension_numbers = #tpu.dot_dimension_numbers<[1], [0], [0], [1], [0, 0, 1, 1], [], []>} : vector<8x128xf32>, vector<128x128xf32>, vector<8x128xf32> -> vector<8x128xf32>
    %c128_31 = arith.constant 128 : index
    %c384_32 = arith.constant 384 : index
    %138 = vector.load %arg2[%c128_31, %c384_32] : memref<136x512xf32, #tpu.memory_space<vmem>>, vector<1x128xf32>
    %139 = vector.broadcast %138 : vector<1x128xf32> to vector<8x128xf32>
    %140 = arith.addf %137, %139 : vector<8x128xf32>
    %c0_33 = arith.constant 0 : index
    %c0_34 = arith.constant 0 : index
    %141 = vector.load %arg4[%c0_33, %c0_34] : memref<8x128xf32, #tpu.memory_space<vmem>>, vector<8x128xf32>
    tpu.vector_store %arg4[%c0_33, %c0_34], %140 {strides = array<i32>} : memref<8x128xf32, #tpu.memory_space<vmem>>, vector<8x128xf32>,
    %c0_35 = arith.constant 0 : index
    %c0_36 = arith.constant 0 : index
    %142 = vector.load %arg1[%c0_35, %c0_36] : memref<16x40xf32, #tpu.memory_space<vmem>>, vector<16x40xf32>
    %c0_37 = arith.constant 0 : index
    %c0_38 = arith.constant 0 : index
    %143 = vector.load %arg3[%c0_37, %c0_38] : memref<120x192xf32, #tpu.memory_space<vmem>>, vector<40x192xf32>
    %cst_39 = arith.constant dense<0.000000e+00> : vector<16x192xf32>
    %144 = tpu.matmul %142, %143, %cst_39 {dimension_numbers = #tpu.dot_dimension_numbers<[1], [0], [0], [1], [0, 0, 1, 1], [], []>} : vector<16x40xf32>, vector<40x192xf32>, vector<16x192xf32> -> vector<16x192xf32>
    %c40 = arith.constant 40 : index
    %c0_40 = arith.constant 0 : index
    %145 = vector.load %arg3[%c40, %c0_40] : memref<120x192xf32, #tpu.memory_space<vmem>>, vector<1x192xf32>
    %146 = vector.broadcast %145 : vector<1x192xf32> to vector<16x192xf32>
    %147 = arith.addf %144, %146 : vector<16x192xf32>
    %148 = vector.extract_strided_slice %147 {offsets = [0, 0], sizes = [8, 16], strides = [1, 1]} : vector<16x192xf32> to vector<8x16xf32>
    %149 = vector.extract_strided_slice %147 {offsets = [0, 64], sizes = [8, 16], strides = [1, 1]} : vector<16x192xf32> to vector<8x16xf32>
    %150 = vector.extract_strided_slice %147 {offsets = [0, 128], sizes = [8, 16], strides = [1, 1]} : vector<16x192xf32> to vector<8x16xf32>
    %cst_41 = arith.constant dense<0.000000e+00> : vector<8x8xf32>
    %151 = tpu.matmul %148, %149, %cst_41 {dimension_numbers = #tpu.dot_dimension_numbers<[1], [1], [0], [0], [0, 0, 1, 0], [], []>} : vector<8x16xf32>, vector<8x16xf32>, vector<8x8xf32> -> vector<8x8xf32>
    %cst_42 = arith.constant dense<0xFF800000> : vector<8xf32>
    %152 = vector.multi_reduction <maximumf>, %151, %cst_42 [1] : vector<8x8xf32> to vector<8xf32>
    %153 = vector.shape_cast %152 : vector<8xf32> to vector<8x1xf32>
    %154 = vector.broadcast %153 : vector<8x1xf32> to vector<8x8xf32>
    %155 = arith.subf %151, %154 : vector<8x8xf32>
    %156 = math.exp %155 : vector<8x8xf32>
    %cst_43 = arith.constant dense<0.000000e+00> : vector<8x16xf32>
    %157 = tpu.matmul %156, %150, %cst_43 {dimension_numbers = #tpu.dot_dimension_numbers<[1], [0], [0], [1], [0, 0, 1, 1], [], []>} : vector<8x8xf32>, vector<8x16xf32>, vector<8x16xf32> -> vector<8x16xf32>
    %158 = vector.extract_strided_slice %157 {offsets = [0, 10], sizes = [8, 1], strides = [1, 1]} : vector<8x16xf32> to vector<8x1xf32>
    %159 = tpu.reciprocal %158 : vector<8x1xf32> -> vector<8x1xf32>
    %160 = vector.broadcast %159 : vector<8x1xf32> to vector<8x16xf32>
    %161 = arith.mulf %157, %160 : vector<8x16xf32>
    %162 = vector.extract_strided_slice %147 {offsets = [0, 16], sizes = [8, 16], strides = [1, 1]} : vector<16x192xf32> to vector<8x16xf32>
    %163 = vector.extract_strided_slice %147 {offsets = [0, 80], sizes = [8, 16], strides = [1, 1]} : vector<16x192xf32> to vector<8x16xf32>
    %164 = vector.extract_strided_slice %147 {offsets = [0, 144], sizes = [8, 16], strides = [1, 1]} : vector<16x192xf32> to vector<8x16xf32>
    %cst_44 = arith.constant dense<0.000000e+00> : vector<8x8xf32>
    %165 = tpu.matmul %162, %163, %cst_44 {dimension_numbers = #tpu.dot_dimension_numbers<[1], [1], [0], [0], [0, 0, 1, 0], [], []>} : vector<8x16xf32>, vector<8x16xf32>, vector<8x8xf32> -> vector<8x8xf32>
    %cst_45 = arith.constant dense<0xFF800000> : vector<8xf32>
    %166 = vector.multi_reduction <maximumf>, %165, %cst_45 [1] : vector<8x8xf32> to vector<8xf32>
    %167 = vector.shape_cast %166 : vector<8xf32> to vector<8x1xf32>
    %168 = vector.broadcast %167 : vector<8x1xf32> to vector<8x8xf32>
    %169 = arith.subf %165, %168 : vector<8x8xf32>
    %170 = math.exp %169 : vector<8x8xf32>
    %cst_46 = arith.constant dense<0.000000e+00> : vector<8x16xf32>
    %171 = tpu.matmul %170, %164, %cst_46 {dimension_numbers = #tpu.dot_dimension_numbers<[1], [0], [0], [1], [0, 0, 1, 1], [], []>} : vector<8x8xf32>, vector<8x16xf32>, vector<8x16xf32> -> vector<8x16xf32>
    %172 = vector.extract_strided_slice %171 {offsets = [0, 10], sizes = [8, 1], strides = [1, 1]} : vector<8x16xf32> to vector<8x1xf32>
    %173 = tpu.reciprocal %172 : vector<8x1xf32> -> vector<8x1xf32>
    %174 = vector.broadcast %173 : vector<8x1xf32> to vector<8x16xf32>
    %175 = arith.mulf %171, %174 : vector<8x16xf32>
    %176 = vector.extract_strided_slice %147 {offsets = [0, 32], sizes = [8, 16], strides = [1, 1]} : vector<16x192xf32> to vector<8x16xf32>
    %177 = vector.extract_strided_slice %147 {offsets = [0, 96], sizes = [8, 16], strides = [1, 1]} : vector<16x192xf32> to vector<8x16xf32>
    %178 = vector.extract_strided_slice %147 {offsets = [0, 160], sizes = [8, 16], strides = [1, 1]} : vector<16x192xf32> to vector<8x16xf32>
    %cst_47 = arith.constant dense<0.000000e+00> : vector<8x8xf32>
    %179 = tpu.matmul %176, %177, %cst_47 {dimension_numbers = #tpu.dot_dimension_numbers<[1], [1], [0], [0], [0, 0, 1, 0], [], []>} : vector<8x16xf32>, vector<8x16xf32>, vector<8x8xf32> -> vector<8x8xf32>
    %cst_48 = arith.constant dense<0xFF800000> : vector<8xf32>
    %180 = vector.multi_reduction <maximumf>, %179, %cst_48 [1] : vector<8x8xf32> to vector<8xf32>
    %181 = vector.shape_cast %180 : vector<8xf32> to vector<8x1xf32>
    %182 = vector.broadcast %181 : vector<8x1xf32> to vector<8x8xf32>
    %183 = arith.subf %179, %182 : vector<8x8xf32>
    %184 = math.exp %183 : vector<8x8xf32>
    %cst_49 = arith.constant dense<0.000000e+00> : vector<8x16xf32>
    %185 = tpu.matmul %184, %178, %cst_49 {dimension_numbers = #tpu.dot_dimension_numbers<[1], [0], [0], [1], [0, 0, 1, 1], [], []>} : vector<8x8xf32>, vector<8x16xf32>, vector<8x16xf32> -> vector<8x16xf32>
    %186 = vector.extract_strided_slice %185 {offsets = [0, 10], sizes = [8, 1], strides = [1, 1]} : vector<8x16xf32> to vector<8x1xf32>
    %187 = tpu.reciprocal %186 : vector<8x1xf32> -> vector<8x1xf32>
    %188 = vector.broadcast %187 : vector<8x1xf32> to vector<8x16xf32>
    %189 = arith.mulf %185, %188 : vector<8x16xf32>
    %190 = vector.extract_strided_slice %147 {offsets = [0, 48], sizes = [8, 16], strides = [1, 1]} : vector<16x192xf32> to vector<8x16xf32>
    %191 = vector.extract_strided_slice %147 {offsets = [0, 112], sizes = [8, 16], strides = [1, 1]} : vector<16x192xf32> to vector<8x16xf32>
    %192 = vector.extract_strided_slice %147 {offsets = [0, 176], sizes = [8, 16], strides = [1, 1]} : vector<16x192xf32> to vector<8x16xf32>
    %cst_50 = arith.constant dense<0.000000e+00> : vector<8x8xf32>
    %193 = tpu.matmul %190, %191, %cst_50 {dimension_numbers = #tpu.dot_dimension_numbers<[1], [1], [0], [0], [0, 0, 1, 0], [], []>} : vector<8x16xf32>, vector<8x16xf32>, vector<8x8xf32> -> vector<8x8xf32>
    %cst_51 = arith.constant dense<0xFF800000> : vector<8xf32>
    %194 = vector.multi_reduction <maximumf>, %193, %cst_51 [1] : vector<8x8xf32> to vector<8xf32>
    %195 = vector.shape_cast %194 : vector<8xf32> to vector<8x1xf32>
    %196 = vector.broadcast %195 : vector<8x1xf32> to vector<8x8xf32>
    %197 = arith.subf %193, %196 : vector<8x8xf32>
    %198 = math.exp %197 : vector<8x8xf32>
    %cst_52 = arith.constant dense<0.000000e+00> : vector<8x16xf32>
    %199 = tpu.matmul %198, %192, %cst_52 {dimension_numbers = #tpu.dot_dimension_numbers<[1], [0], [0], [1], [0, 0, 1, 1], [], []>} : vector<8x8xf32>, vector<8x16xf32>, vector<8x16xf32> -> vector<8x16xf32>
    %200 = vector.extract_strided_slice %199 {offsets = [0, 10], sizes = [8, 1], strides = [1, 1]} : vector<8x16xf32> to vector<8x1xf32>
    %201 = tpu.reciprocal %200 : vector<8x1xf32> -> vector<8x1xf32>
    %202 = vector.broadcast %201 : vector<8x1xf32> to vector<8x16xf32>
    %203 = arith.mulf %199, %202 : vector<8x16xf32>
    %204 = tpu.concatenate %161, %175, %189, %203 in 1 : vector<8x16xf32>, vector<8x16xf32>, vector<8x16xf32>, vector<8x16xf32> -> vector<8x64xf32>
    %205 = vector.extract_strided_slice %147 {offsets = [8, 0], sizes = [8, 16], strides = [1, 1]} : vector<16x192xf32> to vector<8x16xf32>
    %206 = vector.extract_strided_slice %147 {offsets = [8, 64], sizes = [8, 16], strides = [1, 1]} : vector<16x192xf32> to vector<8x16xf32>
    %207 = vector.extract_strided_slice %147 {offsets = [8, 128], sizes = [8, 16], strides = [1, 1]} : vector<16x192xf32> to vector<8x16xf32>
    %cst_53 = arith.constant dense<0.000000e+00> : vector<8x8xf32>
    %208 = tpu.matmul %205, %206, %cst_53 {dimension_numbers = #tpu.dot_dimension_numbers<[1], [1], [0], [0], [0, 0, 1, 0], [], []>} : vector<8x16xf32>, vector<8x16xf32>, vector<8x8xf32> -> vector<8x8xf32>
    %cst_54 = arith.constant dense<0xFF800000> : vector<8xf32>
    %209 = vector.multi_reduction <maximumf>, %208, %cst_54 [1] : vector<8x8xf32> to vector<8xf32>
    %210 = vector.shape_cast %209 : vector<8xf32> to vector<8x1xf32>
    %211 = vector.broadcast %210 : vector<8x1xf32> to vector<8x8xf32>
    %212 = arith.subf %208, %211 : vector<8x8xf32>
    %213 = math.exp %212 : vector<8x8xf32>
    %cst_55 = arith.constant dense<0.000000e+00> : vector<8x16xf32>
    %214 = tpu.matmul %213, %207, %cst_55 {dimension_numbers = #tpu.dot_dimension_numbers<[1], [0], [0], [1], [0, 0, 1, 1], [], []>} : vector<8x8xf32>, vector<8x16xf32>, vector<8x16xf32> -> vector<8x16xf32>
    %215 = vector.extract_strided_slice %214 {offsets = [0, 10], sizes = [8, 1], strides = [1, 1]} : vector<8x16xf32> to vector<8x1xf32>
    %216 = tpu.reciprocal %215 : vector<8x1xf32> -> vector<8x1xf32>
    %217 = vector.broadcast %216 : vector<8x1xf32> to vector<8x16xf32>
    %218 = arith.mulf %214, %217 : vector<8x16xf32>
    %219 = vector.extract_strided_slice %147 {offsets = [8, 16], sizes = [8, 16], strides = [1, 1]} : vector<16x192xf32> to vector<8x16xf32>
    %220 = vector.extract_strided_slice %147 {offsets = [8, 80], sizes = [8, 16], strides = [1, 1]} : vector<16x192xf32> to vector<8x16xf32>
    %221 = vector.extract_strided_slice %147 {offsets = [8, 144], sizes = [8, 16], strides = [1, 1]} : vector<16x192xf32> to vector<8x16xf32>
    %cst_56 = arith.constant dense<0.000000e+00> : vector<8x8xf32>
    %222 = tpu.matmul %219, %220, %cst_56 {dimension_numbers = #tpu.dot_dimension_numbers<[1], [1], [0], [0], [0, 0, 1, 0], [], []>} : vector<8x16xf32>, vector<8x16xf32>, vector<8x8xf32> -> vector<8x8xf32>
    %cst_57 = arith.constant dense<0xFF800000> : vector<8xf32>
    %223 = vector.multi_reduction <maximumf>, %222, %cst_57 [1] : vector<8x8xf32> to vector<8xf32>
    %224 = vector.shape_cast %223 : vector<8xf32> to vector<8x1xf32>
    %225 = vector.broadcast %224 : vector<8x1xf32> to vector<8x8xf32>
    %226 = arith.subf %222, %225 : vector<8x8xf32>
    %227 = math.exp %226 : vector<8x8xf32>
    %cst_58 = arith.constant dense<0.000000e+00> : vector<8x16xf32>
    %228 = tpu.matmul %227, %221, %cst_58 {dimension_numbers = #tpu.dot_dimension_numbers<[1], [0], [0], [1], [0, 0, 1, 1], [], []>} : vector<8x8xf32>, vector<8x16xf32>, vector<8x16xf32> -> vector<8x16xf32>
    %229 = vector.extract_strided_slice %228 {offsets = [0, 10], sizes = [8, 1], strides = [1, 1]} : vector<8x16xf32> to vector<8x1xf32>
    %230 = tpu.reciprocal %229 : vector<8x1xf32> -> vector<8x1xf32>
    %231 = vector.broadcast %230 : vector<8x1xf32> to vector<8x16xf32>
    %232 = arith.mulf %228, %231 : vector<8x16xf32>
    %233 = vector.extract_strided_slice %147 {offsets = [8, 32], sizes = [8, 16], strides = [1, 1]} : vector<16x192xf32> to vector<8x16xf32>
    %234 = vector.extract_strided_slice %147 {offsets = [8, 96], sizes = [8, 16], strides = [1, 1]} : vector<16x192xf32> to vector<8x16xf32>
    %235 = vector.extract_strided_slice %147 {offsets = [8, 160], sizes = [8, 16], strides = [1, 1]} : vector<16x192xf32> to vector<8x16xf32>
    %cst_59 = arith.constant dense<0.000000e+00> : vector<8x8xf32>
    %236 = tpu.matmul %233, %234, %cst_59 {dimension_numbers = #tpu.dot_dimension_numbers<[1], [1], [0], [0], [0, 0, 1, 0], [], []>} : vector<8x16xf32>, vector<8x16xf32>, vector<8x8xf32> -> vector<8x8xf32>
    %cst_60 = arith.constant dense<0xFF800000> : vector<8xf32>
    %237 = vector.multi_reduction <maximumf>, %236, %cst_60 [1] : vector<8x8xf32> to vector<8xf32>
    %238 = vector.shape_cast %237 : vector<8xf32> to vector<8x1xf32>
    %239 = vector.broadcast %238 : vector<8x1xf32> to vector<8x8xf32>
    %240 = arith.subf %236, %239 : vector<8x8xf32>
    %241 = math.exp %240 : vector<8x8xf32>
    %cst_61 = arith.constant dense<0.000000e+00> : vector<8x16xf32>
    %242 = tpu.matmul %241, %235, %cst_61 {dimension_numbers = #tpu.dot_dimension_numbers<[1], [0], [0], [1], [0, 0, 1, 1], [], []>} : vector<8x8xf32>, vector<8x16xf32>, vector<8x16xf32> -> vector<8x16xf32>
    %243 = vector.extract_strided_slice %242 {offsets = [0, 10], sizes = [8, 1], strides = [1, 1]} : vector<8x16xf32> to vector<8x1xf32>
    %244 = tpu.reciprocal %243 : vector<8x1xf32> -> vector<8x1xf32>
    %245 = vector.broadcast %244 : vector<8x1xf32> to vector<8x16xf32>
    %246 = arith.mulf %242, %245 : vector<8x16xf32>
    %247 = vector.extract_strided_slice %147 {offsets = [8, 48], sizes = [8, 16], strides = [1, 1]} : vector<16x192xf32> to vector<8x16xf32>
    %248 = vector.extract_strided_slice %147 {offsets = [8, 112], sizes = [8, 16], strides = [1, 1]} : vector<16x192xf32> to vector<8x16xf32>
    %249 = vector.extract_strided_slice %147 {offsets = [8, 176], sizes = [8, 16], strides = [1, 1]} : vector<16x192xf32> to vector<8x16xf32>
    %cst_62 = arith.constant dense<0.000000e+00> : vector<8x8xf32>
    %250 = tpu.matmul %247, %248, %cst_62 {dimension_numbers = #tpu.dot_dimension_numbers<[1], [1], [0], [0], [0, 0, 1, 0], [], []>} : vector<8x16xf32>, vector<8x16xf32>, vector<8x8xf32> -> vector<8x8xf32>
    %cst_63 = arith.constant dense<0xFF800000> : vector<8xf32>
    %251 = vector.multi_reduction <maximumf>, %250, %cst_63 [1] : vector<8x8xf32> to vector<8xf32>
    %252 = vector.shape_cast %251 : vector<8xf32> to vector<8x1xf32>
    %253 = vector.broadcast %252 : vector<8x1xf32> to vector<8x8xf32>
    %254 = arith.subf %250, %253 : vector<8x8xf32>
    %255 = math.exp %254 : vector<8x8xf32>
    %cst_64 = arith.constant dense<0.000000e+00> : vector<8x16xf32>
    %256 = tpu.matmul %255, %249, %cst_64 {dimension_numbers = #tpu.dot_dimension_numbers<[1], [0], [0], [1], [0, 0, 1, 1], [], []>} : vector<8x8xf32>, vector<8x16xf32>, vector<8x16xf32> -> vector<8x16xf32>
    %257 = vector.extract_strided_slice %256 {offsets = [0, 10], sizes = [8, 1], strides = [1, 1]} : vector<8x16xf32> to vector<8x1xf32>
    %258 = tpu.reciprocal %257 : vector<8x1xf32> -> vector<8x1xf32>
    %259 = vector.broadcast %258 : vector<8x1xf32> to vector<8x16xf32>
    %260 = arith.mulf %256, %259 : vector<8x16xf32>
    %261 = tpu.concatenate %218, %232, %246, %260 in 1 : vector<8x16xf32>, vector<8x16xf32>, vector<8x16xf32>, vector<8x16xf32> -> vector<8x64xf32>
    %262 = tpu.concatenate %204, %261 in 0 : vector<8x64xf32>, vector<8x64xf32> -> vector<16x64xf32>
    %c48 = arith.constant 48 : index
    %c0_65 = arith.constant 0 : index
    %263 = vector.load %arg3[%c48, %c0_65] : memref<120x192xf32, #tpu.memory_space<vmem>>, vector<64x40xf32>
    %cst_66 = arith.constant dense<0.000000e+00> : vector<16x40xf32>
    %264 = tpu.matmul %262, %263, %cst_66 {dimension_numbers = #tpu.dot_dimension_numbers<[1], [0], [0], [1], [0, 0, 1, 1], [], []>} : vector<16x64xf32>, vector<64x40xf32>, vector<16x40xf32> -> vector<16x40xf32>
    %c112 = arith.constant 112 : index
    %c0_67 = arith.constant 0 : index
    %265 = vector.load %arg3[%c112, %c0_67] : memref<120x192xf32, #tpu.memory_space<vmem>>, vector<1x40xf32>
    %266 = vector.broadcast %265 : vector<1x40xf32> to vector<16x40xf32>
    %267 = arith.addf %264, %266 : vector<16x40xf32>
    %c0_68 = arith.constant 0 : index
    %c0_69 = arith.constant 0 : index
    %268 = vector.load %arg5[%c0_68, %c0_69] : memref<16x40xf32, #tpu.memory_space<vmem>>, vector<16x40xf32>
    tpu.vector_store %arg5[%c0_68, %c0_69], %267 {strides = array<i32>} : memref<16x40xf32, #tpu.memory_space<vmem>>, vector<16x40xf32>,
    return
  }
}

</mosaic_0001>

<llo_original>
// kernel: tile.23
$region0: #{tile.23}
  #allocation0 [shape = 's32[1]{0}', space=sflag, size = 0x4, scoped, tag = 'scoped memory for tile.23']
  %s0 = inlined_call_operand.vmem [shape: f32[64], index: 0, kind: input, shape index: {}]
  %s1 = inlined_call_operand.vmem [shape: f32[2,64], index: 1, kind: output, shape index: {}]
  // Predicated region
  $region2: #{tile.23} parent=0 // pred_check
    _
  $region3: #{tile.23} parent=0 // pred_check_branch
    %3 = sbr.rel (0) target = $region5
  $region4: #{tile.23} parent=0 // pred_region
    _
  $region5: #{tile.23} parent=0 // pred_fallthru
    _
  %v4 = vld [vmem:[%s0] ss:$0 sm:$0xff]
  %5 = vst [vmem:[%s1] sm:$0x3] %v4

// kernel: tile.24
$region0: #{tile.24}
  %s0 = inlined_call_operand.vmem [shape: f32[2,64], index: 0, kind: input, shape index: {}]
  %s1 = inlined_call_operand.vmem [shape: f32[128], index: 1, kind: output, shape index: {}]
  $region1: #{tile.24} parent=0
    #allocation0 [shape = 'u8[4096]{0}', space=vmem, size = 0x1000, scoped, tag = 'scoped mem for output reshape']
    #allocation1 [shape = 'u8[4096]{0}', space=vmem, size = 0x1000, scoped, tag = 'scoped mem for input reshape']
    %s3 = sshll.u32 1, 2
    %s4 = ssub.s32 %s3, 1
    %v5 = vld [vmem:[%s0] sm:%s4]
    %6 = vst [vmem:[#allocation1] sm:%s4] %v5
    %v7 = vld [vmem:[#allocation1] sm:$0x1]
    %vm8 = vcmask 523264
    %9 = vst.msk [vmem:[#allocation0] sm:$0x1] %vm8, %v7
    %s10 = scalar_lea.vmem [#allocation1], 1
    %v11 = vld [vmem:[%s10] sm:$0x1]
    %12 = vrot.lane.b32.xlu0 %v11, 64
    %v13 = vpop.permute.xlu0 %12
    %vm14 = vcmask 1048064
    %15 = vst.msk [vmem:[#allocation0] sm:$0x1] %vm14, %v13
    %s17 = sshll.u32 1, 1
    %s18 = ssub.s32 %s17, 1
    %v20 = vld [vmem:[#allocation0] sm:%s18]
    %s21 = sshll.u32 1, 1
    %s22 = ssub.s32 %s21, 1
    %23 = vst [vmem:[%s1] sm:%s22] %v20

// kernel: model_forward.1
$region0: #{model_forward.1}
  #allocation0 [shape = 'u32[]', space=smem, size = 0x4, offset = 0x4, fixed_abs, tag = 'smem constant byte address 0x4 - core index']
  #allocation1 [shape = 'u32[144,128]{1,0:T(1,128)}', space=vmem, size = 0x12000, scoped, tag = 'internal scratch']
  %s0 = inlined_call_operand.vmem [shape: f32[8,128], index: 0, kind: input, shape index: {}]
  %s1 = inlined_call_operand.vmem [shape: f32[16,40], index: 1, kind: input, shape index: {}]
  %s2 = inlined_call_operand.vmem [shape: f32[136,512], index: 2, kind: input, shape index: {}]
  %s3 = inlined_call_operand.vmem [shape: f32[120,192], index: 3, kind: input, shape index: {}]
  %s4 = inlined_call_operand.vmem [shape: f32[8,128], index: 4, kind: output, shape index: {0}]
  %s5 = inlined_call_operand.hbm [shape: f32[16,40], index: 5, kind: output, shape index: {1}]
  %6 = xla_tuple %s4, %s5
  %s7 = sld [smem:[#allocation0]]
  $region34: #{model_forward.1} parent=0
    _
  %s9 = ssub.s32 1, %s7
  %s10 = scalar_select 0, %s9, %s7
  $region1: #{model_forward.1} parent=0
    #allocation2 [shape = 'u8[8192]{0}', space=vmem, size = 0x2000, scoped, tag = 'output window, operand 1, single buffered']
    #allocation3 [shape = 's32[1]{0}', space=sflag, size = 0x4, scoped, tag = 'scoped memory for model_forward.1']
    %11 = vsyncpa [#allocation3], 0
    // Predicated region
    $region2: #{model_forward.1} parent=1 // pred_check
      _
    $region3: #{model_forward.1} parent=1 // pred_check_branch
      %13 = sbr.rel (0) target = $region5
    $region4: #{model_forward.1} parent=1 // pred_region
      _
    $region5: #{model_forward.1} parent=1 // pred_fallthru
      _
    // Predicated region
    $region6: #{model_forward.1} parent=1 // pred_check
      _
    $region7: #{model_forward.1} parent=1 // pred_check_branch
      %15 = sbr.rel (0) target = $region9
    $region8: #{model_forward.1} parent=1 // pred_region
      _
    $region9: #{model_forward.1} parent=1 // pred_fallthru
      _
    // Predicated region
    $region10: #{model_forward.1} parent=1 // pred_check
      _
    $region11: #{model_forward.1} parent=1 // pred_check_branch
      %17 = sbr.rel (0) target = $region13
    $region12: #{model_forward.1} parent=1 // pred_region
      _
    $region13: #{model_forward.1} parent=1 // pred_fallthru
      _
    // Predicated region
    $region14: #{model_forward.1} parent=1 // pred_check
      _
    $region15: #{model_forward.1} parent=1 // pred_check_branch
      %19 = sbr.rel (0) target = $region17
    $region16: #{model_forward.1} parent=1 // pred_region
      _
    $region17: #{model_forward.1} parent=1 // pred_fallthru
      _
    %v20 = vld [vmem:[%s0] sm:$0xff]
    %v21 = vld [vmem:[%s2] sm:$0xff]
    %v22 = vld [vmem:[%s2 + $0x8] sm:$0xff]
    %v23 = vld [vmem:[%s2 + $0x10] sm:$0xff]
    %v24 = vld [vmem:[%s2 + $0x20] sm:$0xff]
    %v25 = vld [vmem:[%s2 + $0x28] sm:$0xff]
    %v26 = vld [vmem:[%s2 + $0x30] sm:$0xff]
    %v27 = vld [vmem:[%s2 + $0x40] sm:$0xff]
    %v28 = vld [vmem:[%s2 + $0x48] sm:$0xff]
    %v29 = vld [vmem:[%s2 + $0x50] sm:$0xff]
    %v30 = vld [vmem:[%s2 + $0x60] sm:$0xff]
    %v31 = vld [vmem:[%s2 + $0x68] sm:$0xff]
    %v32 = vld [vmem:[%s2 + $0x70] sm:$0xff]
    %v33 = vld [vmem:[%s2 + $0x80] sm:$0xff]
    %v34 = vld [vmem:[%s2 + $0x88] sm:$0xff]
    %v35 = vld [vmem:[%s2 + $0x90] sm:$0xff]
    %v36 = vld [vmem:[%s2 + $0xa0] sm:$0xff]
    %v37 = vld [vmem:[%s2 + $0xa8] sm:$0xff]
    %v38 = vld [vmem:[%s2 + $0xb0] sm:$0xff]
    %v39 = vld [vmem:[%s2 + $0xc0] sm:$0xff]
    %v40 = vld [vmem:[%s2 + $0xc8] sm:$0xff]
    %v41 = vld [vmem:[%s2 + $0xd0] sm:$0xff]
    %v42 = vld [vmem:[%s2 + $0xe0] sm:$0xff]
    %v43 = vld [vmem:[%s2 + $0xe8] sm:$0xff]
    %v44 = vld [vmem:[%s2 + $0xf0] sm:$0xff]
    %v45 = vld [vmem:[%s2 + $0x100] sm:$0xff]
    %v46 = vld [vmem:[%s2 + $0x108] sm:$0xff]
    %v47 = vld [vmem:[%s2 + $0x110] sm:$0xff]
    %v48 = vld [vmem:[%s2 + $0x120] sm:$0xff]
    %v49 = vld [vmem:[%s2 + $0x128] sm:$0xff]
    %v50 = vld [vmem:[%s2 + $0x130] sm:$0xff]
    %v51 = vld [vmem:[%s2 + $0x140] sm:$0xff]
    %v52 = vld [vmem:[%s2 + $0x148] sm:$0xff]
    %v53 = vld [vmem:[%s2 + $0x150] sm:$0xff]
    %v54 = vld [vmem:[%s2 + $0x160] sm:$0xff]
    %v55 = vld [vmem:[%s2 + $0x168] sm:$0xff]
    %v56 = vld [vmem:[%s2 + $0x170] sm:$0xff]
    %v57 = vld [vmem:[%s2 + $0x180] sm:$0xff]
    %v58 = vld [vmem:[%s2 + $0x188] sm:$0xff]
    %v59 = vld [vmem:[%s2 + $0x190] sm:$0xff]
    %v60 = vld [vmem:[%s2 + $0x1a0] sm:$0xff]
    %v61 = vld [vmem:[%s2 + $0x1a8] sm:$0xff]
    %v62 = vld [vmem:[%s2 + $0x1b0] sm:$0xff]
    %v63 = vld [vmem:[%s2 + $0x1c0] sm:$0xff]
    %v64 = vld [vmem:[%s2 + $0x1c8] sm:$0xff]
    %v65 = vld [vmem:[%s2 + $0x1d0] sm:$0xff]
    %v66 = vld [vmem:[%s2 + $0x1e0] sm:$0xff]
    %v67 = vld [vmem:[%s2 + $0x1e8] sm:$0xff]
    %v68 = vld [vmem:[%s2 + $0x1f0] sm:$0xff]
    %s69 = scalar_lea.vmem %s2, 512
    %v70 = vld [vmem:[%s69] ss:$8 sm:$0x7]
    %v72 = vlaneseq
    %v73 = vshrl.u32 %v72, 7
    %v74 = vsub.s32 0, %v73
    %v75 = vrot.slane %v70, %v74
    %v76 = vlaneseq
    %v77 = vshrl.u32 %v76, 7
    %v78 = vsub.s32 1, %v77
    %v79 = vrot.slane %v70, %v78
    %v80 = vlaneseq
    %v81 = vshrl.u32 %v80, 7
    %v82 = vsub.s32 2, %v81
    %v83 = vrot.slane %v70, %v82
    %87 = vmatprep.subr.mxu0 %v67
    %88 = vmatpush1.msra.mxu0 %v66
    %89 = vmatprep.subr.mxu0 %v64
    %90 = vmatpush1.msra.mxu0 %v63
    %91 = vmatprep.subr.mxu0 %v61
    %92 = vmatpush1.msra.mxu0 %v60
    %93 = vmatprep.subr.mxu0 %v58
    %94 = vmatpush1.msra.mxu0 %v57
    %95 = vmatprep.subr.mxu0 %v55
    %96 = vmatpush1.msra.mxu0 %v54
    %97 = vmatprep.subr.mxu0 %v52
    %98 = vmatpush1.msra.mxu0 %v51
    %99 = vmatprep.subr.mxu0 %v49
    %100 = vmatpush1.msra.mxu0 %v48
    %101 = vmatprep.subr.mxu0 %v46
    %102 = vmatpush1.msra.mxu0 %v45
    %103 = vmatprep.subr.mxu0 %v43
    %104 = vmatpush1.msra.mxu0 %v42
    %105 = vmatprep.subr.mxu0 %v40
    %106 = vmatpush1.msra.mxu0 %v39
    %107 = vmatprep.subr.mxu0 %v37
    %108 = vmatpush1.msra.mxu0 %v36
    %109 = vmatprep.subr.mxu0 %v34
    %110 = vmatpush1.msra.mxu0 %v33
    %111 = vmatprep.subr.mxu0 %v31
    %112 = vmatpush1.msra.mxu0 %v30
    %113 = vmatprep.subr.mxu0 %v28
    %114 = vmatpush1.msra.mxu0 %v27
    %115 = vmatprep.subr.mxu0 %v25
    %116 = vmatpush1.msra.mxu0 %v24
    %117 = vmatprep.subr.mxu0 %v22
    %118 = vmatpush1.msra.mxu0 %v21
    %119 = vmatprep.subr.mxu0 0.0
    %120 = vmatpush2.msra.mxu0 0.0
    %121 = vmatprep.subr.mxu0 0.0
    %122 = vmatpush2.msra.mxu0 0.0
    %123 = vmatprep.subr.mxu0 0.0
    %124 = vmatpush2.msra.mxu0 0.0
    %125 = vmatprep.subr.mxu0 0.0
    %126 = vmatpush2.msra.mxu0 0.0
    %127 = vmatprep.subr.mxu0 0.0
    %128 = vmatpush2.msra.mxu0 0.0
    %129 = vmatprep.subr.mxu0 0.0
    %130 = vmatpush2.msra.mxu0 0.0
    %131 = vmatprep.subr.mxu0 0.0
    %132 = vmatpush2.msra.mxu0 0.0
    %133 = vmatprep.subr.mxu0 0.0
    %134 = vmatpush2.msra.mxu0 0.0
    %135 = vmatprep.subr.mxu0 0.0
    %136 = vmatpush2.msra.mxu0 0.0
    %137 = vmatprep.subr.mxu0 0.0
    %138 = vmatpush2.msra.mxu0 0.0
    %139 = vmatprep.subr.mxu0 0.0
    %140 = vmatpush2.msra.mxu0 0.0
    %141 = vmatprep.subr.mxu0 0.0
    %142 = vmatpush2.msra.mxu0 0.0
    %143 = vmatprep.subr.mxu0 0.0
    %144 = vmatpush2.msra.mxu0 0.0
    %145 = vmatprep.subr.mxu0 0.0
    %146 = vmatpush2.msra.mxu0 0.0
    %147 = vmatprep.subr.mxu0 0.0
    %148 = vmatpush2.msra.mxu0 0.0
    %149 = vmatprep.subr.mxu0 0.0
    %150 = vmatpush2.msra.mxu0 0.0
    %151 = vmatprep.mubr.f32.mxu0 0.0
    %152 = vmatmul.mubr.f32.gmra.mxu0 %v20
    %v153 = vpop.f32.mrf.mxu0
    %v154 = vadd.f32 %v75, %v153
    %v155 = vpop.f32.mrf.mxu0
    %v156 = vadd.f32 %v79, %v155
    %157 = vdwg.mxu0
    %158 = vmatprep.subr.mxu0 0.0
    %159 = vmatpush1.msra.mxu0 %v68
    %160 = vmatprep.subr.mxu0 0.0
    %161 = vmatpush1.msra.mxu0 %v65
    %162 = vmatprep.subr.mxu0 0.0
    %163 = vmatpush1.msra.mxu0 %v62
    %164 = vmatprep.subr.mxu0 0.0
    %165 = vmatpush1.msra.mxu0 %v59
    %166 = vmatprep.subr.mxu0 0.0
    %167 = vmatpush1.msra.mxu0 %v56
    %168 = vmatprep.subr.mxu0 0.0
    %169 = vmatpush1.msra.mxu0 %v53
    %170 = vmatprep.subr.mxu0 0.0
    %171 = vmatpush1.msra.mxu0 %v50
    %172 = vmatprep.subr.mxu0 0.0
    %173 = vmatpush1.msra.mxu0 %v47
    %174 = vmatprep.subr.mxu0 0.0
    %175 = vmatpush1.msra.mxu0 %v44
    %176 = vmatprep.subr.mxu0 0.0
    %177 = vmatpush1.msra.mxu0 %v41
    %178 = vmatprep.subr.mxu0 0.0
    %179 = vmatpush1.msra.mxu0 %v38
    %180 = vmatprep.subr.mxu0 0.0
    %181 = vmatpush1.msra.mxu0 %v35
    %182 = vmatprep.subr.mxu0 0.0
    %183 = vmatpush1.msra.mxu0 %v32
    %184 = vmatprep.subr.mxu0 0.0
    %185 = vmatpush1.msra.mxu0 %v29
    %186 = vmatprep.subr.mxu0 0.0
    %187 = vmatpush1.msra.mxu0 %v26
    %188 = vmatprep.subr.mxu0 0.0
    %189 = vmatpush1.msra.mxu0 %v23
    %190 = vmatprep.subr.mxu0 0.0
    %191 = vmatpush2.msra.mxu0 0.0
    %192 = vmatprep.subr.mxu0 0.0
    %193 = vmatpush2.msra.mxu0 0.0
    %194 = vmatprep.subr.mxu0 0.0
    %195 = vmatpush2.msra.mxu0 0.0
    %196 = vmatprep.subr.mxu0 0.0
    %197 = vmatpush2.msra.mxu0 0.0
    %198 = vmatprep.subr.mxu0 0.0
    %199 = vmatpush2.msra.mxu0 0.0
    %200 = vmatprep.subr.mxu0 0.0
    %201 = vmatpush2.msra.mxu0 0.0
    %202 = vmatprep.subr.mxu0 0.0
    %203 = vmatpush2.msra.mxu0 0.0
    %204 = vmatprep.subr.mxu0 0.0
    %205 = vmatpush2.msra.mxu0 0.0
    %206 = vmatprep.subr.mxu0 0.0
    %207 = vmatpush2.msra.mxu0 0.0
    %208 = vmatprep.subr.mxu0 0.0
    %209 = vmatpush2.msra.mxu0 0.0
    %210 = vmatprep.subr.mxu0 0.0
    %211 = vmatpush2.msra.mxu0 0.0
    %212 = vmatprep.subr.mxu0 0.0
    %213 = vmatpush2.msra.mxu0 0.0
    %214 = vmatprep.subr.mxu0 0.0
    %215 = vmatpush2.msra.mxu0 0.0
    %216 = vmatprep.subr.mxu0 0.0
    %217 = vmatpush2.msra.mxu0 0.0
    %218 = vmatprep.subr.mxu0 0.0
    %219 = vmatpush2.msra.mxu0 0.0
    %220 = vmatprep.subr.mxu0 0.0
    %221 = vmatpush2.msra.mxu0 0.0
    %222 = vmatprep.mubr.f32.mxu0 0.0
    %223 = vmatmul.mubr.f32.gmra.mxu0 %v20
    %v224 = vpop.f32.mrf.mxu0
    %v225 = vadd.f32 %v83, %v224
    %v226 = vpop.f32.mrf.mxu0
    %227 = vdwg.mxu0
    %vm228 = vcmask 130048
    %v230 = vsel %vm228, %v154, 0
    %v233 = vsel %vm228, %v156, 0
    %235 = vmatprep.subr.mxu0 0.0
    %236 = vmatpush1.xpose.msra.mxu0 0.0
    %237 = vmatprep.subr.mxu0 0.0
    %238 = vmatpush1.xpose.msra.mxu0 0.0
    %239 = vmatprep.subr.mxu0 0.0
    %240 = vmatpush1.xpose.msra.mxu0 0.0
    %241 = vmatprep.subr.mxu0 0.0
    %242 = vmatpush1.xpose.msra.mxu0 0.0
    %243 = vmatprep.subr.mxu0 0.0
    %244 = vmatpush1.xpose.msra.mxu0 0.0
    %245 = vmatprep.subr.mxu0 0.0
    %246 = vmatpush1.xpose.msra.mxu0 0.0
    %247 = vmatprep.subr.mxu0 0.0
    %248 = vmatpush1.xpose.msra.mxu0 0.0
    %249 = vmatprep.subr.mxu0 0.0
    %250 = vmatpush1.xpose.msra.mxu0 0.0
    %251 = vmatprep.subr.mxu0 0.0
    %252 = vmatpush1.xpose.msra.mxu0 0.0
    %253 = vmatprep.subr.mxu0 0.0
    %254 = vmatpush1.xpose.msra.mxu0 0.0
    %255 = vmatprep.subr.mxu0 0.0
    %256 = vmatpush1.xpose.msra.mxu0 0.0
    %257 = vmatprep.subr.mxu0 0.0
    %258 = vmatpush1.xpose.msra.mxu0 0.0
    %259 = vmatprep.subr.mxu0 0.0
    %260 = vmatpush1.xpose.msra.mxu0 0.0
    %261 = vmatprep.subr.mxu0 0.0
    %262 = vmatpush1.xpose.msra.mxu0 0.0
    %263 = vmatprep.subr.mxu0 0.0
    %264 = vmatpush1.xpose.msra.mxu0 0.0
    %265 = vmatprep.subr.mxu0 0.0
    %266 = vmatpush1.xpose.msra.mxu0 %v233
    %267 = vmatprep.subr.mxu0 0.0
    %268 = vmatpush2.xpose.msra.mxu0 0.0
    %269 = vmatprep.subr.mxu0 0.0
    %270 = vmatpush2.xpose.msra.mxu0 0.0
    %271 = vmatprep.subr.mxu0 0.0
    %272 = vmatpush2.xpose.msra.mxu0 0.0
    %273 = vmatprep.subr.mxu0 0.0
    %274 = vmatpush2.xpose.msra.mxu0 0.0
    %275 = vmatprep.subr.mxu0 0.0
    %276 = vmatpush2.xpose.msra.mxu0 0.0
    %277 = vmatprep.subr.mxu0 0.0
    %278 = vmatpush2.xpose.msra.mxu0 0.0
    %279 = vmatprep.subr.mxu0 0.0
    %280 = vmatpush2.xpose.msra.mxu0 0.0
    %281 = vmatprep.subr.mxu0 0.0
    %282 = vmatpush2.xpose.msra.mxu0 0.0
    %283 = vmatprep.subr.mxu0 0.0
    %284 = vmatpush2.xpose.msra.mxu0 0.0
    %285 = vmatprep.subr.mxu0 0.0
    %286 = vmatpush2.xpose.msra.mxu0 0.0
    %287 = vmatprep.subr.mxu0 0.0
    %288 = vmatpush2.xpose.msra.mxu0 0.0
    %289 = vmatprep.subr.mxu0 0.0
    %290 = vmatpush2.xpose.msra.mxu0 0.0
    %291 = vmatprep.subr.mxu0 0.0
    %292 = vmatpush2.xpose.msra.mxu0 0.0
    %293 = vmatprep.subr.mxu0 0.0
    %294 = vmatpush2.xpose.msra.mxu0 0.0
    %295 = vmatprep.subr.mxu0 0.0
    %296 = vmatpush2.xpose.msra.mxu0 0.0
    %297 = vmatprep.subr.mxu0 0.0
    %298 = vmatpush2.xpose.msra.mxu0 0.0
    %299 = vmatprep.mubr.f32.mxu0 0.0
    %300 = vmatmul.mubr.f32.gmra.mxu0 %v230
    %v301 = vpop.f32.mrf.mxu0
    %v302 = vadd.f32 0.0, %v301
    %v303 = vpop.f32.mrf.mxu0
    %304 = vdwg.mxu0
    %vm305 = vcmask 64512
    %v306 = vsel %vm305, %v302, -inf
    %307 = vmax.xlane.f32.xlu0 %v306
    %v308 = vpop.xlane.xlu0 %307
    %v309 = vsub.f32 %v302, %v308
    %v310 = vmul.f32 %v309, 1.442695
    %v311 = vpow.pop %v310
    %v312 = vsel %vm228, %v225, 1.0
    %v314 = vsel %vm305, %v311, 0
    %316 = vmatprep.subr.mxu0 0.0
    %317 = vmatpush1.msra.mxu0 0.0
    %318 = vmatprep.subr.mxu0 0.0
    %319 = vmatpush1.msra.mxu0 0.0
    %320 = vmatprep.subr.mxu0 0.0
    %321 = vmatpush1.msra.mxu0 0.0
    %322 = vmatprep.subr.mxu0 0.0
    %323 = vmatpush1.msra.mxu0 0.0
    %324 = vmatprep.subr.mxu0 0.0
    %325 = vmatpush1.msra.mxu0 0.0
    %326 = vmatprep.subr.mxu0 0.0
    %327 = vmatpush1.msra.mxu0 0.0
    %328 = vmatprep.subr.mxu0 0.0
    %329 = vmatpush1.msra.mxu0 0.0
    %330 = vmatprep.subr.mxu0 0.0
    %331 = vmatpush1.msra.mxu0 0.0
    %332 = vmatprep.subr.mxu0 0.0
    %333 = vmatpush1.msra.mxu0 0.0
    %334 = vmatprep.subr.mxu0 0.0
    %335 = vmatpush1.msra.mxu0 0.0
    %336 = vmatprep.subr.mxu0 0.0
    %337 = vmatpush1.msra.mxu0 0.0
    %338 = vmatprep.subr.mxu0 0.0
    %339 = vmatpush1.msra.mxu0 0.0
    %340 = vmatprep.subr.mxu0 0.0
    %341 = vmatpush1.msra.mxu0 0.0
    %342 = vmatprep.subr.mxu0 0.0
    %343 = vmatpush1.msra.mxu0 0.0
    %344 = vmatprep.subr.mxu0 0.0
    %345 = vmatpush1.msra.mxu0 0.0
    %346 = vmatprep.subr.mxu0 0.0
    %347 = vmatpush1.msra.mxu0 %v312
    %348 = vmatprep.subr.mxu0 0.0
    %349 = vmatpush2.msra.mxu0 0.0
    %350 = vmatprep.subr.mxu0 0.0
    %351 = vmatpush2.msra.mxu0 0.0
    %352 = vmatprep.subr.mxu0 0.0
    %353 = vmatpush2.msra.mxu0 0.0
    %354 = vmatprep.subr.mxu0 0.0
    %355 = vmatpush2.msra.mxu0 0.0
    %356 = vmatprep.subr.mxu0 0.0
    %357 = vmatpush2.msra.mxu0 0.0
    %358 = vmatprep.subr.mxu0 0.0
    %359 = vmatpush2.msra.mxu0 0.0
    %360 = vmatprep.subr.mxu0 0.0
    %361 = vmatpush2.msra.mxu0 0.0
    %362 = vmatprep.subr.mxu0 0.0
    %363 = vmatpush2.msra.mxu0 0.0
    %364 = vmatprep.subr.mxu0 0.0
    %365 = vmatpush2.msra.mxu0 0.0
    %366 = vmatprep.subr.mxu0 0.0
    %367 = vmatpush2.msra.mxu0 0.0
    %368 = vmatprep.subr.mxu0 0.0
    %369 = vmatpush2.msra.mxu0 0.0
    %370 = vmatprep.subr.mxu0 0.0
    %371 = vmatpush2.msra.mxu0 0.0
    %372 = vmatprep.subr.mxu0 0.0
    %373 = vmatpush2.msra.mxu0 0.0
    %374 = vmatprep.subr.mxu0 0.0
    %375 = vmatpush2.msra.mxu0 0.0
    %376 = vmatprep.subr.mxu0 0.0
    %377 = vmatpush2.msra.mxu0 0.0
    %378 = vmatprep.subr.mxu0 0.0
    %379 = vmatpush2.msra.mxu0 0.0
    %380 = vmatprep.mubr.f32.mxu0 0.0
    %381 = vmatmul.mubr.f32.gmra.mxu0 %v314
    %v382 = vpop.f32.mrf.mxu0
    %v383 = vadd.f32 0.0, %v382
    %v384 = vpop.f32.mrf.mxu0
    %385 = vdwg.mxu0
    %v386 = vrcp.pop %v383
    %388 = vset.pattern.permute.xlu0 16
    %389 = vperm.xlu0 %388, %v386
    %v390 = vpop.permute.xlu0 %389
    %v392 = vmul.f32 %v383, %v390
    %393 = vrot.lane.b32.xlu0 %v154, 112
    %v394 = vpop.permute.xlu0 %393
    %395 = vrot.lane.b32.xlu0 %v156, 112
    %v396 = vpop.permute.xlu0 %395
    %v397 = vsel %vm228, %v394, 0
    %v399 = vsel %vm228, %v396, 0
    %401 = vmatprep.subr.mxu0 0.0
    %402 = vmatpush1.xpose.msra.mxu0 0.0
    %403 = vmatprep.subr.mxu0 0.0
    %404 = vmatpush1.xpose.msra.mxu0 0.0
    %405 = vmatprep.subr.mxu0 0.0
    %406 = vmatpush1.xpose.msra.mxu0 0.0
    %407 = vmatprep.subr.mxu0 0.0
    %408 = vmatpush1.xpose.msra.mxu0 0.0
    %409 = vmatprep.subr.mxu0 0.0
    %410 = vmatpush1.xpose.msra.mxu0 0.0
    %411 = vmatprep.subr.mxu0 0.0
    %412 = vmatpush1.xpose.msra.mxu0 0.0
    %413 = vmatprep.subr.mxu0 0.0
    %414 = vmatpush1.xpose.msra.mxu0 0.0
    %415 = vmatprep.subr.mxu0 0.0
    %416 = vmatpush1.xpose.msra.mxu0 0.0
    %417 = vmatprep.subr.mxu0 0.0
    %418 = vmatpush1.xpose.msra.mxu0 0.0
    %419 = vmatprep.subr.mxu0 0.0
    %420 = vmatpush1.xpose.msra.mxu0 0.0
    %421 = vmatprep.subr.mxu0 0.0
    %422 = vmatpush1.xpose.msra.mxu0 0.0
    %423 = vmatprep.subr.mxu0 0.0
    %424 = vmatpush1.xpose.msra.mxu0 0.0
    %425 = vmatprep.subr.mxu0 0.0
    %426 = vmatpush1.xpose.msra.mxu0 0.0
    %427 = vmatprep.subr.mxu0 0.0
    %428 = vmatpush1.xpose.msra.mxu0 0.0
    %429 = vmatprep.subr.mxu0 0.0
    %430 = vmatpush1.xpose.msra.mxu0 0.0
    %431 = vmatprep.subr.mxu0 0.0
    %432 = vmatpush1.xpose.msra.mxu0 %v399
    %433 = vmatprep.subr.mxu0 0.0
    %434 = vmatpush2.xpose.msra.mxu0 0.0
    %435 = vmatprep.subr.mxu0 0.0
    %436 = vmatpush2.xpose.msra.mxu0 0.0
    %437 = vmatprep.subr.mxu0 0.0
    %438 = vmatpush2.xpose.msra.mxu0 0.0
    %439 = vmatprep.subr.mxu0 0.0
    %440 = vmatpush2.xpose.msra.mxu0 0.0
    %441 = vmatprep.subr.mxu0 0.0
    %442 = vmatpush2.xpose.msra.mxu0 0.0
    %443 = vmatprep.subr.mxu0 0.0
    %444 = vmatpush2.xpose.msra.mxu0 0.0
    %445 = vmatprep.subr.mxu0 0.0
    %446 = vmatpush2.xpose.msra.mxu0 0.0
    %447 = vmatprep.subr.mxu0 0.0
    %448 = vmatpush2.xpose.msra.mxu0 0.0
    %449 = vmatprep.subr.mxu0 0.0
    %450 = vmatpush2.xpose.msra.mxu0 0.0
    %451 = vmatprep.subr.mxu0 0.0
    %452 = vmatpush2.xpose.msra.mxu0 0.0
    %453 = vmatprep.subr.mxu0 0.0
    %454 = vmatpush2.xpose.msra.mxu0 0.0
    %455 = vmatprep.subr.mxu0 0.0
    %456 = vmatpush2.xpose.msra.mxu0 0.0
    %457 = vmatprep.subr.mxu0 0.0
    %458 = vmatpush2.xpose.msra.mxu0 0.0
    %459 = vmatprep.subr.mxu0 0.0
    %460 = vmatpush2.xpose.msra.mxu0 0.0
    %461 = vmatprep.subr.mxu0 0.0
    %462 = vmatpush2.xpose.msra.mxu0 0.0
    %463 = vmatprep.subr.mxu0 0.0
    %464 = vmatpush2.xpose.msra.mxu0 0.0
    %465 = vmatprep.mubr.f32.mxu0 0.0
    %466 = vmatmul.mubr.f32.gmra.mxu0 %v397
    %v467 = vpop.f32.mrf.mxu0
    %v468 = vadd.f32 0.0, %v467
    %v469 = vpop.f32.mrf.mxu0
    %470 = vdwg.mxu0
    %v471 = vsel %vm305, %v468, -inf
    %472 = vmax.xlane.f32.xlu0 %v471
    %v473 = vpop.xlane.xlu0 %472
    %v474 = vsub.f32 %v468, %v473
    %v475 = vmul.f32 %v474, 1.442695
    %v476 = vpow.pop %v475
    %478 = vrot.lane.b32.xlu0 %v225, 112
    %v479 = vpop.permute.xlu0 %478
    %v481 = vsel %vm228, %v479, 1.0
    %v483 = vsel %vm305, %v476, 0
    %485 = vmatprep.subr.mxu0 0.0
    %486 = vmatpush1.msra.mxu0 0.0
    %487 = vmatprep.subr.mxu0 0.0
    %488 = vmatpush1.msra.mxu0 0.0
    %489 = vmatprep.subr.mxu0 0.0
    %490 = vmatpush1.msra.mxu0 0.0
    %491 = vmatprep.subr.mxu0 0.0
    %492 = vmatpush1.msra.mxu0 0.0
    %493 = vmatprep.subr.mxu0 0.0
    %494 = vmatpush1.msra.mxu0 0.0
    %495 = vmatprep.subr.mxu0 0.0
    %496 = vmatpush1.msra.mxu0 0.0
    %497 = vmatprep.subr.mxu0 0.0
    %498 = vmatpush1.msra.mxu0 0.0
    %499 = vmatprep.subr.mxu0 0.0
    %500 = vmatpush1.msra.mxu0 0.0
    %501 = vmatprep.subr.mxu0 0.0
    %502 = vmatpush1.msra.mxu0 0.0
    %503 = vmatprep.subr.mxu0 0.0
    %504 = vmatpush1.msra.mxu0 0.0
    %505 = vmatprep.subr.mxu0 0.0
    %506 = vmatpush1.msra.mxu0 0.0
    %507 = vmatprep.subr.mxu0 0.0
    %508 = vmatpush1.msra.mxu0 0.0
    %509 = vmatprep.subr.mxu0 0.0
    %510 = vmatpush1.msra.mxu0 0.0
    %511 = vmatprep.subr.mxu0 0.0
    %512 = vmatpush1.msra.mxu0 0.0
    %513 = vmatprep.subr.mxu0 0.0
    %514 = vmatpush1.msra.mxu0 0.0
    %515 = vmatprep.subr.mxu0 0.0
    %516 = vmatpush1.msra.mxu0 %v481
    %517 = vmatprep.subr.mxu0 0.0
    %518 = vmatpush2.msra.mxu0 0.0
    %519 = vmatprep.subr.mxu0 0.0
    %520 = vmatpush2.msra.mxu0 0.0
    %521 = vmatprep.subr.mxu0 0.0
    %522 = vmatpush2.msra.mxu0 0.0
    %523 = vmatprep.subr.mxu0 0.0
    %524 = vmatpush2.msra.mxu0 0.0
    %525 = vmatprep.subr.mxu0 0.0
    %526 = vmatpush2.msra.mxu0 0.0
    %527 = vmatprep.subr.mxu0 0.0
    %528 = vmatpush2.msra.mxu0 0.0
    %529 = vmatprep.subr.mxu0 0.0
    %530 = vmatpush2.msra.mxu0 0.0
    %531 = vmatprep.subr.mxu0 0.0
    %532 = vmatpush2.msra.mxu0 0.0
    %533 = vmatprep.subr.mxu0 0.0
    %534 = vmatpush2.msra.mxu0 0.0
    %535 = vmatprep.subr.mxu0 0.0
    %536 = vmatpush2.msra.mxu0 0.0
    %537 = vmatprep.subr.mxu0 0.0
    %538 = vmatpush2.msra.mxu0 0.0
    %539 = vmatprep.subr.mxu0 0.0
    %540 = vmatpush2.msra.mxu0 0.0
    %541 = vmatprep.subr.mxu0 0.0
    %542 = vmatpush2.msra.mxu0 0.0
    %543 = vmatprep.subr.mxu0 0.0
    %544 = vmatpush2.msra.mxu0 0.0
    %545 = vmatprep.subr.mxu0 0.0
    %546 = vmatpush2.msra.mxu0 0.0
    %547 = vmatprep.subr.mxu0 0.0
    %548 = vmatpush2.msra.mxu0 0.0
    %549 = vmatprep.mubr.f32.mxu0 0.0
    %550 = vmatmul.mubr.f32.gmra.mxu0 %v483
    %v551 = vpop.f32.mrf.mxu0
    %v552 = vadd.f32 0.0, %v551
    %v553 = vpop.f32.mrf.mxu0
    %554 = vdwg.mxu0
    %v555 = vrcp.pop %v552
    %557 = vset.pattern.permute.xlu0 16
    %558 = vperm.xlu0 %557, %v555
    %v559 = vpop.permute.xlu0 %558
    %v561 = vmul.f32 %v552, %v559
    %562 = vrot.lane.b32.xlu0 %v154, 96
    %v563 = vpop.permute.xlu0 %562
    %564 = vrot.lane.b32.xlu0 %v156, 96
    %v565 = vpop.permute.xlu0 %564
    %v566 = vsel %vm228, %v563, 0
    %v568 = vsel %vm228, %v565, 0
    %570 = vmatprep.subr.mxu0 0.0
    %571 = vmatpush1.xpose.msra.mxu0 0.0
    %572 = vmatprep.subr.mxu0 0.0
    %573 = vmatpush1.xpose.msra.mxu0 0.0
    %574 = vmatprep.subr.mxu0 0.0
    %575 = vmatpush1.xpose.msra.mxu0 0.0
    %576 = vmatprep.subr.mxu0 0.0
    %577 = vmatpush1.xpose.msra.mxu0 0.0
    %578 = vmatprep.subr.mxu0 0.0
    %579 = vmatpush1.xpose.msra.mxu0 0.0
    %580 = vmatprep.subr.mxu0 0.0
    %581 = vmatpush1.xpose.msra.mxu0 0.0
    %582 = vmatprep.subr.mxu0 0.0
    %583 = vmatpush1.xpose.msra.mxu0 0.0
    %584 = vmatprep.subr.mxu0 0.0
    %585 = vmatpush1.xpose.msra.mxu0 0.0
    %586 = vmatprep.subr.mxu0 0.0
    %587 = vmatpush1.xpose.msra.mxu0 0.0
    %588 = vmatprep.subr.mxu0 0.0
    %589 = vmatpush1.xpose.msra.mxu0 0.0
    %590 = vmatprep.subr.mxu0 0.0
    %591 = vmatpush1.xpose.msra.mxu0 0.0
    %592 = vmatprep.subr.mxu0 0.0
    %593 = vmatpush1.xpose.msra.mxu0 0.0
    %594 = vmatprep.subr.mxu0 0.0
    %595 = vmatpush1.xpose.msra.mxu0 0.0
    %596 = vmatprep.subr.mxu0 0.0
    %597 = vmatpush1.xpose.msra.mxu0 0.0
    %598 = vmatprep.subr.mxu0 0.0
    %599 = vmatpush1.xpose.msra.mxu0 0.0
    %600 = vmatprep.subr.mxu0 0.0
    %601 = vmatpush1.xpose.msra.mxu0 %v568
    %602 = vmatprep.subr.mxu0 0.0
    %603 = vmatpush2.xpose.msra.mxu0 0.0
    %604 = vmatprep.subr.mxu0 0.0
    %605 = vmatpush2.xpose.msra.mxu0 0.0
    %606 = vmatprep.subr.mxu0 0.0
    %607 = vmatpush2.xpose.msra.mxu0 0.0
    %608 = vmatprep.subr.mxu0 0.0
    %609 = vmatpush2.xpose.msra.mxu0 0.0
    %610 = vmatprep.subr.mxu0 0.0
    %611 = vmatpush2.xpose.msra.mxu0 0.0
    %612 = vmatprep.subr.mxu0 0.0
    %613 = vmatpush2.xpose.msra.mxu0 0.0
    %614 = vmatprep.subr.mxu0 0.0
    %615 = vmatpush2.xpose.msra.mxu0 0.0
    %616 = vmatprep.subr.mxu0 0.0
    %617 = vmatpush2.xpose.msra.mxu0 0.0
    %618 = vmatprep.subr.mxu0 0.0
    %619 = vmatpush2.xpose.msra.mxu0 0.0
    %620 = vmatprep.subr.mxu0 0.0
    %621 = vmatpush2.xpose.msra.mxu0 0.0
    %622 = vmatprep.subr.mxu0 0.0
    %623 = vmatpush2.xpose.msra.mxu0 0.0
    %624 = vmatprep.subr.mxu0 0.0
    %625 = vmatpush2.xpose.msra.mxu0 0.0
    %626 = vmatprep.subr.mxu0 0.0
    %627 = vmatpush2.xpose.msra.mxu0 0.0
    %628 = vmatprep.subr.mxu0 0.0
    %629 = vmatpush2.xpose.msra.mxu0 0.0
    %630 = vmatprep.subr.mxu0 0.0
    %631 = vmatpush2.xpose.msra.mxu0 0.0
    %632 = vmatprep.subr.mxu0 0.0
    %633 = vmatpush2.xpose.msra.mxu0 0.0
    %634 = vmatprep.mubr.f32.mxu0 0.0
    %635 = vmatmul.mubr.f32.gmra.mxu0 %v566
    %v636 = vpop.f32.mrf.mxu0
    %v637 = vadd.f32 0.0, %v636
    %v638 = vpop.f32.mrf.mxu0
    %639 = vdwg.mxu0
    %v640 = vsel %vm305, %v637, -inf
    %641 = vmax.xlane.f32.xlu0 %v640
    %v642 = vpop.xlane.xlu0 %641
    %v643 = vsub.f32 %v637, %v642
    %v644 = vmul.f32 %v643, 1.442695
    %v645 = vpow.pop %v644
    %646 = vrot.lane.b32.xlu0 %v225, 96
    %v647 = vpop.permute.xlu0 %646
    %v649 = vsel %vm228, %v647, 1.0
    %v651 = vsel %vm305, %v645, 0
    %653 = vmatprep.subr.mxu0 0.0
    %654 = vmatpush1.msra.mxu0 0.0
    %655 = vmatprep.subr.mxu0 0.0
    %656 = vmatpush1.msra.mxu0 0.0
    %657 = vmatprep.subr.mxu0 0.0
    %658 = vmatpush1.msra.mxu0 0.0
    %659 = vmatprep.subr.mxu0 0.0
    %660 = vmatpush1.msra.mxu0 0.0
    %661 = vmatprep.subr.mxu0 0.0
    %662 = vmatpush1.msra.mxu0 0.0
    %663 = vmatprep.subr.mxu0 0.0
    %664 = vmatpush1.msra.mxu0 0.0
    %665 = vmatprep.subr.mxu0 0.0
    %666 = vmatpush1.msra.mxu0 0.0
    %667 = vmatprep.subr.mxu0 0.0
    %668 = vmatpush1.msra.mxu0 0.0
    %669 = vmatprep.subr.mxu0 0.0
    %670 = vmatpush1.msra.mxu0 0.0
    %671 = vmatprep.subr.mxu0 0.0
    %672 = vmatpush1.msra.mxu0 0.0
    %673 = vmatprep.subr.mxu0 0.0
    %674 = vmatpush1.msra.mxu0 0.0
    %675 = vmatprep.subr.mxu0 0.0
    %676 = vmatpush1.msra.mxu0 0.0
    %677 = vmatprep.subr.mxu0 0.0
    %678 = vmatpush1.msra.mxu0 0.0
    %679 = vmatprep.subr.mxu0 0.0
    %680 = vmatpush1.msra.mxu0 0.0
    %681 = vmatprep.subr.mxu0 0.0
    %682 = vmatpush1.msra.mxu0 0.0
    %683 = vmatprep.subr.mxu0 0.0
    %684 = vmatpush1.msra.mxu0 %v649
    %685 = vmatprep.subr.mxu0 0.0
    %686 = vmatpush2.msra.mxu0 0.0
    %687 = vmatprep.subr.mxu0 0.0
    %688 = vmatpush2.msra.mxu0 0.0
    %689 = vmatprep.subr.mxu0 0.0
    %690 = vmatpush2.msra.mxu0 0.0
    %691 = vmatprep.subr.mxu0 0.0
    %692 = vmatpush2.msra.mxu0 0.0
    %693 = vmatprep.subr.mxu0 0.0
    %694 = vmatpush2.msra.mxu0 0.0
    %695 = vmatprep.subr.mxu0 0.0
    %696 = vmatpush2.msra.mxu0 0.0
    %697 = vmatprep.subr.mxu0 0.0
    %698 = vmatpush2.msra.mxu0 0.0
    %699 = vmatprep.subr.mxu0 0.0
    %700 = vmatpush2.msra.mxu0 0.0
    %701 = vmatprep.subr.mxu0 0.0
    %702 = vmatpush2.msra.mxu0 0.0
    %703 = vmatprep.subr.mxu0 0.0
    %704 = vmatpush2.msra.mxu0 0.0
    %705 = vmatprep.subr.mxu0 0.0
    %706 = vmatpush2.msra.mxu0 0.0
    %707 = vmatprep.subr.mxu0 0.0
    %708 = vmatpush2.msra.mxu0 0.0
    %709 = vmatprep.subr.mxu0 0.0
    %710 = vmatpush2.msra.mxu0 0.0
    %711 = vmatprep.subr.mxu0 0.0
    %712 = vmatpush2.msra.mxu0 0.0
    %713 = vmatprep.subr.mxu0 0.0
    %714 = vmatpush2.msra.mxu0 0.0
    %715 = vmatprep.subr.mxu0 0.0
    %716 = vmatpush2.msra.mxu0 0.0
    %717 = vmatprep.mubr.f32.mxu0 0.0
    %718 = vmatmul.mubr.f32.gmra.mxu0 %v651
    %v719 = vpop.f32.mrf.mxu0
    %v720 = vadd.f32 0.0, %v719
    %v721 = vpop.f32.mrf.mxu0
    %722 = vdwg.mxu0
    %v723 = vrcp.pop %v720
    %725 = vset.pattern.permute.xlu0 16
    %726 = vperm.xlu0 %725, %v723
    %v727 = vpop.permute.xlu0 %726
    %v729 = vmul.f32 %v720, %v727
    %730 = vrot.lane.b32.xlu0 %v154, 80
    %v731 = vpop.permute.xlu0 %730
    %732 = vrot.lane.b32.xlu0 %v156, 80
    %v733 = vpop.permute.xlu0 %732
    %v734 = vsel %vm228, %v731, 0
    %v736 = vsel %vm228, %v733, 0
    %738 = vmatprep.subr.mxu0 0.0
    %739 = vmatpush1.xpose.msra.mxu0 0.0
    %740 = vmatprep.subr.mxu0 0.0
    %741 = vmatpush1.xpose.msra.mxu0 0.0
    %742 = vmatprep.subr.mxu0 0.0
    %743 = vmatpush1.xpose.msra.mxu0 0.0
    %744 = vmatprep.subr.mxu0 0.0
    %745 = vmatpush1.xpose.msra.mxu0 0.0
    %746 = vmatprep.subr.mxu0 0.0
    %747 = vmatpush1.xpose.msra.mxu0 0.0
    %748 = vmatprep.subr.mxu0 0.0
    %749 = vmatpush1.xpose.msra.mxu0 0.0
    %750 = vmatprep.subr.mxu0 0.0
    %751 = vmatpush1.xpose.msra.mxu0 0.0
    %752 = vmatprep.subr.mxu0 0.0
    %753 = vmatpush1.xpose.msra.mxu0 0.0
    %754 = vmatprep.subr.mxu0 0.0
    %755 = vmatpush1.xpose.msra.mxu0 0.0
    %756 = vmatprep.subr.mxu0 0.0
    %757 = vmatpush1.xpose.msra.mxu0 0.0
    %758 = vmatprep.subr.mxu0 0.0
    %759 = vmatpush1.xpose.msra.mxu0 0.0
    %760 = vmatprep.subr.mxu0 0.0
    %761 = vmatpush1.xpose.msra.mxu0 0.0
    %762 = vmatprep.subr.mxu0 0.0
    %763 = vmatpush1.xpose.msra.mxu0 0.0
    %764 = vmatprep.subr.mxu0 0.0
    %765 = vmatpush1.xpose.msra.mxu0 0.0
    %766 = vmatprep.subr.mxu0 0.0
    %767 = vmatpush1.xpose.msra.mxu0 0.0
    %768 = vmatprep.subr.mxu0 0.0
    %769 = vmatpush1.xpose.msra.mxu0 %v736
    %770 = vmatprep.subr.mxu0 0.0
    %771 = vmatpush2.xpose.msra.mxu0 0.0
    %772 = vmatprep.subr.mxu0 0.0
    %773 = vmatpush2.xpose.msra.mxu0 0.0
    %774 = vmatprep.subr.mxu0 0.0
    %775 = vmatpush2.xpose.msra.mxu0 0.0
    %776 = vmatprep.subr.mxu0 0.0
    %777 = vmatpush2.xpose.msra.mxu0 0.0
    %778 = vmatprep.subr.mxu0 0.0
    %779 = vmatpush2.xpose.msra.mxu0 0.0
    %780 = vmatprep.subr.mxu0 0.0
    %781 = vmatpush2.xpose.msra.mxu0 0.0
    %782 = vmatprep.subr.mxu0 0.0
    %783 = vmatpush2.xpose.msra.mxu0 0.0
    %784 = vmatprep.subr.mxu0 0.0
    %785 = vmatpush2.xpose.msra.mxu0 0.0
    %786 = vmatprep.subr.mxu0 0.0
    %787 = vmatpush2.xpose.msra.mxu0 0.0
    %788 = vmatprep.subr.mxu0 0.0
    %789 = vmatpush2.xpose.msra.mxu0 0.0
    %790 = vmatprep.subr.mxu0 0.0
    %791 = vmatpush2.xpose.msra.mxu0 0.0
    %792 = vmatprep.subr.mxu0 0.0
    %793 = vmatpush2.xpose.msra.mxu0 0.0
    %794 = vmatprep.subr.mxu0 0.0
    %795 = vmatpush2.xpose.msra.mxu0 0.0
    %796 = vmatprep.subr.mxu0 0.0
    %797 = vmatpush2.xpose.msra.mxu0 0.0
    %798 = vmatprep.subr.mxu0 0.0
    %799 = vmatpush2.xpose.msra.mxu0 0.0
    %800 = vmatprep.subr.mxu0 0.0
    %801 = vmatpush2.xpose.msra.mxu0 0.0
    %802 = vmatprep.mubr.f32.mxu0 0.0
    %803 = vmatmul.mubr.f32.gmra.mxu0 %v734
    %v804 = vpop.f32.mrf.mxu0
    %v805 = vadd.f32 0.0, %v804
    %v806 = vpop.f32.mrf.mxu0
    %807 = vdwg.mxu0
    %v808 = vsel %vm305, %v805, -inf
    %809 = vmax.xlane.f32.xlu0 %v808
    %v810 = vpop.xlane.xlu0 %809
    %v811 = vsub.f32 %v805, %v810
    %v812 = vmul.f32 %v811, 1.442695
    %v813 = vpow.pop %v812
    %814 = vrot.lane.b32.xlu0 %v225, 80
    %v815 = vpop.permute.xlu0 %814
    %v817 = vsel %vm228, %v815, 1.0
    %v819 = vsel %vm305, %v813, 0
    %821 = vmatprep.subr.mxu0 0.0
    %822 = vmatpush1.msra.mxu0 0.0
    %823 = vmatprep.subr.mxu0 0.0
    %824 = vmatpush1.msra.mxu0 0.0
    %825 = vmatprep.subr.mxu0 0.0
    %826 = vmatpush1.msra.mxu0 0.0
    %827 = vmatprep.subr.mxu0 0.0
    %828 = vmatpush1.msra.mxu0 0.0
    %829 = vmatprep.subr.mxu0 0.0
    %830 = vmatpush1.msra.mxu0 0.0
    %831 = vmatprep.subr.mxu0 0.0
    %832 = vmatpush1.msra.mxu0 0.0
    %833 = vmatprep.subr.mxu0 0.0
    %834 = vmatpush1.msra.mxu0 0.0
    %835 = vmatprep.subr.mxu0 0.0
    %836 = vmatpush1.msra.mxu0 0.0
    %837 = vmatprep.subr.mxu0 0.0
    %838 = vmatpush1.msra.mxu0 0.0
    %839 = vmatprep.subr.mxu0 0.0
    %840 = vmatpush1.msra.mxu0 0.0
    %841 = vmatprep.subr.mxu0 0.0
    %842 = vmatpush1.msra.mxu0 0.0
    %843 = vmatprep.subr.mxu0 0.0
    %844 = vmatpush1.msra.mxu0 0.0
    %845 = vmatprep.subr.mxu0 0.0
    %846 = vmatpush1.msra.mxu0 0.0
    %847 = vmatprep.subr.mxu0 0.0
    %848 = vmatpush1.msra.mxu0 0.0
    %849 = vmatprep.subr.mxu0 0.0
    %850 = vmatpush1.msra.mxu0 0.0
    %851 = vmatprep.subr.mxu0 0.0
    %852 = vmatpush1.msra.mxu0 %v817
    %853 = vmatprep.subr.mxu0 0.0
    %854 = vmatpush2.msra.mxu0 0.0
    %855 = vmatprep.subr.mxu0 0.0
    %856 = vmatpush2.msra.mxu0 0.0
    %857 = vmatprep.subr.mxu0 0.0
    %858 = vmatpush2.msra.mxu0 0.0
    %859 = vmatprep.subr.mxu0 0.0
    %860 = vmatpush2.msra.mxu0 0.0
    %861 = vmatprep.subr.mxu0 0.0
    %862 = vmatpush2.msra.mxu0 0.0
    %863 = vmatprep.subr.mxu0 0.0
    %864 = vmatpush2.msra.mxu0 0.0
    %865 = vmatprep.subr.mxu0 0.0
    %866 = vmatpush2.msra.mxu0 0.0
    %867 = vmatprep.subr.mxu0 0.0
    %868 = vmatpush2.msra.mxu0 0.0
    %869 = vmatprep.subr.mxu0 0.0
    %870 = vmatpush2.msra.mxu0 0.0
    %871 = vmatprep.subr.mxu0 0.0
    %872 = vmatpush2.msra.mxu0 0.0
    %873 = vmatprep.subr.mxu0 0.0
    %874 = vmatpush2.msra.mxu0 0.0
    %875 = vmatprep.subr.mxu0 0.0
    %876 = vmatpush2.msra.mxu0 0.0
    %877 = vmatprep.subr.mxu0 0.0
    %878 = vmatpush2.msra.mxu0 0.0
    %879 = vmatprep.subr.mxu0 0.0
    %880 = vmatpush2.msra.mxu0 0.0
    %881 = vmatprep.subr.mxu0 0.0
    %882 = vmatpush2.msra.mxu0 0.0
    %883 = vmatprep.subr.mxu0 0.0
    %884 = vmatpush2.msra.mxu0 0.0
    %885 = vmatprep.mubr.f32.mxu0 0.0
    %886 = vmatmul.mubr.f32.gmra.mxu0 %v819
    %v887 = vpop.f32.mrf.mxu0
    %v888 = vadd.f32 0.0, %v887
    %v889 = vpop.f32.mrf.mxu0
    %890 = vdwg.mxu0
    %v891 = vrcp.pop %v888
    %893 = vset.pattern.permute.xlu0 16
    %894 = vperm.xlu0 %893, %v891
    %v895 = vpop.permute.xlu0 %894
    %v897 = vmul.f32 %v888, %v895
    %898 = vrot.lane.b32.xlu0 %v154, 64
    %v899 = vpop.permute.xlu0 %898
    %900 = vrot.lane.b32.xlu0 %v156, 64
    %v901 = vpop.permute.xlu0 %900
    %v902 = vsel %vm228, %v899, 0
    %v904 = vsel %vm228, %v901, 0
    %906 = vmatprep.subr.mxu0 0.0
    %907 = vmatpush1.xpose.msra.mxu0 0.0
    %908 = vmatprep.subr.mxu0 0.0
    %909 = vmatpush1.xpose.msra.mxu0 0.0
    %910 = vmatprep.subr.mxu0 0.0
    %911 = vmatpush1.xpose.msra.mxu0 0.0
    %912 = vmatprep.subr.mxu0 0.0
    %913 = vmatpush1.xpose.msra.mxu0 0.0
    %914 = vmatprep.subr.mxu0 0.0
    %915 = vmatpush1.xpose.msra.mxu0 0.0
    %916 = vmatprep.subr.mxu0 0.0
    %917 = vmatpush1.xpose.msra.mxu0 0.0
    %918 = vmatprep.subr.mxu0 0.0
    %919 = vmatpush1.xpose.msra.mxu0 0.0
    %920 = vmatprep.subr.mxu0 0.0
    %921 = vmatpush1.xpose.msra.mxu0 0.0
    %922 = vmatprep.subr.mxu0 0.0
    %923 = vmatpush1.xpose.msra.mxu0 0.0
    %924 = vmatprep.subr.mxu0 0.0
    %925 = vmatpush1.xpose.msra.mxu0 0.0
    %926 = vmatprep.subr.mxu0 0.0
    %927 = vmatpush1.xpose.msra.mxu0 0.0
    %928 = vmatprep.subr.mxu0 0.0
    %929 = vmatpush1.xpose.msra.mxu0 0.0
    %930 = vmatprep.subr.mxu0 0.0
    %931 = vmatpush1.xpose.msra.mxu0 0.0
    %932 = vmatprep.subr.mxu0 0.0
    %933 = vmatpush1.xpose.msra.mxu0 0.0
    %934 = vmatprep.subr.mxu0 0.0
    %935 = vmatpush1.xpose.msra.mxu0 0.0
    %936 = vmatprep.subr.mxu0 0.0
    %937 = vmatpush1.xpose.msra.mxu0 %v904
    %938 = vmatprep.subr.mxu0 0.0
    %939 = vmatpush2.xpose.msra.mxu0 0.0
    %940 = vmatprep.subr.mxu0 0.0
    %941 = vmatpush2.xpose.msra.mxu0 0.0
    %942 = vmatprep.subr.mxu0 0.0
    %943 = vmatpush2.xpose.msra.mxu0 0.0
    %944 = vmatprep.subr.mxu0 0.0
    %945 = vmatpush2.xpose.msra.mxu0 0.0
    %946 = vmatprep.subr.mxu0 0.0
    %947 = vmatpush2.xpose.msra.mxu0 0.0
    %948 = vmatprep.subr.mxu0 0.0
    %949 = vmatpush2.xpose.msra.mxu0 0.0
    %950 = vmatprep.subr.mxu0 0.0
    %951 = vmatpush2.xpose.msra.mxu0 0.0
    %952 = vmatprep.subr.mxu0 0.0
    %953 = vmatpush2.xpose.msra.mxu0 0.0
    %954 = vmatprep.subr.mxu0 0.0
    %955 = vmatpush2.xpose.msra.mxu0 0.0
    %956 = vmatprep.subr.mxu0 0.0
    %957 = vmatpush2.xpose.msra.mxu0 0.0
    %958 = vmatprep.subr.mxu0 0.0
    %959 = vmatpush2.xpose.msra.mxu0 0.0
    %960 = vmatprep.subr.mxu0 0.0
    %961 = vmatpush2.xpose.msra.mxu0 0.0
    %962 = vmatprep.subr.mxu0 0.0
    %963 = vmatpush2.xpose.msra.mxu0 0.0
    %964 = vmatprep.subr.mxu0 0.0
    %965 = vmatpush2.xpose.msra.mxu0 0.0
    %966 = vmatprep.subr.mxu0 0.0
    %967 = vmatpush2.xpose.msra.mxu0 0.0
    %968 = vmatprep.subr.mxu0 0.0
    %969 = vmatpush2.xpose.msra.mxu0 0.0
    %970 = vmatprep.mubr.f32.mxu0 0.0
    %971 = vmatmul.mubr.f32.gmra.mxu0 %v902
    %v972 = vpop.f32.mrf.mxu0
    %v973 = vadd.f32 0.0, %v972
    %v974 = vpop.f32.mrf.mxu0
    %975 = vdwg.mxu0
    %v976 = vsel %vm305, %v973, -inf
    %977 = vmax.xlane.f32.xlu0 %v976
    %v978 = vpop.xlane.xlu0 %977
    %v979 = vsub.f32 %v973, %v978
    %v980 = vmul.f32 %v979, 1.442695
    %v981 = vpow.pop %v980
    %982 = vrot.lane.b32.xlu0 %v225, 64
    %v983 = vpop.permute.xlu0 %982
    %v985 = vsel %vm228, %v983, 1.0
    %v987 = vsel %vm305, %v981, 0
    %989 = vmatprep.subr.mxu0 0.0
    %990 = vmatpush1.msra.mxu0 0.0
    %991 = vmatprep.subr.mxu0 0.0
    %992 = vmatpush1.msra.mxu0 0.0
    %993 = vmatprep.subr.mxu0 0.0
    %994 = vmatpush1.msra.mxu0 0.0
    %995 = vmatprep.subr.mxu0 0.0
    %996 = vmatpush1.msra.mxu0 0.0
    %997 = vmatprep.subr.mxu0 0.0
    %998 = vmatpush1.msra.mxu0 0.0
    %999 = vmatprep.subr.mxu0 0.0
    %1000 = vmatpush1.msra.mxu0 0.0
    %1001 = vmatprep.subr.mxu0 0.0
    %1002 = vmatpush1.msra.mxu0 0.0
    %1003 = vmatprep.subr.mxu0 0.0
    %1004 = vmatpush1.msra.mxu0 0.0
    %1005 = vmatprep.subr.mxu0 0.0
    %1006 = vmatpush1.msra.mxu0 0.0
    %1007 = vmatprep.subr.mxu0 0.0
    %1008 = vmatpush1.msra.mxu0 0.0
    %1009 = vmatprep.subr.mxu0 0.0
    %1010 = vmatpush1.msra.mxu0 0.0
    %1011 = vmatprep.subr.mxu0 0.0
    %1012 = vmatpush1.msra.mxu0 0.0
    %1013 = vmatprep.subr.mxu0 0.0
    %1014 = vmatpush1.msra.mxu0 0.0
    %1015 = vmatprep.subr.mxu0 0.0
    %1016 = vmatpush1.msra.mxu0 0.0
    %1017 = vmatprep.subr.mxu0 0.0
    %1018 = vmatpush1.msra.mxu0 0.0
    %1019 = vmatprep.subr.mxu0 0.0
    %1020 = vmatpush1.msra.mxu0 %v985
    %1021 = vmatprep.subr.mxu0 0.0
    %1022 = vmatpush2.msra.mxu0 0.0
    %1023 = vmatprep.subr.mxu0 0.0
    %1024 = vmatpush2.msra.mxu0 0.0
    %1025 = vmatprep.subr.mxu0 0.0
    %1026 = vmatpush2.msra.mxu0 0.0
    %1027 = vmatprep.subr.mxu0 0.0
    %1028 = vmatpush2.msra.mxu0 0.0
    %1029 = vmatprep.subr.mxu0 0.0
    %1030 = vmatpush2.msra.mxu0 0.0
    %1031 = vmatprep.subr.mxu0 0.0
    %1032 = vmatpush2.msra.mxu0 0.0
    %1033 = vmatprep.subr.mxu0 0.0
    %1034 = vmatpush2.msra.mxu0 0.0
    %1035 = vmatprep.subr.mxu0 0.0
    %1036 = vmatpush2.msra.mxu0 0.0
    %1037 = vmatprep.subr.mxu0 0.0
    %1038 = vmatpush2.msra.mxu0 0.0
    %1039 = vmatprep.subr.mxu0 0.0
    %1040 = vmatpush2.msra.mxu0 0.0
    %1041 = vmatprep.subr.mxu0 0.0
    %1042 = vmatpush2.msra.mxu0 0.0
    %1043 = vmatprep.subr.mxu0 0.0
    %1044 = vmatpush2.msra.mxu0 0.0
    %1045 = vmatprep.subr.mxu0 0.0
    %1046 = vmatpush2.msra.mxu0 0.0
    %1047 = vmatprep.subr.mxu0 0.0
    %1048 = vmatpush2.msra.mxu0 0.0
    %1049 = vmatprep.subr.mxu0 0.0
    %1050 = vmatpush2.msra.mxu0 0.0
    %1051 = vmatprep.subr.mxu0 0.0
    %1052 = vmatpush2.msra.mxu0 0.0
    %1053 = vmatprep.mubr.f32.mxu0 0.0
    %1054 = vmatmul.mubr.f32.gmra.mxu0 %v987
    %v1055 = vpop.f32.mrf.mxu0
    %v1056 = vadd.f32 0.0, %v1055
    %v1057 = vpop.f32.mrf.mxu0
    %1058 = vdwg.mxu0
    %v1059 = vrcp.pop %v1056
    %1061 = vset.pattern.permute.xlu0 16
    %1062 = vperm.xlu0 %1061, %v1059
    %v1063 = vpop.permute.xlu0 %1062
    %v1065 = vmul.f32 %v1056, %v1063
    %1066 = vrot.lane.b32.xlu0 %v154, 48
    %v1067 = vpop.permute.xlu0 %1066
    %1068 = vrot.lane.b32.xlu0 %v156, 48
    %v1069 = vpop.permute.xlu0 %1068
    %v1070 = vsel %vm228, %v1067, 0
    %v1072 = vsel %vm228, %v1069, 0
    %1074 = vmatprep.subr.mxu0 0.0
    %1075 = vmatpush1.xpose.msra.mxu0 0.0
    %1076 = vmatprep.subr.mxu0 0.0
    %1077 = vmatpush1.xpose.msra.mxu0 0.0
    %1078 = vmatprep.subr.mxu0 0.0
    %1079 = vmatpush1.xpose.msra.mxu0 0.0
    %1080 = vmatprep.subr.mxu0 0.0
    %1081 = vmatpush1.xpose.msra.mxu0 0.0
    %1082 = vmatprep.subr.mxu0 0.0
    %1083 = vmatpush1.xpose.msra.mxu0 0.0
    %1084 = vmatprep.subr.mxu0 0.0
    %1085 = vmatpush1.xpose.msra.mxu0 0.0
    %1086 = vmatprep.subr.mxu0 0.0
    %1087 = vmatpush1.xpose.msra.mxu0 0.0
    %1088 = vmatprep.subr.mxu0 0.0
    %1089 = vmatpush1.xpose.msra.mxu0 0.0
    %1090 = vmatprep.subr.mxu0 0.0
    %1091 = vmatpush1.xpose.msra.mxu0 0.0
    %1092 = vmatprep.subr.mxu0 0.0
    %1093 = vmatpush1.xpose.msra.mxu0 0.0
    %1094 = vmatprep.subr.mxu0 0.0
    %1095 = vmatpush1.xpose.msra.mxu0 0.0
    %1096 = vmatprep.subr.mxu0 0.0
    %1097 = vmatpush1.xpose.msra.mxu0 0.0
    %1098 = vmatprep.subr.mxu0 0.0
    %1099 = vmatpush1.xpose.msra.mxu0 0.0
    %1100 = vmatprep.subr.mxu0 0.0
    %1101 = vmatpush1.xpose.msra.mxu0 0.0
    %1102 = vmatprep.subr.mxu0 0.0
    %1103 = vmatpush1.xpose.msra.mxu0 0.0
    %1104 = vmatprep.subr.mxu0 0.0
    %1105 = vmatpush1.xpose.msra.mxu0 %v1072
    %1106 = vmatprep.subr.mxu0 0.0
    %1107 = vmatpush2.xpose.msra.mxu0 0.0
    %1108 = vmatprep.subr.mxu0 0.0
    %1109 = vmatpush2.xpose.msra.mxu0 0.0
    %1110 = vmatprep.subr.mxu0 0.0
    %1111 = vmatpush2.xpose.msra.mxu0 0.0
    %1112 = vmatprep.subr.mxu0 0.0
    %1113 = vmatpush2.xpose.msra.mxu0 0.0
    %1114 = vmatprep.subr.mxu0 0.0
    %1115 = vmatpush2.xpose.msra.mxu0 0.0
    %1116 = vmatprep.subr.mxu0 0.0
    %1117 = vmatpush2.xpose.msra.mxu0 0.0
    %1118 = vmatprep.subr.mxu0 0.0
    %1119 = vmatpush2.xpose.msra.mxu0 0.0
    %1120 = vmatprep.subr.mxu0 0.0
    %1121 = vmatpush2.xpose.msra.mxu0 0.0
    %1122 = vmatprep.subr.mxu0 0.0
    %1123 = vmatpush2.xpose.msra.mxu0 0.0
    %1124 = vmatprep.subr.mxu0 0.0
    %1125 = vmatpush2.xpose.msra.mxu0 0.0
    %1126 = vmatprep.subr.mxu0 0.0
    %1127 = vmatpush2.xpose.msra.mxu0 0.0
    %1128 = vmatprep.subr.mxu0 0.0
    %1129 = vmatpush2.xpose.msra.mxu0 0.0
    %1130 = vmatprep.subr.mxu0 0.0
    %1131 = vmatpush2.xpose.msra.mxu0 0.0
    %1132 = vmatprep.subr.mxu0 0.0
    %1133 = vmatpush2.xpose.msra.mxu0 0.0
    %1134 = vmatprep.subr.mxu0 0.0
    %1135 = vmatpush2.xpose.msra.mxu0 0.0
    %1136 = vmatprep.subr.mxu0 0.0
    %1137 = vmatpush2.xpose.msra.mxu0 0.0
    %1138 = vmatprep.mubr.f32.mxu0 0.0
    %1139 = vmatmul.mubr.f32.gmra.mxu0 %v1070
    %v1140 = vpop.f32.mrf.mxu0
    %v1141 = vadd.f32 0.0, %v1140
    %v1142 = vpop.f32.mrf.mxu0
    %1143 = vdwg.mxu0
    %v1144 = vsel %vm305, %v1141, -inf
    %1145 = vmax.xlane.f32.xlu0 %v1144
    %v1146 = vpop.xlane.xlu0 %1145
    %v1147 = vsub.f32 %v1141, %v1146
    %v1148 = vmul.f32 %v1147, 1.442695
    %v1149 = vpow.pop %v1148
    %1150 = vrot.lane.b32.xlu0 %v225, 48
    %v1151 = vpop.permute.xlu0 %1150
    %v1153 = vsel %vm228, %v1151, 1.0
    %v1155 = vsel %vm305, %v1149, 0
    %1157 = vmatprep.subr.mxu0 0.0
    %1158 = vmatpush1.msra.mxu0 0.0
    %1159 = vmatprep.subr.mxu0 0.0
    %1160 = vmatpush1.msra.mxu0 0.0
    %1161 = vmatprep.subr.mxu0 0.0
    %1162 = vmatpush1.msra.mxu0 0.0
    %1163 = vmatprep.subr.mxu0 0.0
    %1164 = vmatpush1.msra.mxu0 0.0
    %1165 = vmatprep.subr.mxu0 0.0
    %1166 = vmatpush1.msra.mxu0 0.0
    %1167 = vmatprep.subr.mxu0 0.0
    %1168 = vmatpush1.msra.mxu0 0.0
    %1169 = vmatprep.subr.mxu0 0.0
    %1170 = vmatpush1.msra.mxu0 0.0
    %1171 = vmatprep.subr.mxu0 0.0
    %1172 = vmatpush1.msra.mxu0 0.0
    %1173 = vmatprep.subr.mxu0 0.0
    %1174 = vmatpush1.msra.mxu0 0.0
    %1175 = vmatprep.subr.mxu0 0.0
    %1176 = vmatpush1.msra.mxu0 0.0
    %1177 = vmatprep.subr.mxu0 0.0
    %1178 = vmatpush1.msra.mxu0 0.0
    %1179 = vmatprep.subr.mxu0 0.0
    %1180 = vmatpush1.msra.mxu0 0.0
    %1181 = vmatprep.subr.mxu0 0.0
    %1182 = vmatpush1.msra.mxu0 0.0
    %1183 = vmatprep.subr.mxu0 0.0
    %1184 = vmatpush1.msra.mxu0 0.0
    %1185 = vmatprep.subr.mxu0 0.0
    %1186 = vmatpush1.msra.mxu0 0.0
    %1187 = vmatprep.subr.mxu0 0.0
    %1188 = vmatpush1.msra.mxu0 %v1153
    %1189 = vmatprep.subr.mxu0 0.0
    %1190 = vmatpush2.msra.mxu0 0.0
    %1191 = vmatprep.subr.mxu0 0.0
    %1192 = vmatpush2.msra.mxu0 0.0
    %1193 = vmatprep.subr.mxu0 0.0
    %1194 = vmatpush2.msra.mxu0 0.0
    %1195 = vmatprep.subr.mxu0 0.0
    %1196 = vmatpush2.msra.mxu0 0.0
    %1197 = vmatprep.subr.mxu0 0.0
    %1198 = vmatpush2.msra.mxu0 0.0
    %1199 = vmatprep.subr.mxu0 0.0
    %1200 = vmatpush2.msra.mxu0 0.0
    %1201 = vmatprep.subr.mxu0 0.0
    %1202 = vmatpush2.msra.mxu0 0.0
    %1203 = vmatprep.subr.mxu0 0.0
    %1204 = vmatpush2.msra.mxu0 0.0
    %1205 = vmatprep.subr.mxu0 0.0
    %1206 = vmatpush2.msra.mxu0 0.0
    %1207 = vmatprep.subr.mxu0 0.0
    %1208 = vmatpush2.msra.mxu0 0.0
    %1209 = vmatprep.subr.mxu0 0.0
    %1210 = vmatpush2.msra.mxu0 0.0
    %1211 = vmatprep.subr.mxu0 0.0
    %1212 = vmatpush2.msra.mxu0 0.0
    %1213 = vmatprep.subr.mxu0 0.0
    %1214 = vmatpush2.msra.mxu0 0.0
    %1215 = vmatprep.subr.mxu0 0.0
    %1216 = vmatpush2.msra.mxu0 0.0
    %1217 = vmatprep.subr.mxu0 0.0
    %1218 = vmatpush2.msra.mxu0 0.0
    %1219 = vmatprep.subr.mxu0 0.0
    %1220 = vmatpush2.msra.mxu0 0.0
    %1221 = vmatprep.mubr.f32.mxu0 0.0
    %1222 = vmatmul.mubr.f32.gmra.mxu0 %v1155
    %v1223 = vpop.f32.mrf.mxu0
    %v1224 = vadd.f32 0.0, %v1223
    %v1225 = vpop.f32.mrf.mxu0
    %1226 = vdwg.mxu0
    %v1227 = vrcp.pop %v1224
    %1229 = vset.pattern.permute.xlu0 16
    %1230 = vperm.xlu0 %1229, %v1227
    %v1231 = vpop.permute.xlu0 %1230
    %v1233 = vmul.f32 %v1224, %v1231
    %1234 = vrot.lane.b32.xlu0 %v154, 32
    %v1235 = vpop.permute.xlu0 %1234
    %1236 = vrot.lane.b32.xlu0 %v156, 32
    %v1237 = vpop.permute.xlu0 %1236
    %v1238 = vsel %vm228, %v1235, 0
    %v1240 = vsel %vm228, %v1237, 0
    %1242 = vmatprep.subr.mxu0 0.0
    %1243 = vmatpush1.xpose.msra.mxu0 0.0
    %1244 = vmatprep.subr.mxu0 0.0
    %1245 = vmatpush1.xpose.msra.mxu0 0.0
    %1246 = vmatprep.subr.mxu0 0.0
    %1247 = vmatpush1.xpose.msra.mxu0 0.0
    %1248 = vmatprep.subr.mxu0 0.0
    %1249 = vmatpush1.xpose.msra.mxu0 0.0
    %1250 = vmatprep.subr.mxu0 0.0
    %1251 = vmatpush1.xpose.msra.mxu0 0.0
    %1252 = vmatprep.subr.mxu0 0.0
    %1253 = vmatpush1.xpose.msra.mxu0 0.0
    %1254 = vmatprep.subr.mxu0 0.0
    %1255 = vmatpush1.xpose.msra.mxu0 0.0
    %1256 = vmatprep.subr.mxu0 0.0
    %1257 = vmatpush1.xpose.msra.mxu0 0.0
    %1258 = vmatprep.subr.mxu0 0.0
    %1259 = vmatpush1.xpose.msra.mxu0 0.0
    %1260 = vmatprep.subr.mxu0 0.0
    %1261 = vmatpush1.xpose.msra.mxu0 0.0
    %1262 = vmatprep.subr.mxu0 0.0
    %1263 = vmatpush1.xpose.msra.mxu0 0.0
    %1264 = vmatprep.subr.mxu0 0.0
    %1265 = vmatpush1.xpose.msra.mxu0 0.0
    %1266 = vmatprep.subr.mxu0 0.0
    %1267 = vmatpush1.xpose.msra.mxu0 0.0
    %1268 = vmatprep.subr.mxu0 0.0
    %1269 = vmatpush1.xpose.msra.mxu0 0.0
    %1270 = vmatprep.subr.mxu0 0.0
    %1271 = vmatpush1.xpose.msra.mxu0 0.0
    %1272 = vmatprep.subr.mxu0 0.0
    %1273 = vmatpush1.xpose.msra.mxu0 %v1240
    %1274 = vmatprep.subr.mxu0 0.0
    %1275 = vmatpush2.xpose.msra.mxu0 0.0
    %1276 = vmatprep.subr.mxu0 0.0
    %1277 = vmatpush2.xpose.msra.mxu0 0.0
    %1278 = vmatprep.subr.mxu0 0.0
    %1279 = vmatpush2.xpose.msra.mxu0 0.0
    %1280 = vmatprep.subr.mxu0 0.0
    %1281 = vmatpush2.xpose.msra.mxu0 0.0
    %1282 = vmatprep.subr.mxu0 0.0
    %1283 = vmatpush2.xpose.msra.mxu0 0.0
    %1284 = vmatprep.subr.mxu0 0.0
    %1285 = vmatpush2.xpose.msra.mxu0 0.0
    %1286 = vmatprep.subr.mxu0 0.0
    %1287 = vmatpush2.xpose.msra.mxu0 0.0
    %1288 = vmatprep.subr.mxu0 0.0
    %1289 = vmatpush2.xpose.msra.mxu0 0.0
    %1290 = vmatprep.subr.mxu0 0.0
    %1291 = vmatpush2.xpose.msra.mxu0 0.0
    %1292 = vmatprep.subr.mxu0 0.0
    %1293 = vmatpush2.xpose.msra.mxu0 0.0
    %1294 = vmatprep.subr.mxu0 0.0
    %1295 = vmatpush2.xpose.msra.mxu0 0.0
    %1296 = vmatprep.subr.mxu0 0.0
    %1297 = vmatpush2.xpose.msra.mxu0 0.0
    %1298 = vmatprep.subr.mxu0 0.0
    %1299 = vmatpush2.xpose.msra.mxu0 0.0
    %1300 = vmatprep.subr.mxu0 0.0
    %1301 = vmatpush2.xpose.msra.mxu0 0.0
    %1302 = vmatprep.subr.mxu0 0.0
    %1303 = vmatpush2.xpose.msra.mxu0 0.0
    %1304 = vmatprep.subr.mxu0 0.0
    %1305 = vmatpush2.xpose.msra.mxu0 0.0
    %1306 = vmatprep.mubr.f32.mxu0 0.0
    %1307 = vmatmul.mubr.f32.gmra.mxu0 %v1238
    %v1308 = vpop.f32.mrf.mxu0
    %v1309 = vadd.f32 0.0, %v1308
    %v1310 = vpop.f32.mrf.mxu0
    %1311 = vdwg.mxu0
    %v1312 = vsel %vm305, %v1309, -inf
    %1313 = vmax.xlane.f32.xlu0 %v1312
    %v1314 = vpop.xlane.xlu0 %1313
    %v1315 = vsub.f32 %v1309, %v1314
    %v1316 = vmul.f32 %v1315, 1.442695
    %v1317 = vpow.pop %v1316
    %1318 = vrot.lane.b32.xlu0 %v225, 32
    %v1319 = vpop.permute.xlu0 %1318
    %v1321 = vsel %vm228, %v1319, 1.0
    %v1323 = vsel %vm305, %v1317, 0
    %1325 = vmatprep.subr.mxu0 0.0
    %1326 = vmatpush1.msra.mxu0 0.0
    %1327 = vmatprep.subr.mxu0 0.0
    %1328 = vmatpush1.msra.mxu0 0.0
    %1329 = vmatprep.subr.mxu0 0.0
    %1330 = vmatpush1.msra.mxu0 0.0
    %1331 = vmatprep.subr.mxu0 0.0
    %1332 = vmatpush1.msra.mxu0 0.0
    %1333 = vmatprep.subr.mxu0 0.0
    %1334 = vmatpush1.msra.mxu0 0.0
    %1335 = vmatprep.subr.mxu0 0.0
    %1336 = vmatpush1.msra.mxu0 0.0
    %1337 = vmatprep.subr.mxu0 0.0
    %1338 = vmatpush1.msra.mxu0 0.0
    %1339 = vmatprep.subr.mxu0 0.0
    %1340 = vmatpush1.msra.mxu0 0.0
    %1341 = vmatprep.subr.mxu0 0.0
    %1342 = vmatpush1.msra.mxu0 0.0
    %1343 = vmatprep.subr.mxu0 0.0
    %1344 = vmatpush1.msra.mxu0 0.0
    %1345 = vmatprep.subr.mxu0 0.0
    %1346 = vmatpush1.msra.mxu0 0.0
    %1347 = vmatprep.subr.mxu0 0.0
    %1348 = vmatpush1.msra.mxu0 0.0
    %1349 = vmatprep.subr.mxu0 0.0
    %1350 = vmatpush1.msra.mxu0 0.0
    %1351 = vmatprep.subr.mxu0 0.0
    %1352 = vmatpush1.msra.mxu0 0.0
    %1353 = vmatprep.subr.mxu0 0.0
    %1354 = vmatpush1.msra.mxu0 0.0
    %1355 = vmatprep.subr.mxu0 0.0
    %1356 = vmatpush1.msra.mxu0 %v1321
    %1357 = vmatprep.subr.mxu0 0.0
    %1358 = vmatpush2.msra.mxu0 0.0
    %1359 = vmatprep.subr.mxu0 0.0
    %1360 = vmatpush2.msra.mxu0 0.0
    %1361 = vmatprep.subr.mxu0 0.0
    %1362 = vmatpush2.msra.mxu0 0.0
    %1363 = vmatprep.subr.mxu0 0.0
    %1364 = vmatpush2.msra.mxu0 0.0
    %1365 = vmatprep.subr.mxu0 0.0
    %1366 = vmatpush2.msra.mxu0 0.0
    %1367 = vmatprep.subr.mxu0 0.0
    %1368 = vmatpush2.msra.mxu0 0.0
    %1369 = vmatprep.subr.mxu0 0.0
    %1370 = vmatpush2.msra.mxu0 0.0
    %1371 = vmatprep.subr.mxu0 0.0
    %1372 = vmatpush2.msra.mxu0 0.0
    %1373 = vmatprep.subr.mxu0 0.0
    %1374 = vmatpush2.msra.mxu0 0.0
    %1375 = vmatprep.subr.mxu0 0.0
    %1376 = vmatpush2.msra.mxu0 0.0
    %1377 = vmatprep.subr.mxu0 0.0
    %1378 = vmatpush2.msra.mxu0 0.0
    %1379 = vmatprep.subr.mxu0 0.0
    %1380 = vmatpush2.msra.mxu0 0.0
    %1381 = vmatprep.subr.mxu0 0.0
    %1382 = vmatpush2.msra.mxu0 0.0
    %1383 = vmatprep.subr.mxu0 0.0
    %1384 = vmatpush2.msra.mxu0 0.0
    %1385 = vmatprep.subr.mxu0 0.0
    %1386 = vmatpush2.msra.mxu0 0.0
    %1387 = vmatprep.subr.mxu0 0.0
    %1388 = vmatpush2.msra.mxu0 0.0
    %1389 = vmatprep.mubr.f32.mxu0 0.0
    %1390 = vmatmul.mubr.f32.gmra.mxu0 %v1323
    %v1391 = vpop.f32.mrf.mxu0
    %v1392 = vadd.f32 0.0, %v1391
    %v1393 = vpop.f32.mrf.mxu0
    %1394 = vdwg.mxu0
    %v1395 = vrcp.pop %v1392
    %1397 = vset.pattern.permute.xlu0 16
    %1398 = vperm.xlu0 %1397, %v1395
    %v1399 = vpop.permute.xlu0 %1398
    %v1401 = vmul.f32 %v1392, %v1399
    %1402 = vrot.lane.b32.xlu0 %v154, 16
    %v1403 = vpop.permute.xlu0 %1402
    %1404 = vrot.lane.b32.xlu0 %v156, 16
    %v1405 = vpop.permute.xlu0 %1404
    %v1406 = vsel %vm228, %v1403, 0
    %v1408 = vsel %vm228, %v1405, 0
    %1410 = vmatprep.subr.mxu0 0.0
    %1411 = vmatpush1.xpose.msra.mxu0 0.0
    %1412 = vmatprep.subr.mxu0 0.0
    %1413 = vmatpush1.xpose.msra.mxu0 0.0
    %1414 = vmatprep.subr.mxu0 0.0
    %1415 = vmatpush1.xpose.msra.mxu0 0.0
    %1416 = vmatprep.subr.mxu0 0.0
    %1417 = vmatpush1.xpose.msra.mxu0 0.0
    %1418 = vmatprep.subr.mxu0 0.0
    %1419 = vmatpush1.xpose.msra.mxu0 0.0
    %1420 = vmatprep.subr.mxu0 0.0
    %1421 = vmatpush1.xpose.msra.mxu0 0.0
    %1422 = vmatprep.subr.mxu0 0.0
    %1423 = vmatpush1.xpose.msra.mxu0 0.0
    %1424 = vmatprep.subr.mxu0 0.0
    %1425 = vmatpush1.xpose.msra.mxu0 0.0
    %1426 = vmatprep.subr.mxu0 0.0
    %1427 = vmatpush1.xpose.msra.mxu0 0.0
    %1428 = vmatprep.subr.mxu0 0.0
    %1429 = vmatpush1.xpose.msra.mxu0 0.0
    %1430 = vmatprep.subr.mxu0 0.0
    %1431 = vmatpush1.xpose.msra.mxu0 0.0
    %1432 = vmatprep.subr.mxu0 0.0
    %1433 = vmatpush1.xpose.msra.mxu0 0.0
    %1434 = vmatprep.subr.mxu0 0.0
    %1435 = vmatpush1.xpose.msra.mxu0 0.0
    %1436 = vmatprep.subr.mxu0 0.0
    %1437 = vmatpush1.xpose.msra.mxu0 0.0
    %1438 = vmatprep.subr.mxu0 0.0
    %1439 = vmatpush1.xpose.msra.mxu0 0.0
    %1440 = vmatprep.subr.mxu0 0.0
    %1441 = vmatpush1.xpose.msra.mxu0 %v1408
    %1442 = vmatprep.subr.mxu0 0.0
    %1443 = vmatpush2.xpose.msra.mxu0 0.0
    %1444 = vmatprep.subr.mxu0 0.0
    %1445 = vmatpush2.xpose.msra.mxu0 0.0
    %1446 = vmatprep.subr.mxu0 0.0
    %1447 = vmatpush2.xpose.msra.mxu0 0.0
    %1448 = vmatprep.subr.mxu0 0.0
    %1449 = vmatpush2.xpose.msra.mxu0 0.0
    %1450 = vmatprep.subr.mxu0 0.0
    %1451 = vmatpush2.xpose.msra.mxu0 0.0
    %1452 = vmatprep.subr.mxu0 0.0
    %1453 = vmatpush2.xpose.msra.mxu0 0.0
    %1454 = vmatprep.subr.mxu0 0.0
    %1455 = vmatpush2.xpose.msra.mxu0 0.0
    %1456 = vmatprep.subr.mxu0 0.0
    %1457 = vmatpush2.xpose.msra.mxu0 0.0
    %1458 = vmatprep.subr.mxu0 0.0
    %1459 = vmatpush2.xpose.msra.mxu0 0.0
    %1460 = vmatprep.subr.mxu0 0.0
    %1461 = vmatpush2.xpose.msra.mxu0 0.0
    %1462 = vmatprep.subr.mxu0 0.0
    %1463 = vmatpush2.xpose.msra.mxu0 0.0
    %1464 = vmatprep.subr.mxu0 0.0
    %1465 = vmatpush2.xpose.msra.mxu0 0.0
    %1466 = vmatprep.subr.mxu0 0.0
    %1467 = vmatpush2.xpose.msra.mxu0 0.0
    %1468 = vmatprep.subr.mxu0 0.0
    %1469 = vmatpush2.xpose.msra.mxu0 0.0
    %1470 = vmatprep.subr.mxu0 0.0
    %1471 = vmatpush2.xpose.msra.mxu0 0.0
    %1472 = vmatprep.subr.mxu0 0.0
    %1473 = vmatpush2.xpose.msra.mxu0 0.0
    %1474 = vmatprep.mubr.f32.mxu0 0.0
    %1475 = vmatmul.mubr.f32.gmra.mxu0 %v1406
    %v1476 = vpop.f32.mrf.mxu0
    %v1477 = vadd.f32 0.0, %v1476
    %v1478 = vpop.f32.mrf.mxu0
    %1479 = vdwg.mxu0
    %v1480 = vsel %vm305, %v1477, -inf
    %1481 = vmax.xlane.f32.xlu0 %v1480
    %v1482 = vpop.xlane.xlu0 %1481
    %v1483 = vsub.f32 %v1477, %v1482
    %v1484 = vmul.f32 %v1483, 1.442695
    %v1485 = vpow.pop %v1484
    %1486 = vrot.lane.b32.xlu0 %v225, 16
    %v1487 = vpop.permute.xlu0 %1486
    %v1489 = vsel %vm228, %v1487, 1.0
    %v1491 = vsel %vm305, %v1485, 0
    %1493 = vmatprep.subr.mxu0 0.0
    %1494 = vmatpush1.msra.mxu0 0.0
    %1495 = vmatprep.subr.mxu0 0.0
    %1496 = vmatpush1.msra.mxu0 0.0
    %1497 = vmatprep.subr.mxu0 0.0
    %1498 = vmatpush1.msra.mxu0 0.0
    %1499 = vmatprep.subr.mxu0 0.0
    %1500 = vmatpush1.msra.mxu0 0.0
    %1501 = vmatprep.subr.mxu0 0.0
    %1502 = vmatpush1.msra.mxu0 0.0
    %1503 = vmatprep.subr.mxu0 0.0
    %1504 = vmatpush1.msra.mxu0 0.0
    %1505 = vmatprep.subr.mxu0 0.0
    %1506 = vmatpush1.msra.mxu0 0.0
    %1507 = vmatprep.subr.mxu0 0.0
    %1508 = vmatpush1.msra.mxu0 0.0
    %1509 = vmatprep.subr.mxu0 0.0
    %1510 = vmatpush1.msra.mxu0 0.0
    %1511 = vmatprep.subr.mxu0 0.0
    %1512 = vmatpush1.msra.mxu0 0.0
    %1513 = vmatprep.subr.mxu0 0.0
    %1514 = vmatpush1.msra.mxu0 0.0
    %1515 = vmatprep.subr.mxu0 0.0
    %1516 = vmatpush1.msra.mxu0 0.0
    %1517 = vmatprep.subr.mxu0 0.0
    %1518 = vmatpush1.msra.mxu0 0.0
    %1519 = vmatprep.subr.mxu0 0.0
    %1520 = vmatpush1.msra.mxu0 0.0
    %1521 = vmatprep.subr.mxu0 0.0
    %1522 = vmatpush1.msra.mxu0 0.0
    %1523 = vmatprep.subr.mxu0 0.0
    %1524 = vmatpush1.msra.mxu0 %v1489
    %1525 = vmatprep.subr.mxu0 0.0
    %1526 = vmatpush2.msra.mxu0 0.0
    %1527 = vmatprep.subr.mxu0 0.0
    %1528 = vmatpush2.msra.mxu0 0.0
    %1529 = vmatprep.subr.mxu0 0.0
    %1530 = vmatpush2.msra.mxu0 0.0
    %1531 = vmatprep.subr.mxu0 0.0
    %1532 = vmatpush2.msra.mxu0 0.0
    %1533 = vmatprep.subr.mxu0 0.0
    %1534 = vmatpush2.msra.mxu0 0.0
    %1535 = vmatprep.subr.mxu0 0.0
    %1536 = vmatpush2.msra.mxu0 0.0
    %1537 = vmatprep.subr.mxu0 0.0
    %1538 = vmatpush2.msra.mxu0 0.0
    %1539 = vmatprep.subr.mxu0 0.0
    %1540 = vmatpush2.msra.mxu0 0.0
    %1541 = vmatprep.subr.mxu0 0.0
    %1542 = vmatpush2.msra.mxu0 0.0
    %1543 = vmatprep.subr.mxu0 0.0
    %1544 = vmatpush2.msra.mxu0 0.0
    %1545 = vmatprep.subr.mxu0 0.0
    %1546 = vmatpush2.msra.mxu0 0.0
    %1547 = vmatprep.subr.mxu0 0.0
    %1548 = vmatpush2.msra.mxu0 0.0
    %1549 = vmatprep.subr.mxu0 0.0
    %1550 = vmatpush2.msra.mxu0 0.0
    %1551 = vmatprep.subr.mxu0 0.0
    %1552 = vmatpush2.msra.mxu0 0.0
    %1553 = vmatprep.subr.mxu0 0.0
    %1554 = vmatpush2.msra.mxu0 0.0
    %1555 = vmatprep.subr.mxu0 0.0
    %1556 = vmatpush2.msra.mxu0 0.0
    %1557 = vmatprep.mubr.f32.mxu0 0.0
    %1558 = vmatmul.mubr.f32.gmra.mxu0 %v1491
    %v1559 = vpop.f32.mrf.mxu0
    %v1560 = vadd.f32 0.0, %v1559
    %v1561 = vpop.f32.mrf.mxu0
    %1562 = vdwg.mxu0
    %v1563 = vrcp.pop %v1560
    %1565 = vset.pattern.permute.xlu0 16
    %1566 = vperm.xlu0 %1565, %v1563
    %v1567 = vpop.permute.xlu0 %1566
    %v1569 = vmul.f32 %v1560, %v1567
    %1571 = vrot.lane.b32.xlu0 %v561, 16
    %v1572 = vpop.permute.xlu0 %1571
    %1575 = vrot.lane.b32.xlu0 %v729, 32
    %v1576 = vpop.permute.xlu0 %1575
    %1579 = vrot.lane.b32.xlu0 %v897, 48
    %v1580 = vpop.permute.xlu0 %1579
    %1583 = vrot.lane.b32.xlu0 %v1065, 64
    %v1584 = vpop.permute.xlu0 %1583
    %1587 = vrot.lane.b32.xlu0 %v1233, 80
    %v1588 = vpop.permute.xlu0 %1587
    %1591 = vrot.lane.b32.xlu0 %v1401, 96
    %v1592 = vpop.permute.xlu0 %1591
    %1595 = vrot.lane.b32.xlu0 %v1569, 112
    %v1596 = vpop.permute.xlu0 %1595
    %v1598 = vsel %vm228, %v392, %v1572
    %vm1599 = vcmask 261120
    %v1600 = vsel %vm1599, %v1598, %v1576
    %vm1601 = vcmask 392192
    %v1602 = vsel %vm1601, %v1600, %v1580
    %vm1603 = vcmask 523264
    %v1604 = vsel %vm1603, %v1602, %v1584
    %vm1605 = vcmask 654336
    %v1606 = vsel %vm1605, %v1604, %v1588
    %vm1607 = vcmask 785408
    %v1608 = vsel %vm1607, %v1606, %v1592
    %vm1609 = vcmask 916480
    %v1610 = vsel %vm1609, %v1608, %v1596
    %v1611 = vld [vmem:[%s2 + $0x18] sm:$0xff]
    %v1612 = vld [vmem:[%s2 + $0x38] sm:$0xff]
    %v1613 = vld [vmem:[%s2 + $0x58] sm:$0xff]
    %v1614 = vld [vmem:[%s2 + $0x78] sm:$0xff]
    %v1615 = vld [vmem:[%s2 + $0x98] sm:$0xff]
    %v1616 = vld [vmem:[%s2 + $0xb8] sm:$0xff]
    %v1617 = vld [vmem:[%s2 + $0xd8] sm:$0xff]
    %v1618 = vld [vmem:[%s2 + $0xf8] sm:$0xff]
    %v1619 = vld [vmem:[%s2 + $0x118] sm:$0xff]
    %v1620 = vld [vmem:[%s2 + $0x138] sm:$0xff]
    %v1621 = vld [vmem:[%s2 + $0x158] sm:$0xff]
    %v1622 = vld [vmem:[%s2 + $0x178] sm:$0xff]
    %v1623 = vld [vmem:[%s2 + $0x198] sm:$0xff]
    %v1624 = vld [vmem:[%s2 + $0x1b8] sm:$0xff]
    %v1625 = vld [vmem:[%s2 + $0x1d8] sm:$0xff]
    %v1626 = vld [vmem:[%s2 + $0x1f8] sm:$0xff]
    %v1627 = vld [vmem:[%s2 + $0x218] ss:$0 sm:$0xff]
    %1628 = vmatprep.subr.mxu0 0.0
    %1629 = vmatpush1.msra.mxu0 %v1626
    %1630 = vmatprep.subr.mxu0 0.0
    %1631 = vmatpush1.msra.mxu0 %v1625
    %1632 = vmatprep.subr.mxu0 0.0
    %1633 = vmatpush1.msra.mxu0 %v1624
    %1634 = vmatprep.subr.mxu0 0.0
    %1635 = vmatpush1.msra.mxu0 %v1623
    %1636 = vmatprep.subr.mxu0 0.0
    %1637 = vmatpush1.msra.mxu0 %v1622
    %1638 = vmatprep.subr.mxu0 0.0
    %1639 = vmatpush1.msra.mxu0 %v1621
    %1640 = vmatprep.subr.mxu0 0.0
    %1641 = vmatpush1.msra.mxu0 %v1620
    %1642 = vmatprep.subr.mxu0 0.0
    %1643 = vmatpush1.msra.mxu0 %v1619
    %1644 = vmatprep.subr.mxu0 0.0
    %1645 = vmatpush1.msra.mxu0 %v1618
    %1646 = vmatprep.subr.mxu0 0.0
    %1647 = vmatpush1.msra.mxu0 %v1617
    %1648 = vmatprep.subr.mxu0 0.0
    %1649 = vmatpush1.msra.mxu0 %v1616
    %1650 = vmatprep.subr.mxu0 0.0
    %1651 = vmatpush1.msra.mxu0 %v1615
    %1652 = vmatprep.subr.mxu0 0.0
    %1653 = vmatpush1.msra.mxu0 %v1614
    %1654 = vmatprep.subr.mxu0 0.0
    %1655 = vmatpush1.msra.mxu0 %v1613
    %1656 = vmatprep.subr.mxu0 0.0
    %1657 = vmatpush1.msra.mxu0 %v1612
    %1658 = vmatprep.subr.mxu0 0.0
    %1659 = vmatpush1.msra.mxu0 %v1611
    %1660 = vmatprep.subr.mxu0 0.0
    %1661 = vmatpush2.msra.mxu0 0.0
    %1662 = vmatprep.subr.mxu0 0.0
    %1663 = vmatpush2.msra.mxu0 0.0
    %1664 = vmatprep.subr.mxu0 0.0
    %1665 = vmatpush2.msra.mxu0 0.0
    %1666 = vmatprep.subr.mxu0 0.0
    %1667 = vmatpush2.msra.mxu0 0.0
    %1668 = vmatprep.subr.mxu0 0.0
    %1669 = vmatpush2.msra.mxu0 0.0
    %1670 = vmatprep.subr.mxu0 0.0
    %1671 = vmatpush2.msra.mxu0 0.0
    %1672 = vmatprep.subr.mxu0 0.0
    %1673 = vmatpush2.msra.mxu0 0.0
    %1674 = vmatprep.subr.mxu0 0.0
    %1675 = vmatpush2.msra.mxu0 0.0
    %1676 = vmatprep.subr.mxu0 0.0
    %1677 = vmatpush2.msra.mxu0 0.0
    %1678 = vmatprep.subr.mxu0 0.0
    %1679 = vmatpush2.msra.mxu0 0.0
    %1680 = vmatprep.subr.mxu0 0.0
    %1681 = vmatpush2.msra.mxu0 0.0
    %1682 = vmatprep.subr.mxu0 0.0
    %1683 = vmatpush2.msra.mxu0 0.0
    %1684 = vmatprep.subr.mxu0 0.0
    %1685 = vmatpush2.msra.mxu0 0.0
    %1686 = vmatprep.subr.mxu0 0.0
    %1687 = vmatpush2.msra.mxu0 0.0
    %1688 = vmatprep.subr.mxu0 0.0
    %1689 = vmatpush2.msra.mxu0 0.0
    %1690 = vmatprep.subr.mxu0 0.0
    %1691 = vmatpush2.msra.mxu0 0.0
    %1692 = vmatprep.mubr.f32.mxu0 0.0
    %1693 = vmatmul.mubr.f32.gmra.mxu0 %v1610
    %v1694 = vpop.f32.mrf.mxu0
    %v1695 = vadd.f32 %v1627, %v1694
    %v1696 = vpop.f32.mrf.mxu0
    %1697 = vdwg.mxu0
    %1698 = vst [vmem:[%s4] sm:$0xff] %v1695
    %v1699 = vld [vmem:[%s1] sm:$0xff]
    %v1700 = vld [vmem:[%s1 + $0x8] sm:$0xff]
    %v1701 = vld [vmem:[%s3] sm:$0xff]
    %v1702 = vld [vmem:[%s3 + $0x8] sm:$0xff]
    %v1703 = vld [vmem:[%s3 + $0x10] sm:$0xff]
    %v1704 = vld [vmem:[%s3 + $0x18] sm:$0xff]
    %v1705 = vld [vmem:[%s3 + $0x20] sm:$0xff]
    %v1706 = vld [vmem:[%s3 + $0x28] sm:$0xff]
    %v1707 = vld [vmem:[%s3 + $0x30] sm:$0xff]
    %v1708 = vld [vmem:[%s3 + $0x38] sm:$0xff]
    %v1709 = vld [vmem:[%s3 + $0x40] sm:$0xff]
    %v1710 = vld [vmem:[%s3 + $0x48] sm:$0xff]
    %s1711 = scalar_lea.vmem %s3, 80
    %v1712 = vld [vmem:[%s1711] ss:$8 sm:$0x3]
    %v1714 = vlaneseq
    %v1715 = vshrl.u32 %v1714, 7
    %v1716 = vsub.s32 0, %v1715
    %v1717 = vrot.slane %v1712, %v1716
    %v1718 = vlaneseq
    %v1719 = vshrl.u32 %v1718, 7
    %v1720 = vsub.s32 1, %v1719
    %v1721 = vrot.slane %v1712, %v1720
    %vm1724 = vcmask 326656
    %v1726 = vsel %vm1724, %v1699, 0
    %v1729 = vsel %vm1724, %v1700, 0
    %1731 = vmatprep.subr.mxu0 0.0
    %1732 = vmatpush1.msra.mxu0 0.0
    %1733 = vmatprep.subr.mxu0 0.0
    %1734 = vmatpush1.msra.mxu0 0.0
    %1735 = vmatprep.subr.mxu0 0.0
    %1736 = vmatpush1.msra.mxu0 0.0
    %1737 = vmatprep.subr.mxu0 0.0
    %1738 = vmatpush1.msra.mxu0 0.0
    %1739 = vmatprep.subr.mxu0 0.0
    %1740 = vmatpush1.msra.mxu0 0.0
    %1741 = vmatprep.subr.mxu0 0.0
    %1742 = vmatpush1.msra.mxu0 0.0
    %1743 = vmatprep.subr.mxu0 0.0
    %1744 = vmatpush1.msra.mxu0 0.0
    %1745 = vmatprep.subr.mxu0 0.0
    %1746 = vmatpush1.msra.mxu0 0.0
    %1747 = vmatprep.subr.mxu0 0.0
    %1748 = vmatpush1.msra.mxu0 0.0
    %1749 = vmatprep.subr.mxu0 0.0
    %1750 = vmatpush1.msra.mxu0 0.0
    %1751 = vmatprep.subr.mxu0 0.0
    %1752 = vmatpush1.msra.mxu0 0.0
    %1753 = vmatprep.subr.mxu0 %v1710
    %1754 = vmatpush1.msra.mxu0 %v1709
    %1755 = vmatprep.subr.mxu0 %v1708
    %1756 = vmatpush1.msra.mxu0 %v1707
    %1757 = vmatprep.subr.mxu0 %v1706
    %1758 = vmatpush1.msra.mxu0 %v1705
    %1759 = vmatprep.subr.mxu0 %v1704
    %1760 = vmatpush1.msra.mxu0 %v1703
    %1761 = vmatprep.subr.mxu0 %v1702
    %1762 = vmatpush1.msra.mxu0 %v1701
    %1763 = vmatprep.subr.mxu0 0.0
    %1764 = vmatpush2.msra.mxu0 0.0
    %1765 = vmatprep.subr.mxu0 0.0
    %1766 = vmatpush2.msra.mxu0 0.0
    %1767 = vmatprep.subr.mxu0 0.0
    %1768 = vmatpush2.msra.mxu0 0.0
    %1769 = vmatprep.subr.mxu0 0.0
    %1770 = vmatpush2.msra.mxu0 0.0
    %1771 = vmatprep.subr.mxu0 0.0
    %1772 = vmatpush2.msra.mxu0 0.0
    %1773 = vmatprep.subr.mxu0 0.0
    %1774 = vmatpush2.msra.mxu0 0.0
    %1775 = vmatprep.subr.mxu0 0.0
    %1776 = vmatpush2.msra.mxu0 0.0
    %1777 = vmatprep.subr.mxu0 0.0
    %1778 = vmatpush2.msra.mxu0 0.0
    %1779 = vmatprep.subr.mxu0 0.0
    %1780 = vmatpush2.msra.mxu0 0.0
    %1781 = vmatprep.subr.mxu0 0.0
    %1782 = vmatpush2.msra.mxu0 0.0
    %1783 = vmatprep.subr.mxu0 0.0
    %1784 = vmatpush2.msra.mxu0 0.0
    %1785 = vmatprep.subr.mxu0 0.0
    %1786 = vmatpush2.msra.mxu0 0.0
    %1787 = vmatprep.subr.mxu0 0.0
    %1788 = vmatpush2.msra.mxu0 0.0
    %1789 = vmatprep.subr.mxu0 0.0
    %1790 = vmatpush2.msra.mxu0 0.0
    %1791 = vmatprep.subr.mxu0 0.0
    %1792 = vmatpush2.msra.mxu0 0.0
    %1793 = vmatprep.subr.mxu0 0.0
    %1794 = vmatpush2.msra.mxu0 0.0
    %1795 = vmatprep.mubr.f32.mxu0 0.0
    %1796 = vmatmul.mubr.f32.gmra.mxu0 %v1726
    %v1797 = vpop.f32.mrf.mxu0
    %v1798 = vadd.f32 %v1717, %v1797
    %v1799 = vpop.f32.mrf.mxu0
    %v1800 = vadd.f32 %v1721, %v1799
    %1801 = vmatprep.mubr.f32.mxu0 0.0
    %1802 = vmatmul.mubr.f32.gmra.mxu0 %v1729
    %v1803 = vpop.f32.mrf.mxu0
    %v1804 = vadd.f32 %v1717, %v1803
    %v1805 = vpop.f32.mrf.mxu0
    %v1806 = vadd.f32 %v1721, %v1805
    %1807 = vdwg.mxu0
    %1809 = vrot.lane.b32.xlu0 %v1798, 64
    %v1810 = vpop.permute.xlu0 %1809
    %v1811 = vsel %vm228, %v1798, 0
    %v1813 = vsel %vm228, %v1810, 0
    %1815 = vmatprep.subr.mxu0 0.0
    %1816 = vmatpush1.xpose.msra.mxu0 0.0
    %1817 = vmatprep.subr.mxu0 0.0
    %1818 = vmatpush1.xpose.msra.mxu0 0.0
    %1819 = vmatprep.subr.mxu0 0.0
    %1820 = vmatpush1.xpose.msra.mxu0 0.0
    %1821 = vmatprep.subr.mxu0 0.0
    %1822 = vmatpush1.xpose.msra.mxu0 0.0
    %1823 = vmatprep.subr.mxu0 0.0
    %1824 = vmatpush1.xpose.msra.mxu0 0.0
    %1825 = vmatprep.subr.mxu0 0.0
    %1826 = vmatpush1.xpose.msra.mxu0 0.0
    %1827 = vmatprep.subr.mxu0 0.0
    %1828 = vmatpush1.xpose.msra.mxu0 0.0
    %1829 = vmatprep.subr.mxu0 0.0
    %1830 = vmatpush1.xpose.msra.mxu0 0.0
    %1831 = vmatprep.subr.mxu0 0.0
    %1832 = vmatpush1.xpose.msra.mxu0 0.0
    %1833 = vmatprep.subr.mxu0 0.0
    %1834 = vmatpush1.xpose.msra.mxu0 0.0
    %1835 = vmatprep.subr.mxu0 0.0
    %1836 = vmatpush1.xpose.msra.mxu0 0.0
    %1837 = vmatprep.subr.mxu0 0.0
    %1838 = vmatpush1.xpose.msra.mxu0 0.0
    %1839 = vmatprep.subr.mxu0 0.0
    %1840 = vmatpush1.xpose.msra.mxu0 0.0
    %1841 = vmatprep.subr.mxu0 0.0
    %1842 = vmatpush1.xpose.msra.mxu0 0.0
    %1843 = vmatprep.subr.mxu0 0.0
    %1844 = vmatpush1.xpose.msra.mxu0 0.0
    %1845 = vmatprep.subr.mxu0 0.0
    %1846 = vmatpush1.xpose.msra.mxu0 %v1813
    %1847 = vmatprep.subr.mxu0 0.0
    %1848 = vmatpush2.xpose.msra.mxu0 0.0
    %1849 = vmatprep.subr.mxu0 0.0
    %1850 = vmatpush2.xpose.msra.mxu0 0.0
    %1851 = vmatprep.subr.mxu0 0.0
    %1852 = vmatpush2.xpose.msra.mxu0 0.0
    %1853 = vmatprep.subr.mxu0 0.0
    %1854 = vmatpush2.xpose.msra.mxu0 0.0
    %1855 = vmatprep.subr.mxu0 0.0
    %1856 = vmatpush2.xpose.msra.mxu0 0.0
    %1857 = vmatprep.subr.mxu0 0.0
    %1858 = vmatpush2.xpose.msra.mxu0 0.0
    %1859 = vmatprep.subr.mxu0 0.0
    %1860 = vmatpush2.xpose.msra.mxu0 0.0
    %1861 = vmatprep.subr.mxu0 0.0
    %1862 = vmatpush2.xpose.msra.mxu0 0.0
    %1863 = vmatprep.subr.mxu0 0.0
    %1864 = vmatpush2.xpose.msra.mxu0 0.0
    %1865 = vmatprep.subr.mxu0 0.0
    %1866 = vmatpush2.xpose.msra.mxu0 0.0
    %1867 = vmatprep.subr.mxu0 0.0
    %1868 = vmatpush2.xpose.msra.mxu0 0.0
    %1869 = vmatprep.subr.mxu0 0.0
    %1870 = vmatpush2.xpose.msra.mxu0 0.0
    %1871 = vmatprep.subr.mxu0 0.0
    %1872 = vmatpush2.xpose.msra.mxu0 0.0
    %1873 = vmatprep.subr.mxu0 0.0
    %1874 = vmatpush2.xpose.msra.mxu0 0.0
    %1875 = vmatprep.subr.mxu0 0.0
    %1876 = vmatpush2.xpose.msra.mxu0 0.0
    %1877 = vmatprep.subr.mxu0 0.0
    %1878 = vmatpush2.xpose.msra.mxu0 0.0
    %1879 = vmatprep.mubr.f32.mxu0 0.0
    %1880 = vmatmul.mubr.f32.gmra.mxu0 %v1811
    %v1881 = vpop.f32.mrf.mxu0
    %v1882 = vadd.f32 0.0, %v1881
    %v1883 = vpop.f32.mrf.mxu0
    %1884 = vdwg.mxu0
    %v1885 = vsel %vm305, %v1882, -inf
    %1886 = vmax.xlane.f32.xlu0 %v1885
    %v1887 = vpop.xlane.xlu0 %1886
    %v1888 = vsub.f32 %v1882, %v1887
    %v1889 = vmul.f32 %v1888, 1.442695
    %v1890 = vpow.pop %v1889
    %v1892 = vsel %vm305, %v1890, 0
    %1894 = vmatprep.subr.mxu0 0.0
    %1895 = vmatpush1.msra.mxu0 0.0
    %1896 = vmatprep.subr.mxu0 0.0
    %1897 = vmatpush1.msra.mxu0 0.0
    %1898 = vmatprep.subr.mxu0 0.0
    %1899 = vmatpush1.msra.mxu0 0.0
    %1900 = vmatprep.subr.mxu0 0.0
    %1901 = vmatpush1.msra.mxu0 0.0
    %1902 = vmatprep.subr.mxu0 0.0
    %1903 = vmatpush1.msra.mxu0 0.0
    %1904 = vmatprep.subr.mxu0 0.0
    %1905 = vmatpush1.msra.mxu0 0.0
    %1906 = vmatprep.subr.mxu0 0.0
    %1907 = vmatpush1.msra.mxu0 0.0
    %1908 = vmatprep.subr.mxu0 0.0
    %1909 = vmatpush1.msra.mxu0 0.0
    %1910 = vmatprep.subr.mxu0 0.0
    %1911 = vmatpush1.msra.mxu0 0.0
    %1912 = vmatprep.subr.mxu0 0.0
    %1913 = vmatpush1.msra.mxu0 0.0
    %1914 = vmatprep.subr.mxu0 0.0
    %1915 = vmatpush1.msra.mxu0 0.0
    %1916 = vmatprep.subr.mxu0 0.0
    %1917 = vmatpush1.msra.mxu0 0.0
    %1918 = vmatprep.subr.mxu0 0.0
    %1919 = vmatpush1.msra.mxu0 0.0
    %1920 = vmatprep.subr.mxu0 0.0
    %1921 = vmatpush1.msra.mxu0 0.0
    %1922 = vmatprep.subr.mxu0 0.0
    %1923 = vmatpush1.msra.mxu0 0.0
    %1924 = vmatprep.subr.mxu0 0.0
    %1925 = vmatpush1.msra.mxu0 %v1800
    %1926 = vmatprep.subr.mxu0 0.0
    %1927 = vmatpush2.msra.mxu0 0.0
    %1928 = vmatprep.subr.mxu0 0.0
    %1929 = vmatpush2.msra.mxu0 0.0
    %1930 = vmatprep.subr.mxu0 0.0
    %1931 = vmatpush2.msra.mxu0 0.0
    %1932 = vmatprep.subr.mxu0 0.0
    %1933 = vmatpush2.msra.mxu0 0.0
    %1934 = vmatprep.subr.mxu0 0.0
    %1935 = vmatpush2.msra.mxu0 0.0
    %1936 = vmatprep.subr.mxu0 0.0
    %1937 = vmatpush2.msra.mxu0 0.0
    %1938 = vmatprep.subr.mxu0 0.0
    %1939 = vmatpush2.msra.mxu0 0.0
    %1940 = vmatprep.subr.mxu0 0.0
    %1941 = vmatpush2.msra.mxu0 0.0
    %1942 = vmatprep.subr.mxu0 0.0
    %1943 = vmatpush2.msra.mxu0 0.0
    %1944 = vmatprep.subr.mxu0 0.0
    %1945 = vmatpush2.msra.mxu0 0.0
    %1946 = vmatprep.subr.mxu0 0.0
    %1947 = vmatpush2.msra.mxu0 0.0
    %1948 = vmatprep.subr.mxu0 0.0
    %1949 = vmatpush2.msra.mxu0 0.0
    %1950 = vmatprep.subr.mxu0 0.0
    %1951 = vmatpush2.msra.mxu0 0.0
    %1952 = vmatprep.subr.mxu0 0.0
    %1953 = vmatpush2.msra.mxu0 0.0
    %1954 = vmatprep.subr.mxu0 0.0
    %1955 = vmatpush2.msra.mxu0 0.0
    %1956 = vmatprep.subr.mxu0 0.0
    %1957 = vmatpush2.msra.mxu0 0.0
    %1958 = vmatprep.mubr.f32.mxu0 0.0
    %1959 = vmatmul.mubr.f32.gmra.mxu0 %v1892
    %v1960 = vpop.f32.mrf.mxu0
    %v1961 = vadd.f32 0.0, %v1960
    %v1962 = vpop.f32.mrf.mxu0
    %1963 = vdwg.mxu0
    %v1964 = vrcp.pop %v1961
    %1966 = vset.pattern.permute.xlu0 10
    %1967 = vperm.xlu0 %1966, %v1964
    %v1968 = vpop.permute.xlu0 %1967
    %v1970 = vmul.f32 %v1961, %v1968
    %1971 = vrot.lane.b32.xlu0 %v1798, 112
    %v1972 = vpop.permute.xlu0 %1971
    %1973 = vrot.lane.b32.xlu0 %v1798, 48
    %v1974 = vpop.permute.xlu0 %1973
    %v1975 = vsel %vm228, %v1972, 0
    %v1977 = vsel %vm228, %v1974, 0
    %1979 = vmatprep.subr.mxu0 0.0
    %1980 = vmatpush1.xpose.msra.mxu0 0.0
    %1981 = vmatprep.subr.mxu0 0.0
    %1982 = vmatpush1.xpose.msra.mxu0 0.0
    %1983 = vmatprep.subr.mxu0 0.0
    %1984 = vmatpush1.xpose.msra.mxu0 0.0
    %1985 = vmatprep.subr.mxu0 0.0
    %1986 = vmatpush1.xpose.msra.mxu0 0.0
    %1987 = vmatprep.subr.mxu0 0.0
    %1988 = vmatpush1.xpose.msra.mxu0 0.0
    %1989 = vmatprep.subr.mxu0 0.0
    %1990 = vmatpush1.xpose.msra.mxu0 0.0
    %1991 = vmatprep.subr.mxu0 0.0
    %1992 = vmatpush1.xpose.msra.mxu0 0.0
    %1993 = vmatprep.subr.mxu0 0.0
    %1994 = vmatpush1.xpose.msra.mxu0 0.0
    %1995 = vmatprep.subr.mxu0 0.0
    %1996 = vmatpush1.xpose.msra.mxu0 0.0
    %1997 = vmatprep.subr.mxu0 0.0
    %1998 = vmatpush1.xpose.msra.mxu0 0.0
    %1999 = vmatprep.subr.mxu0 0.0
    %2000 = vmatpush1.xpose.msra.mxu0 0.0
    %2001 = vmatprep.subr.mxu0 0.0
    %2002 = vmatpush1.xpose.msra.mxu0 0.0
    %2003 = vmatprep.subr.mxu0 0.0
    %2004 = vmatpush1.xpose.msra.mxu0 0.0
    %2005 = vmatprep.subr.mxu0 0.0
    %2006 = vmatpush1.xpose.msra.mxu0 0.0
    %2007 = vmatprep.subr.mxu0 0.0
    %2008 = vmatpush1.xpose.msra.mxu0 0.0
    %2009 = vmatprep.subr.mxu0 0.0
    %2010 = vmatpush1.xpose.msra.mxu0 %v1977
    %2011 = vmatprep.subr.mxu0 0.0
    %2012 = vmatpush2.xpose.msra.mxu0 0.0
    %2013 = vmatprep.subr.mxu0 0.0
    %2014 = vmatpush2.xpose.msra.mxu0 0.0
    %2015 = vmatprep.subr.mxu0 0.0
    %2016 = vmatpush2.xpose.msra.mxu0 0.0
    %2017 = vmatprep.subr.mxu0 0.0
    %2018 = vmatpush2.xpose.msra.mxu0 0.0
    %2019 = vmatprep.subr.mxu0 0.0
    %2020 = vmatpush2.xpose.msra.mxu0 0.0
    %2021 = vmatprep.subr.mxu0 0.0
    %2022 = vmatpush2.xpose.msra.mxu0 0.0
    %2023 = vmatprep.subr.mxu0 0.0
    %2024 = vmatpush2.xpose.msra.mxu0 0.0
    %2025 = vmatprep.subr.mxu0 0.0
    %2026 = vmatpush2.xpose.msra.mxu0 0.0
    %2027 = vmatprep.subr.mxu0 0.0
    %2028 = vmatpush2.xpose.msra.mxu0 0.0
    %2029 = vmatprep.subr.mxu0 0.0
    %2030 = vmatpush2.xpose.msra.mxu0 0.0
    %2031 = vmatprep.subr.mxu0 0.0
    %2032 = vmatpush2.xpose.msra.mxu0 0.0
    %2033 = vmatprep.subr.mxu0 0.0
    %2034 = vmatpush2.xpose.msra.mxu0 0.0
    %2035 = vmatprep.subr.mxu0 0.0
    %2036 = vmatpush2.xpose.msra.mxu0 0.0
    %2037 = vmatprep.subr.mxu0 0.0
    %2038 = vmatpush2.xpose.msra.mxu0 0.0
    %2039 = vmatprep.subr.mxu0 0.0
    %2040 = vmatpush2.xpose.msra.mxu0 0.0
    %2041 = vmatprep.subr.mxu0 0.0
    %2042 = vmatpush2.xpose.msra.mxu0 0.0
    %2043 = vmatprep.mubr.f32.mxu0 0.0
    %2044 = vmatmul.mubr.f32.gmra.mxu0 %v1975
    %v2045 = vpop.f32.mrf.mxu0
    %v2046 = vadd.f32 0.0, %v2045
    %v2047 = vpop.f32.mrf.mxu0
    %2048 = vdwg.mxu0
    %v2049 = vsel %vm305, %v2046, -inf
    %2050 = vmax.xlane.f32.xlu0 %v2049
    %v2051 = vpop.xlane.xlu0 %2050
    %v2052 = vsub.f32 %v2046, %v2051
    %v2053 = vmul.f32 %v2052, 1.442695
    %v2054 = vpow.pop %v2053
    %2056 = vrot.lane.b32.xlu0 %v1800, 112
    %v2057 = vpop.permute.xlu0 %2056
    %v2060 = vsel %vm305, %v2054, 0
    %2062 = vmatprep.subr.mxu0 0.0
    %2063 = vmatpush1.msra.mxu0 0.0
    %2064 = vmatprep.subr.mxu0 0.0
    %2065 = vmatpush1.msra.mxu0 0.0
    %2066 = vmatprep.subr.mxu0 0.0
    %2067 = vmatpush1.msra.mxu0 0.0
    %2068 = vmatprep.subr.mxu0 0.0
    %2069 = vmatpush1.msra.mxu0 0.0
    %2070 = vmatprep.subr.mxu0 0.0
    %2071 = vmatpush1.msra.mxu0 0.0
    %2072 = vmatprep.subr.mxu0 0.0
    %2073 = vmatpush1.msra.mxu0 0.0
    %2074 = vmatprep.subr.mxu0 0.0
    %2075 = vmatpush1.msra.mxu0 0.0
    %2076 = vmatprep.subr.mxu0 0.0
    %2077 = vmatpush1.msra.mxu0 0.0
    %2078 = vmatprep.subr.mxu0 0.0
    %2079 = vmatpush1.msra.mxu0 0.0
    %2080 = vmatprep.subr.mxu0 0.0
    %2081 = vmatpush1.msra.mxu0 0.0
    %2082 = vmatprep.subr.mxu0 0.0
    %2083 = vmatpush1.msra.mxu0 0.0
    %2084 = vmatprep.subr.mxu0 0.0
    %2085 = vmatpush1.msra.mxu0 0.0
    %2086 = vmatprep.subr.mxu0 0.0
    %2087 = vmatpush1.msra.mxu0 0.0
    %2088 = vmatprep.subr.mxu0 0.0
    %2089 = vmatpush1.msra.mxu0 0.0
    %2090 = vmatprep.subr.mxu0 0.0
    %2091 = vmatpush1.msra.mxu0 0.0
    %2092 = vmatprep.subr.mxu0 0.0
    %2093 = vmatpush1.msra.mxu0 %v2057
    %2094 = vmatprep.subr.mxu0 0.0
    %2095 = vmatpush2.msra.mxu0 0.0
    %2096 = vmatprep.subr.mxu0 0.0
    %2097 = vmatpush2.msra.mxu0 0.0
    %2098 = vmatprep.subr.mxu0 0.0
    %2099 = vmatpush2.msra.mxu0 0.0
    %2100 = vmatprep.subr.mxu0 0.0
    %2101 = vmatpush2.msra.mxu0 0.0
    %2102 = vmatprep.subr.mxu0 0.0
    %2103 = vmatpush2.msra.mxu0 0.0
    %2104 = vmatprep.subr.mxu0 0.0
    %2105 = vmatpush2.msra.mxu0 0.0
    %2106 = vmatprep.subr.mxu0 0.0
    %2107 = vmatpush2.msra.mxu0 0.0
    %2108 = vmatprep.subr.mxu0 0.0
    %2109 = vmatpush2.msra.mxu0 0.0
    %2110 = vmatprep.subr.mxu0 0.0
    %2111 = vmatpush2.msra.mxu0 0.0
    %2112 = vmatprep.subr.mxu0 0.0
    %2113 = vmatpush2.msra.mxu0 0.0
    %2114 = vmatprep.subr.mxu0 0.0
    %2115 = vmatpush2.msra.mxu0 0.0
    %2116 = vmatprep.subr.mxu0 0.0
    %2117 = vmatpush2.msra.mxu0 0.0
    %2118 = vmatprep.subr.mxu0 0.0
    %2119 = vmatpush2.msra.mxu0 0.0
    %2120 = vmatprep.subr.mxu0 0.0
    %2121 = vmatpush2.msra.mxu0 0.0
    %2122 = vmatprep.subr.mxu0 0.0
    %2123 = vmatpush2.msra.mxu0 0.0
    %2124 = vmatprep.subr.mxu0 0.0
    %2125 = vmatpush2.msra.mxu0 0.0
    %2126 = vmatprep.mubr.f32.mxu0 0.0
    %2127 = vmatmul.mubr.f32.gmra.mxu0 %v2060
    %v2128 = vpop.f32.mrf.mxu0
    %v2129 = vadd.f32 0.0, %v2128
    %v2130 = vpop.f32.mrf.mxu0
    %2131 = vdwg.mxu0
    %v2132 = vrcp.pop %v2129
    %2134 = vset.pattern.permute.xlu0 10
    %2135 = vperm.xlu0 %2134, %v2132
    %v2136 = vpop.permute.xlu0 %2135
    %v2138 = vmul.f32 %v2129, %v2136
    %2139 = vrot.lane.b32.xlu0 %v1798, 96
    %v2140 = vpop.permute.xlu0 %2139
    %2141 = vrot.lane.b32.xlu0 %v1798, 32
    %v2142 = vpop.permute.xlu0 %2141
    %v2143 = vsel %vm228, %v2140, 0
    %v2145 = vsel %vm228, %v2142, 0
    %2147 = vmatprep.subr.mxu0 0.0
    %2148 = vmatpush1.xpose.msra.mxu0 0.0
    %2149 = vmatprep.subr.mxu0 0.0
    %2150 = vmatpush1.xpose.msra.mxu0 0.0
    %2151 = vmatprep.subr.mxu0 0.0
    %2152 = vmatpush1.xpose.msra.mxu0 0.0
    %2153 = vmatprep.subr.mxu0 0.0
    %2154 = vmatpush1.xpose.msra.mxu0 0.0
    %2155 = vmatprep.subr.mxu0 0.0
    %2156 = vmatpush1.xpose.msra.mxu0 0.0
    %2157 = vmatprep.subr.mxu0 0.0
    %2158 = vmatpush1.xpose.msra.mxu0 0.0
    %2159 = vmatprep.subr.mxu0 0.0
    %2160 = vmatpush1.xpose.msra.mxu0 0.0
    %2161 = vmatprep.subr.mxu0 0.0
    %2162 = vmatpush1.xpose.msra.mxu0 0.0
    %2163 = vmatprep.subr.mxu0 0.0
    %2164 = vmatpush1.xpose.msra.mxu0 0.0
    %2165 = vmatprep.subr.mxu0 0.0
    %2166 = vmatpush1.xpose.msra.mxu0 0.0
    %2167 = vmatprep.subr.mxu0 0.0
    %2168 = vmatpush1.xpose.msra.mxu0 0.0
    %2169 = vmatprep.subr.mxu0 0.0
    %2170 = vmatpush1.xpose.msra.mxu0 0.0
    %2171 = vmatprep.subr.mxu0 0.0
    %2172 = vmatpush1.xpose.msra.mxu0 0.0
    %2173 = vmatprep.subr.mxu0 0.0
    %2174 = vmatpush1.xpose.msra.mxu0 0.0
    %2175 = vmatprep.subr.mxu0 0.0
    %2176 = vmatpush1.xpose.msra.mxu0 0.0
    %2177 = vmatprep.subr.mxu0 0.0
    %2178 = vmatpush1.xpose.msra.mxu0 %v2145
    %2179 = vmatprep.subr.mxu0 0.0
    %2180 = vmatpush2.xpose.msra.mxu0 0.0
    %2181 = vmatprep.subr.mxu0 0.0
    %2182 = vmatpush2.xpose.msra.mxu0 0.0
    %2183 = vmatprep.subr.mxu0 0.0
    %2184 = vmatpush2.xpose.msra.mxu0 0.0
    %2185 = vmatprep.subr.mxu0 0.0
    %2186 = vmatpush2.xpose.msra.mxu0 0.0
    %2187 = vmatprep.subr.mxu0 0.0
    %2188 = vmatpush2.xpose.msra.mxu0 0.0
    %2189 = vmatprep.subr.mxu0 0.0
    %2190 = vmatpush2.xpose.msra.mxu0 0.0
    %2191 = vmatprep.subr.mxu0 0.0
    %2192 = vmatpush2.xpose.msra.mxu0 0.0
    %2193 = vmatprep.subr.mxu0 0.0
    %2194 = vmatpush2.xpose.msra.mxu0 0.0
    %2195 = vmatprep.subr.mxu0 0.0
    %2196 = vmatpush2.xpose.msra.mxu0 0.0
    %2197 = vmatprep.subr.mxu0 0.0
    %2198 = vmatpush2.xpose.msra.mxu0 0.0
    %2199 = vmatprep.subr.mxu0 0.0
    %2200 = vmatpush2.xpose.msra.mxu0 0.0
    %2201 = vmatprep.subr.mxu0 0.0
    %2202 = vmatpush2.xpose.msra.mxu0 0.0
    %2203 = vmatprep.subr.mxu0 0.0
    %2204 = vmatpush2.xpose.msra.mxu0 0.0
    %2205 = vmatprep.subr.mxu0 0.0
    %2206 = vmatpush2.xpose.msra.mxu0 0.0
    %2207 = vmatprep.subr.mxu0 0.0
    %2208 = vmatpush2.xpose.msra.mxu0 0.0
    %2209 = vmatprep.subr.mxu0 0.0
    %2210 = vmatpush2.xpose.msra.mxu0 0.0
    %2211 = vmatprep.mubr.f32.mxu0 0.0
    %2212 = vmatmul.mubr.f32.gmra.mxu0 %v2143
    %v2213 = vpop.f32.mrf.mxu0
    %v2214 = vadd.f32 0.0, %v2213
    %v2215 = vpop.f32.mrf.mxu0
    %2216 = vdwg.mxu0
    %v2217 = vsel %vm305, %v2214, -inf
    %2218 = vmax.xlane.f32.xlu0 %v2217
    %v2219 = vpop.xlane.xlu0 %2218
    %v2220 = vsub.f32 %v2214, %v2219
    %v2221 = vmul.f32 %v2220, 1.442695
    %v2222 = vpow.pop %v2221
    %2223 = vrot.lane.b32.xlu0 %v1800, 96
    %v2224 = vpop.permute.xlu0 %2223
    %v2227 = vsel %vm305, %v2222, 0
    %2229 = vmatprep.subr.mxu0 0.0
    %2230 = vmatpush1.msra.mxu0 0.0
    %2231 = vmatprep.subr.mxu0 0.0
    %2232 = vmatpush1.msra.mxu0 0.0
    %2233 = vmatprep.subr.mxu0 0.0
    %2234 = vmatpush1.msra.mxu0 0.0
    %2235 = vmatprep.subr.mxu0 0.0
    %2236 = vmatpush1.msra.mxu0 0.0
    %2237 = vmatprep.subr.mxu0 0.0
    %2238 = vmatpush1.msra.mxu0 0.0
    %2239 = vmatprep.subr.mxu0 0.0
    %2240 = vmatpush1.msra.mxu0 0.0
    %2241 = vmatprep.subr.mxu0 0.0
    %2242 = vmatpush1.msra.mxu0 0.0
    %2243 = vmatprep.subr.mxu0 0.0
    %2244 = vmatpush1.msra.mxu0 0.0
    %2245 = vmatprep.subr.mxu0 0.0
    %2246 = vmatpush1.msra.mxu0 0.0
    %2247 = vmatprep.subr.mxu0 0.0
    %2248 = vmatpush1.msra.mxu0 0.0
    %2249 = vmatprep.subr.mxu0 0.0
    %2250 = vmatpush1.msra.mxu0 0.0
    %2251 = vmatprep.subr.mxu0 0.0
    %2252 = vmatpush1.msra.mxu0 0.0
    %2253 = vmatprep.subr.mxu0 0.0
    %2254 = vmatpush1.msra.mxu0 0.0
    %2255 = vmatprep.subr.mxu0 0.0
    %2256 = vmatpush1.msra.mxu0 0.0
    %2257 = vmatprep.subr.mxu0 0.0
    %2258 = vmatpush1.msra.mxu0 0.0
    %2259 = vmatprep.subr.mxu0 0.0
    %2260 = vmatpush1.msra.mxu0 %v2224
    %2261 = vmatprep.subr.mxu0 0.0
    %2262 = vmatpush2.msra.mxu0 0.0
    %2263 = vmatprep.subr.mxu0 0.0
    %2264 = vmatpush2.msra.mxu0 0.0
    %2265 = vmatprep.subr.mxu0 0.0
    %2266 = vmatpush2.msra.mxu0 0.0
    %2267 = vmatprep.subr.mxu0 0.0
    %2268 = vmatpush2.msra.mxu0 0.0
    %2269 = vmatprep.subr.mxu0 0.0
    %2270 = vmatpush2.msra.mxu0 0.0
    %2271 = vmatprep.subr.mxu0 0.0
    %2272 = vmatpush2.msra.mxu0 0.0
    %2273 = vmatprep.subr.mxu0 0.0
    %2274 = vmatpush2.msra.mxu0 0.0
    %2275 = vmatprep.subr.mxu0 0.0
    %2276 = vmatpush2.msra.mxu0 0.0
    %2277 = vmatprep.subr.mxu0 0.0
    %2278 = vmatpush2.msra.mxu0 0.0
    %2279 = vmatprep.subr.mxu0 0.0
    %2280 = vmatpush2.msra.mxu0 0.0
    %2281 = vmatprep.subr.mxu0 0.0
    %2282 = vmatpush2.msra.mxu0 0.0
    %2283 = vmatprep.subr.mxu0 0.0
    %2284 = vmatpush2.msra.mxu0 0.0
    %2285 = vmatprep.subr.mxu0 0.0
    %2286 = vmatpush2.msra.mxu0 0.0
    %2287 = vmatprep.subr.mxu0 0.0
    %2288 = vmatpush2.msra.mxu0 0.0
    %2289 = vmatprep.subr.mxu0 0.0
    %2290 = vmatpush2.msra.mxu0 0.0
    %2291 = vmatprep.subr.mxu0 0.0
    %2292 = vmatpush2.msra.mxu0 0.0
    %2293 = vmatprep.mubr.f32.mxu0 0.0
    %2294 = vmatmul.mubr.f32.gmra.mxu0 %v2227
    %v2295 = vpop.f32.mrf.mxu0
    %v2296 = vadd.f32 0.0, %v2295
    %v2297 = vpop.f32.mrf.mxu0
    %2298 = vdwg.mxu0
    %v2299 = vrcp.pop %v2296
    %2301 = vset.pattern.permute.xlu0 10
    %2302 = vperm.xlu0 %2301, %v2299
    %v2303 = vpop.permute.xlu0 %2302
    %v2305 = vmul.f32 %v2296, %v2303
    %2306 = vrot.lane.b32.xlu0 %v1798, 80
    %v2307 = vpop.permute.xlu0 %2306
    %2308 = vrot.lane.b32.xlu0 %v1798, 16
    %v2309 = vpop.permute.xlu0 %2308
    %v2310 = vsel %vm228, %v2307, 0
    %v2312 = vsel %vm228, %v2309, 0
    %2314 = vmatprep.subr.mxu0 0.0
    %2315 = vmatpush1.xpose.msra.mxu0 0.0
    %2316 = vmatprep.subr.mxu0 0.0
    %2317 = vmatpush1.xpose.msra.mxu0 0.0
    %2318 = vmatprep.subr.mxu0 0.0
    %2319 = vmatpush1.xpose.msra.mxu0 0.0
    %2320 = vmatprep.subr.mxu0 0.0
    %2321 = vmatpush1.xpose.msra.mxu0 0.0
    %2322 = vmatprep.subr.mxu0 0.0
    %2323 = vmatpush1.xpose.msra.mxu0 0.0
    %2324 = vmatprep.subr.mxu0 0.0
    %2325 = vmatpush1.xpose.msra.mxu0 0.0
    %2326 = vmatprep.subr.mxu0 0.0
    %2327 = vmatpush1.xpose.msra.mxu0 0.0
    %2328 = vmatprep.subr.mxu0 0.0
    %2329 = vmatpush1.xpose.msra.mxu0 0.0
    %2330 = vmatprep.subr.mxu0 0.0
    %2331 = vmatpush1.xpose.msra.mxu0 0.0
    %2332 = vmatprep.subr.mxu0 0.0
    %2333 = vmatpush1.xpose.msra.mxu0 0.0
    %2334 = vmatprep.subr.mxu0 0.0
    %2335 = vmatpush1.xpose.msra.mxu0 0.0
    %2336 = vmatprep.subr.mxu0 0.0
    %2337 = vmatpush1.xpose.msra.mxu0 0.0
    %2338 = vmatprep.subr.mxu0 0.0
    %2339 = vmatpush1.xpose.msra.mxu0 0.0
    %2340 = vmatprep.subr.mxu0 0.0
    %2341 = vmatpush1.xpose.msra.mxu0 0.0
    %2342 = vmatprep.subr.mxu0 0.0
    %2343 = vmatpush1.xpose.msra.mxu0 0.0
    %2344 = vmatprep.subr.mxu0 0.0
    %2345 = vmatpush1.xpose.msra.mxu0 %v2312
    %2346 = vmatprep.subr.mxu0 0.0
    %2347 = vmatpush2.xpose.msra.mxu0 0.0
    %2348 = vmatprep.subr.mxu0 0.0
    %2349 = vmatpush2.xpose.msra.mxu0 0.0
    %2350 = vmatprep.subr.mxu0 0.0
    %2351 = vmatpush2.xpose.msra.mxu0 0.0
    %2352 = vmatprep.subr.mxu0 0.0
    %2353 = vmatpush2.xpose.msra.mxu0 0.0
    %2354 = vmatprep.subr.mxu0 0.0
    %2355 = vmatpush2.xpose.msra.mxu0 0.0
    %2356 = vmatprep.subr.mxu0 0.0
    %2357 = vmatpush2.xpose.msra.mxu0 0.0
    %2358 = vmatprep.subr.mxu0 0.0
    %2359 = vmatpush2.xpose.msra.mxu0 0.0
    %2360 = vmatprep.subr.mxu0 0.0
    %2361 = vmatpush2.xpose.msra.mxu0 0.0
    %2362 = vmatprep.subr.mxu0 0.0
    %2363 = vmatpush2.xpose.msra.mxu0 0.0
    %2364 = vmatprep.subr.mxu0 0.0
    %2365 = vmatpush2.xpose.msra.mxu0 0.0
    %2366 = vmatprep.subr.mxu0 0.0
    %2367 = vmatpush2.xpose.msra.mxu0 0.0
    %2368 = vmatprep.subr.mxu0 0.0
    %2369 = vmatpush2.xpose.msra.mxu0 0.0
    %2370 = vmatprep.subr.mxu0 0.0
    %2371 = vmatpush2.xpose.msra.mxu0 0.0
    %2372 = vmatprep.subr.mxu0 0.0
    %2373 = vmatpush2.xpose.msra.mxu0 0.0
    %2374 = vmatprep.subr.mxu0 0.0
    %2375 = vmatpush2.xpose.msra.mxu0 0.0
    %2376 = vmatprep.subr.mxu0 0.0
    %2377 = vmatpush2.xpose.msra.mxu0 0.0
    %2378 = vmatprep.mubr.f32.mxu0 0.0
    %2379 = vmatmul.mubr.f32.gmra.mxu0 %v2310
    %v2380 = vpop.f32.mrf.mxu0
    %v2381 = vadd.f32 0.0, %v2380
    %v2382 = vpop.f32.mrf.mxu0
    %2383 = vdwg.mxu0
    %v2384 = vsel %vm305, %v2381, -inf
    %2385 = vmax.xlane.f32.xlu0 %v2384
    %v2386 = vpop.xlane.xlu0 %2385
    %v2387 = vsub.f32 %v2381, %v2386
    %v2388 = vmul.f32 %v2387, 1.442695
    %v2389 = vpow.pop %v2388
    %2390 = vrot.lane.b32.xlu0 %v1800, 80
    %v2391 = vpop.permute.xlu0 %2390
    %v2394 = vsel %vm305, %v2389, 0
    %2396 = vmatprep.subr.mxu0 0.0
    %2397 = vmatpush1.msra.mxu0 0.0
    %2398 = vmatprep.subr.mxu0 0.0
    %2399 = vmatpush1.msra.mxu0 0.0
    %2400 = vmatprep.subr.mxu0 0.0
    %2401 = vmatpush1.msra.mxu0 0.0
    %2402 = vmatprep.subr.mxu0 0.0
    %2403 = vmatpush1.msra.mxu0 0.0
    %2404 = vmatprep.subr.mxu0 0.0
    %2405 = vmatpush1.msra.mxu0 0.0
    %2406 = vmatprep.subr.mxu0 0.0
    %2407 = vmatpush1.msra.mxu0 0.0
    %2408 = vmatprep.subr.mxu0 0.0
    %2409 = vmatpush1.msra.mxu0 0.0
    %2410 = vmatprep.subr.mxu0 0.0
    %2411 = vmatpush1.msra.mxu0 0.0
    %2412 = vmatprep.subr.mxu0 0.0
    %2413 = vmatpush1.msra.mxu0 0.0
    %2414 = vmatprep.subr.mxu0 0.0
    %2415 = vmatpush1.msra.mxu0 0.0
    %2416 = vmatprep.subr.mxu0 0.0
    %2417 = vmatpush1.msra.mxu0 0.0
    %2418 = vmatprep.subr.mxu0 0.0
    %2419 = vmatpush1.msra.mxu0 0.0
    %2420 = vmatprep.subr.mxu0 0.0
    %2421 = vmatpush1.msra.mxu0 0.0
    %2422 = vmatprep.subr.mxu0 0.0
    %2423 = vmatpush1.msra.mxu0 0.0
    %2424 = vmatprep.subr.mxu0 0.0
    %2425 = vmatpush1.msra.mxu0 0.0
    %2426 = vmatprep.subr.mxu0 0.0
    %2427 = vmatpush1.msra.mxu0 %v2391
    %2428 = vmatprep.subr.mxu0 0.0
    %2429 = vmatpush2.msra.mxu0 0.0
    %2430 = vmatprep.subr.mxu0 0.0
    %2431 = vmatpush2.msra.mxu0 0.0
    %2432 = vmatprep.subr.mxu0 0.0
    %2433 = vmatpush2.msra.mxu0 0.0
    %2434 = vmatprep.subr.mxu0 0.0
    %2435 = vmatpush2.msra.mxu0 0.0
    %2436 = vmatprep.subr.mxu0 0.0
    %2437 = vmatpush2.msra.mxu0 0.0
    %2438 = vmatprep.subr.mxu0 0.0
    %2439 = vmatpush2.msra.mxu0 0.0
    %2440 = vmatprep.subr.mxu0 0.0
    %2441 = vmatpush2.msra.mxu0 0.0
    %2442 = vmatprep.subr.mxu0 0.0
    %2443 = vmatpush2.msra.mxu0 0.0
    %2444 = vmatprep.subr.mxu0 0.0
    %2445 = vmatpush2.msra.mxu0 0.0
    %2446 = vmatprep.subr.mxu0 0.0
    %2447 = vmatpush2.msra.mxu0 0.0
    %2448 = vmatprep.subr.mxu0 0.0
    %2449 = vmatpush2.msra.mxu0 0.0
    %2450 = vmatprep.subr.mxu0 0.0
    %2451 = vmatpush2.msra.mxu0 0.0
    %2452 = vmatprep.subr.mxu0 0.0
    %2453 = vmatpush2.msra.mxu0 0.0
    %2454 = vmatprep.subr.mxu0 0.0
    %2455 = vmatpush2.msra.mxu0 0.0
    %2456 = vmatprep.subr.mxu0 0.0
    %2457 = vmatpush2.msra.mxu0 0.0
    %2458 = vmatprep.subr.mxu0 0.0
    %2459 = vmatpush2.msra.mxu0 0.0
    %2460 = vmatprep.mubr.f32.mxu0 0.0
    %2461 = vmatmul.mubr.f32.gmra.mxu0 %v2394
    %v2462 = vpop.f32.mrf.mxu0
    %v2463 = vadd.f32 0.0, %v2462
    %v2464 = vpop.f32.mrf.mxu0
    %2465 = vdwg.mxu0
    %v2466 = vrcp.pop %v2463
    %2468 = vset.pattern.permute.xlu0 10
    %2469 = vperm.xlu0 %2468, %v2466
    %v2470 = vpop.permute.xlu0 %2469
    %v2472 = vmul.f32 %v2463, %v2470
    %2474 = vrot.lane.b32.xlu0 %v2138, 16
    %v2475 = vpop.permute.xlu0 %2474
    %2478 = vrot.lane.b32.xlu0 %v2305, 32
    %v2479 = vpop.permute.xlu0 %2478
    %2482 = vrot.lane.b32.xlu0 %v2472, 48
    %v2483 = vpop.permute.xlu0 %2482
    %v2485 = vsel %vm228, %v1970, %v2475
    %v2486 = vsel %vm1599, %v2485, %v2479
    %v2487 = vsel %vm1601, %v2486, %v2483
    %2489 = vrot.lane.b32.xlu0 %v1804, 64
    %v2490 = vpop.permute.xlu0 %2489
    %v2491 = vsel %vm228, %v1804, 0
    %v2493 = vsel %vm228, %v2490, 0
    %2495 = vmatprep.subr.mxu0 0.0
    %2496 = vmatpush1.xpose.msra.mxu0 0.0
    %2497 = vmatprep.subr.mxu0 0.0
    %2498 = vmatpush1.xpose.msra.mxu0 0.0
    %2499 = vmatprep.subr.mxu0 0.0
    %2500 = vmatpush1.xpose.msra.mxu0 0.0
    %2501 = vmatprep.subr.mxu0 0.0
    %2502 = vmatpush1.xpose.msra.mxu0 0.0
    %2503 = vmatprep.subr.mxu0 0.0
    %2504 = vmatpush1.xpose.msra.mxu0 0.0
    %2505 = vmatprep.subr.mxu0 0.0
    %2506 = vmatpush1.xpose.msra.mxu0 0.0
    %2507 = vmatprep.subr.mxu0 0.0
    %2508 = vmatpush1.xpose.msra.mxu0 0.0
    %2509 = vmatprep.subr.mxu0 0.0
    %2510 = vmatpush1.xpose.msra.mxu0 0.0
    %2511 = vmatprep.subr.mxu0 0.0
    %2512 = vmatpush1.xpose.msra.mxu0 0.0
    %2513 = vmatprep.subr.mxu0 0.0
    %2514 = vmatpush1.xpose.msra.mxu0 0.0
    %2515 = vmatprep.subr.mxu0 0.0
    %2516 = vmatpush1.xpose.msra.mxu0 0.0
    %2517 = vmatprep.subr.mxu0 0.0
    %2518 = vmatpush1.xpose.msra.mxu0 0.0
    %2519 = vmatprep.subr.mxu0 0.0
    %2520 = vmatpush1.xpose.msra.mxu0 0.0
    %2521 = vmatprep.subr.mxu0 0.0
    %2522 = vmatpush1.xpose.msra.mxu0 0.0
    %2523 = vmatprep.subr.mxu0 0.0
    %2524 = vmatpush1.xpose.msra.mxu0 0.0
    %2525 = vmatprep.subr.mxu0 0.0
    %2526 = vmatpush1.xpose.msra.mxu0 %v2493
    %2527 = vmatprep.subr.mxu0 0.0
    %2528 = vmatpush2.xpose.msra.mxu0 0.0
    %2529 = vmatprep.subr.mxu0 0.0
    %2530 = vmatpush2.xpose.msra.mxu0 0.0
    %2531 = vmatprep.subr.mxu0 0.0
    %2532 = vmatpush2.xpose.msra.mxu0 0.0
    %2533 = vmatprep.subr.mxu0 0.0
    %2534 = vmatpush2.xpose.msra.mxu0 0.0
    %2535 = vmatprep.subr.mxu0 0.0
    %2536 = vmatpush2.xpose.msra.mxu0 0.0
    %2537 = vmatprep.subr.mxu0 0.0
    %2538 = vmatpush2.xpose.msra.mxu0 0.0
    %2539 = vmatprep.subr.mxu0 0.0
    %2540 = vmatpush2.xpose.msra.mxu0 0.0
    %2541 = vmatprep.subr.mxu0 0.0
    %2542 = vmatpush2.xpose.msra.mxu0 0.0
    %2543 = vmatprep.subr.mxu0 0.0
    %2544 = vmatpush2.xpose.msra.mxu0 0.0
    %2545 = vmatprep.subr.mxu0 0.0
    %2546 = vmatpush2.xpose.msra.mxu0 0.0
    %2547 = vmatprep.subr.mxu0 0.0
    %2548 = vmatpush2.xpose.msra.mxu0 0.0
    %2549 = vmatprep.subr.mxu0 0.0
    %2550 = vmatpush2.xpose.msra.mxu0 0.0
    %2551 = vmatprep.subr.mxu0 0.0
    %2552 = vmatpush2.xpose.msra.mxu0 0.0
    %2553 = vmatprep.subr.mxu0 0.0
    %2554 = vmatpush2.xpose.msra.mxu0 0.0
    %2555 = vmatprep.subr.mxu0 0.0
    %2556 = vmatpush2.xpose.msra.mxu0 0.0
    %2557 = vmatprep.subr.mxu0 0.0
    %2558 = vmatpush2.xpose.msra.mxu0 0.0
    %2559 = vmatprep.mubr.f32.mxu0 0.0
    %2560 = vmatmul.mubr.f32.gmra.mxu0 %v2491
    %v2561 = vpop.f32.mrf.mxu0
    %v2562 = vadd.f32 0.0, %v2561
    %v2563 = vpop.f32.mrf.mxu0
    %2564 = vdwg.mxu0
    %v2565 = vsel %vm305, %v2562, -inf
    %2566 = vmax.xlane.f32.xlu0 %v2565
    %v2567 = vpop.xlane.xlu0 %2566
    %v2568 = vsub.f32 %v2562, %v2567
    %v2569 = vmul.f32 %v2568, 1.442695
    %v2570 = vpow.pop %v2569
    %v2572 = vsel %vm305, %v2570, 0
    %2574 = vmatprep.subr.mxu0 0.0
    %2575 = vmatpush1.msra.mxu0 0.0
    %2576 = vmatprep.subr.mxu0 0.0
    %2577 = vmatpush1.msra.mxu0 0.0
    %2578 = vmatprep.subr.mxu0 0.0
    %2579 = vmatpush1.msra.mxu0 0.0
    %2580 = vmatprep.subr.mxu0 0.0
    %2581 = vmatpush1.msra.mxu0 0.0
    %2582 = vmatprep.subr.mxu0 0.0
    %2583 = vmatpush1.msra.mxu0 0.0
    %2584 = vmatprep.subr.mxu0 0.0
    %2585 = vmatpush1.msra.mxu0 0.0
    %2586 = vmatprep.subr.mxu0 0.0
    %2587 = vmatpush1.msra.mxu0 0.0
    %2588 = vmatprep.subr.mxu0 0.0
    %2589 = vmatpush1.msra.mxu0 0.0
    %2590 = vmatprep.subr.mxu0 0.0
    %2591 = vmatpush1.msra.mxu0 0.0
    %2592 = vmatprep.subr.mxu0 0.0
    %2593 = vmatpush1.msra.mxu0 0.0
    %2594 = vmatprep.subr.mxu0 0.0
    %2595 = vmatpush1.msra.mxu0 0.0
    %2596 = vmatprep.subr.mxu0 0.0
    %2597 = vmatpush1.msra.mxu0 0.0
    %2598 = vmatprep.subr.mxu0 0.0
    %2599 = vmatpush1.msra.mxu0 0.0
    %2600 = vmatprep.subr.mxu0 0.0
    %2601 = vmatpush1.msra.mxu0 0.0
    %2602 = vmatprep.subr.mxu0 0.0
    %2603 = vmatpush1.msra.mxu0 0.0
    %2604 = vmatprep.subr.mxu0 0.0
    %2605 = vmatpush1.msra.mxu0 %v1806
    %2606 = vmatprep.subr.mxu0 0.0
    %2607 = vmatpush2.msra.mxu0 0.0
    %2608 = vmatprep.subr.mxu0 0.0
    %2609 = vmatpush2.msra.mxu0 0.0
    %2610 = vmatprep.subr.mxu0 0.0
    %2611 = vmatpush2.msra.mxu0 0.0
    %2612 = vmatprep.subr.mxu0 0.0
    %2613 = vmatpush2.msra.mxu0 0.0
    %2614 = vmatprep.subr.mxu0 0.0
    %2615 = vmatpush2.msra.mxu0 0.0
    %2616 = vmatprep.subr.mxu0 0.0
    %2617 = vmatpush2.msra.mxu0 0.0
    %2618 = vmatprep.subr.mxu0 0.0
    %2619 = vmatpush2.msra.mxu0 0.0
    %2620 = vmatprep.subr.mxu0 0.0
    %2621 = vmatpush2.msra.mxu0 0.0
    %2622 = vmatprep.subr.mxu0 0.0
    %2623 = vmatpush2.msra.mxu0 0.0
    %2624 = vmatprep.subr.mxu0 0.0
    %2625 = vmatpush2.msra.mxu0 0.0
    %2626 = vmatprep.subr.mxu0 0.0
    %2627 = vmatpush2.msra.mxu0 0.0
    %2628 = vmatprep.subr.mxu0 0.0
    %2629 = vmatpush2.msra.mxu0 0.0
    %2630 = vmatprep.subr.mxu0 0.0
    %2631 = vmatpush2.msra.mxu0 0.0
    %2632 = vmatprep.subr.mxu0 0.0
    %2633 = vmatpush2.msra.mxu0 0.0
    %2634 = vmatprep.subr.mxu0 0.0
    %2635 = vmatpush2.msra.mxu0 0.0
    %2636 = vmatprep.subr.mxu0 0.0
    %2637 = vmatpush2.msra.mxu0 0.0
    %2638 = vmatprep.mubr.f32.mxu0 0.0
    %2639 = vmatmul.mubr.f32.gmra.mxu0 %v2572
    %v2640 = vpop.f32.mrf.mxu0
    %v2641 = vadd.f32 0.0, %v2640
    %v2642 = vpop.f32.mrf.mxu0
    %2643 = vdwg.mxu0
    %v2644 = vrcp.pop %v2641
    %2646 = vset.pattern.permute.xlu0 10
    %2647 = vperm.xlu0 %2646, %v2644
    %v2648 = vpop.permute.xlu0 %2647
    %v2650 = vmul.f32 %v2641, %v2648
    %2651 = vrot.lane.b32.xlu0 %v1804, 112
    %v2652 = vpop.permute.xlu0 %2651
    %2653 = vrot.lane.b32.xlu0 %v1804, 48
    %v2654 = vpop.permute.xlu0 %2653
    %v2655 = vsel %vm228, %v2652, 0
    %v2657 = vsel %vm228, %v2654, 0
    %2659 = vmatprep.subr.mxu0 0.0
    %2660 = vmatpush1.xpose.msra.mxu0 0.0
    %2661 = vmatprep.subr.mxu0 0.0
    %2662 = vmatpush1.xpose.msra.mxu0 0.0
    %2663 = vmatprep.subr.mxu0 0.0
    %2664 = vmatpush1.xpose.msra.mxu0 0.0
    %2665 = vmatprep.subr.mxu0 0.0
    %2666 = vmatpush1.xpose.msra.mxu0 0.0
    %2667 = vmatprep.subr.mxu0 0.0
    %2668 = vmatpush1.xpose.msra.mxu0 0.0
    %2669 = vmatprep.subr.mxu0 0.0
    %2670 = vmatpush1.xpose.msra.mxu0 0.0
    %2671 = vmatprep.subr.mxu0 0.0
    %2672 = vmatpush1.xpose.msra.mxu0 0.0
    %2673 = vmatprep.subr.mxu0 0.0
    %2674 = vmatpush1.xpose.msra.mxu0 0.0
    %2675 = vmatprep.subr.mxu0 0.0
    %2676 = vmatpush1.xpose.msra.mxu0 0.0
    %2677 = vmatprep.subr.mxu0 0.0
    %2678 = vmatpush1.xpose.msra.mxu0 0.0
    %2679 = vmatprep.subr.mxu0 0.0
    %2680 = vmatpush1.xpose.msra.mxu0 0.0
    %2681 = vmatprep.subr.mxu0 0.0
    %2682 = vmatpush1.xpose.msra.mxu0 0.0
    %2683 = vmatprep.subr.mxu0 0.0
    %2684 = vmatpush1.xpose.msra.mxu0 0.0
    %2685 = vmatprep.subr.mxu0 0.0
    %2686 = vmatpush1.xpose.msra.mxu0 0.0
    %2687 = vmatprep.subr.mxu0 0.0
    %2688 = vmatpush1.xpose.msra.mxu0 0.0
    %2689 = vmatprep.subr.mxu0 0.0
    %2690 = vmatpush1.xpose.msra.mxu0 %v2657
    %2691 = vmatprep.subr.mxu0 0.0
    %2692 = vmatpush2.xpose.msra.mxu0 0.0
    %2693 = vmatprep.subr.mxu0 0.0
    %2694 = vmatpush2.xpose.msra.mxu0 0.0
    %2695 = vmatprep.subr.mxu0 0.0
    %2696 = vmatpush2.xpose.msra.mxu0 0.0
    %2697 = vmatprep.subr.mxu0 0.0
    %2698 = vmatpush2.xpose.msra.mxu0 0.0
    %2699 = vmatprep.subr.mxu0 0.0
    %2700 = vmatpush2.xpose.msra.mxu0 0.0
    %2701 = vmatprep.subr.mxu0 0.0
    %2702 = vmatpush2.xpose.msra.mxu0 0.0
    %2703 = vmatprep.subr.mxu0 0.0
    %2704 = vmatpush2.xpose.msra.mxu0 0.0
    %2705 = vmatprep.subr.mxu0 0.0
    %2706 = vmatpush2.xpose.msra.mxu0 0.0
    %2707 = vmatprep.subr.mxu0 0.0
    %2708 = vmatpush2.xpose.msra.mxu0 0.0
    %2709 = vmatprep.subr.mxu0 0.0
    %2710 = vmatpush2.xpose.msra.mxu0 0.0
    %2711 = vmatprep.subr.mxu0 0.0
    %2712 = vmatpush2.xpose.msra.mxu0 0.0
    %2713 = vmatprep.subr.mxu0 0.0
    %2714 = vmatpush2.xpose.msra.mxu0 0.0
    %2715 = vmatprep.subr.mxu0 0.0
    %2716 = vmatpush2.xpose.msra.mxu0 0.0
    %2717 = vmatprep.subr.mxu0 0.0
    %2718 = vmatpush2.xpose.msra.mxu0 0.0
    %2719 = vmatprep.subr.mxu0 0.0
    %2720 = vmatpush2.xpose.msra.mxu0 0.0
    %2721 = vmatprep.subr.mxu0 0.0
    %2722 = vmatpush2.xpose.msra.mxu0 0.0
    %2723 = vmatprep.mubr.f32.mxu0 0.0
    %2724 = vmatmul.mubr.f32.gmra.mxu0 %v2655
    %v2725 = vpop.f32.mrf.mxu0
    %v2726 = vadd.f32 0.0, %v2725
    %v2727 = vpop.f32.mrf.mxu0
    %2728 = vdwg.mxu0
    %v2729 = vsel %vm305, %v2726, -inf
    %2730 = vmax.xlane.f32.xlu0 %v2729
    %v2731 = vpop.xlane.xlu0 %2730
    %v2732 = vsub.f32 %v2726, %v2731
    %v2733 = vmul.f32 %v2732, 1.442695
    %v2734 = vpow.pop %v2733
    %2736 = vrot.lane.b32.xlu0 %v1806, 112
    %v2737 = vpop.permute.xlu0 %2736
    %v2740 = vsel %vm305, %v2734, 0
    %2742 = vmatprep.subr.mxu0 0.0
    %2743 = vmatpush1.msra.mxu0 0.0
    %2744 = vmatprep.subr.mxu0 0.0
    %2745 = vmatpush1.msra.mxu0 0.0
    %2746 = vmatprep.subr.mxu0 0.0
    %2747 = vmatpush1.msra.mxu0 0.0
    %2748 = vmatprep.subr.mxu0 0.0
    %2749 = vmatpush1.msra.mxu0 0.0
    %2750 = vmatprep.subr.mxu0 0.0
    %2751 = vmatpush1.msra.mxu0 0.0
    %2752 = vmatprep.subr.mxu0 0.0
    %2753 = vmatpush1.msra.mxu0 0.0
    %2754 = vmatprep.subr.mxu0 0.0
    %2755 = vmatpush1.msra.mxu0 0.0
    %2756 = vmatprep.subr.mxu0 0.0
    %2757 = vmatpush1.msra.mxu0 0.0
    %2758 = vmatprep.subr.mxu0 0.0
    %2759 = vmatpush1.msra.mxu0 0.0
    %2760 = vmatprep.subr.mxu0 0.0
    %2761 = vmatpush1.msra.mxu0 0.0
    %2762 = vmatprep.subr.mxu0 0.0
    %2763 = vmatpush1.msra.mxu0 0.0
    %2764 = vmatprep.subr.mxu0 0.0
    %2765 = vmatpush1.msra.mxu0 0.0
    %2766 = vmatprep.subr.mxu0 0.0
    %2767 = vmatpush1.msra.mxu0 0.0
    %2768 = vmatprep.subr.mxu0 0.0
    %2769 = vmatpush1.msra.mxu0 0.0
    %2770 = vmatprep.subr.mxu0 0.0
    %2771 = vmatpush1.msra.mxu0 0.0
    %2772 = vmatprep.subr.mxu0 0.0
    %2773 = vmatpush1.msra.mxu0 %v2737
    %2774 = vmatprep.subr.mxu0 0.0
    %2775 = vmatpush2.msra.mxu0 0.0
    %2776 = vmatprep.subr.mxu0 0.0
    %2777 = vmatpush2.msra.mxu0 0.0
    %2778 = vmatprep.subr.mxu0 0.0
    %2779 = vmatpush2.msra.mxu0 0.0
    %2780 = vmatprep.subr.mxu0 0.0
    %2781 = vmatpush2.msra.mxu0 0.0
    %2782 = vmatprep.subr.mxu0 0.0
    %2783 = vmatpush2.msra.mxu0 0.0
    %2784 = vmatprep.subr.mxu0 0.0
    %2785 = vmatpush2.msra.mxu0 0.0
    %2786 = vmatprep.subr.mxu0 0.0
    %2787 = vmatpush2.msra.mxu0 0.0
    %2788 = vmatprep.subr.mxu0 0.0
    %2789 = vmatpush2.msra.mxu0 0.0
    %2790 = vmatprep.subr.mxu0 0.0
    %2791 = vmatpush2.msra.mxu0 0.0
    %2792 = vmatprep.subr.mxu0 0.0
    %2793 = vmatpush2.msra.mxu0 0.0
    %2794 = vmatprep.subr.mxu0 0.0
    %2795 = vmatpush2.msra.mxu0 0.0
    %2796 = vmatprep.subr.mxu0 0.0
    %2797 = vmatpush2.msra.mxu0 0.0
    %2798 = vmatprep.subr.mxu0 0.0
    %2799 = vmatpush2.msra.mxu0 0.0
    %2800 = vmatprep.subr.mxu0 0.0
    %2801 = vmatpush2.msra.mxu0 0.0
    %2802 = vmatprep.subr.mxu0 0.0
    %2803 = vmatpush2.msra.mxu0 0.0
    %2804 = vmatprep.subr.mxu0 0.0
    %2805 = vmatpush2.msra.mxu0 0.0
    %2806 = vmatprep.mubr.f32.mxu0 0.0
    %2807 = vmatmul.mubr.f32.gmra.mxu0 %v2740
    %v2808 = vpop.f32.mrf.mxu0
    %v2809 = vadd.f32 0.0, %v2808
    %v2810 = vpop.f32.mrf.mxu0
    %2811 = vdwg.mxu0
    %v2812 = vrcp.pop %v2809
    %2814 = vset.pattern.permute.xlu0 10
    %2815 = vperm.xlu0 %2814, %v2812
    %v2816 = vpop.permute.xlu0 %2815
    %v2818 = vmul.f32 %v2809, %v2816
    %2819 = vrot.lane.b32.xlu0 %v1804, 96
    %v2820 = vpop.permute.xlu0 %2819
    %2821 = vrot.lane.b32.xlu0 %v1804, 32
    %v2822 = vpop.permute.xlu0 %2821
    %v2823 = vsel %vm228, %v2820, 0
    %v2825 = vsel %vm228, %v2822, 0
    %2827 = vmatprep.subr.mxu0 0.0
    %2828 = vmatpush1.xpose.msra.mxu0 0.0
    %2829 = vmatprep.subr.mxu0 0.0
    %2830 = vmatpush1.xpose.msra.mxu0 0.0
    %2831 = vmatprep.subr.mxu0 0.0
    %2832 = vmatpush1.xpose.msra.mxu0 0.0
    %2833 = vmatprep.subr.mxu0 0.0
    %2834 = vmatpush1.xpose.msra.mxu0 0.0
    %2835 = vmatprep.subr.mxu0 0.0
    %2836 = vmatpush1.xpose.msra.mxu0 0.0
    %2837 = vmatprep.subr.mxu0 0.0
    %2838 = vmatpush1.xpose.msra.mxu0 0.0
    %2839 = vmatprep.subr.mxu0 0.0
    %2840 = vmatpush1.xpose.msra.mxu0 0.0
    %2841 = vmatprep.subr.mxu0 0.0
    %2842 = vmatpush1.xpose.msra.mxu0 0.0
    %2843 = vmatprep.subr.mxu0 0.0
    %2844 = vmatpush1.xpose.msra.mxu0 0.0
    %2845 = vmatprep.subr.mxu0 0.0
    %2846 = vmatpush1.xpose.msra.mxu0 0.0
    %2847 = vmatprep.subr.mxu0 0.0
    %2848 = vmatpush1.xpose.msra.mxu0 0.0
    %2849 = vmatprep.subr.mxu0 0.0
    %2850 = vmatpush1.xpose.msra.mxu0 0.0
    %2851 = vmatprep.subr.mxu0 0.0
    %2852 = vmatpush1.xpose.msra.mxu0 0.0
    %2853 = vmatprep.subr.mxu0 0.0
    %2854 = vmatpush1.xpose.msra.mxu0 0.0
    %2855 = vmatprep.subr.mxu0 0.0
    %2856 = vmatpush1.xpose.msra.mxu0 0.0
    %2857 = vmatprep.subr.mxu0 0.0
    %2858 = vmatpush1.xpose.msra.mxu0 %v2825
    %2859 = vmatprep.subr.mxu0 0.0
    %2860 = vmatpush2.xpose.msra.mxu0 0.0
    %2861 = vmatprep.subr.mxu0 0.0
    %2862 = vmatpush2.xpose.msra.mxu0 0.0
    %2863 = vmatprep.subr.mxu0 0.0
    %2864 = vmatpush2.xpose.msra.mxu0 0.0
    %2865 = vmatprep.subr.mxu0 0.0
    %2866 = vmatpush2.xpose.msra.mxu0 0.0
    %2867 = vmatprep.subr.mxu0 0.0
    %2868 = vmatpush2.xpose.msra.mxu0 0.0
    %2869 = vmatprep.subr.mxu0 0.0
    %2870 = vmatpush2.xpose.msra.mxu0 0.0
    %2871 = vmatprep.subr.mxu0 0.0
    %2872 = vmatpush2.xpose.msra.mxu0 0.0
    %2873 = vmatprep.subr.mxu0 0.0
    %2874 = vmatpush2.xpose.msra.mxu0 0.0
    %2875 = vmatprep.subr.mxu0 0.0
    %2876 = vmatpush2.xpose.msra.mxu0 0.0
    %2877 = vmatprep.subr.mxu0 0.0
    %2878 = vmatpush2.xpose.msra.mxu0 0.0
    %2879 = vmatprep.subr.mxu0 0.0
    %2880 = vmatpush2.xpose.msra.mxu0 0.0
    %2881 = vmatprep.subr.mxu0 0.0
    %2882 = vmatpush2.xpose.msra.mxu0 0.0
    %2883 = vmatprep.subr.mxu0 0.0
    %2884 = vmatpush2.xpose.msra.mxu0 0.0
    %2885 = vmatprep.subr.mxu0 0.0
    %2886 = vmatpush2.xpose.msra.mxu0 0.0
    %2887 = vmatprep.subr.mxu0 0.0
    %2888 = vmatpush2.xpose.msra.mxu0 0.0
    %2889 = vmatprep.subr.mxu0 0.0
    %2890 = vmatpush2.xpose.msra.mxu0 0.0
    %2891 = vmatprep.mubr.f32.mxu0 0.0
    %2892 = vmatmul.mubr.f32.gmra.mxu0 %v2823
    %v2893 = vpop.f32.mrf.mxu0
    %v2894 = vadd.f32 0.0, %v2893
    %v2895 = vpop.f32.mrf.mxu0
    %2896 = vdwg.mxu0
    %v2897 = vsel %vm305, %v2894, -inf
    %2898 = vmax.xlane.f32.xlu0 %v2897
    %v2899 = vpop.xlane.xlu0 %2898
    %v2900 = vsub.f32 %v2894, %v2899
    %v2901 = vmul.f32 %v2900, 1.442695
    %v2902 = vpow.pop %v2901
    %2903 = vrot.lane.b32.xlu0 %v1806, 96
    %v2904 = vpop.permute.xlu0 %2903
    %v2907 = vsel %vm305, %v2902, 0
    %2909 = vmatprep.subr.mxu0 0.0
    %2910 = vmatpush1.msra.mxu0 0.0
    %2911 = vmatprep.subr.mxu0 0.0
    %2912 = vmatpush1.msra.mxu0 0.0
    %2913 = vmatprep.subr.mxu0 0.0
    %2914 = vmatpush1.msra.mxu0 0.0
    %2915 = vmatprep.subr.mxu0 0.0
    %2916 = vmatpush1.msra.mxu0 0.0
    %2917 = vmatprep.subr.mxu0 0.0
    %2918 = vmatpush1.msra.mxu0 0.0
    %2919 = vmatprep.subr.mxu0 0.0
    %2920 = vmatpush1.msra.mxu0 0.0
    %2921 = vmatprep.subr.mxu0 0.0
    %2922 = vmatpush1.msra.mxu0 0.0
    %2923 = vmatprep.subr.mxu0 0.0
    %2924 = vmatpush1.msra.mxu0 0.0
    %2925 = vmatprep.subr.mxu0 0.0
    %2926 = vmatpush1.msra.mxu0 0.0
    %2927 = vmatprep.subr.mxu0 0.0
    %2928 = vmatpush1.msra.mxu0 0.0
    %2929 = vmatprep.subr.mxu0 0.0
    %2930 = vmatpush1.msra.mxu0 0.0
    %2931 = vmatprep.subr.mxu0 0.0
    %2932 = vmatpush1.msra.mxu0 0.0
    %2933 = vmatprep.subr.mxu0 0.0
    %2934 = vmatpush1.msra.mxu0 0.0
    %2935 = vmatprep.subr.mxu0 0.0
    %2936 = vmatpush1.msra.mxu0 0.0
    %2937 = vmatprep.subr.mxu0 0.0
    %2938 = vmatpush1.msra.mxu0 0.0
    %2939 = vmatprep.subr.mxu0 0.0
    %2940 = vmatpush1.msra.mxu0 %v2904
    %2941 = vmatprep.subr.mxu0 0.0
    %2942 = vmatpush2.msra.mxu0 0.0
    %2943 = vmatprep.subr.mxu0 0.0
    %2944 = vmatpush2.msra.mxu0 0.0
    %2945 = vmatprep.subr.mxu0 0.0
    %2946 = vmatpush2.msra.mxu0 0.0
    %2947 = vmatprep.subr.mxu0 0.0
    %2948 = vmatpush2.msra.mxu0 0.0
    %2949 = vmatprep.subr.mxu0 0.0
    %2950 = vmatpush2.msra.mxu0 0.0
    %2951 = vmatprep.subr.mxu0 0.0
    %2952 = vmatpush2.msra.mxu0 0.0
    %2953 = vmatprep.subr.mxu0 0.0
    %2954 = vmatpush2.msra.mxu0 0.0
    %2955 = vmatprep.subr.mxu0 0.0
    %2956 = vmatpush2.msra.mxu0 0.0
    %2957 = vmatprep.subr.mxu0 0.0
    %2958 = vmatpush2.msra.mxu0 0.0
    %2959 = vmatprep.subr.mxu0 0.0
    %2960 = vmatpush2.msra.mxu0 0.0
    %2961 = vmatprep.subr.mxu0 0.0
    %2962 = vmatpush2.msra.mxu0 0.0
    %2963 = vmatprep.subr.mxu0 0.0
    %2964 = vmatpush2.msra.mxu0 0.0
    %2965 = vmatprep.subr.mxu0 0.0
    %2966 = vmatpush2.msra.mxu0 0.0
    %2967 = vmatprep.subr.mxu0 0.0
    %2968 = vmatpush2.msra.mxu0 0.0
    %2969 = vmatprep.subr.mxu0 0.0
    %2970 = vmatpush2.msra.mxu0 0.0
    %2971 = vmatprep.subr.mxu0 0.0
    %2972 = vmatpush2.msra.mxu0 0.0
    %2973 = vmatprep.mubr.f32.mxu0 0.0
    %2974 = vmatmul.mubr.f32.gmra.mxu0 %v2907
    %v2975 = vpop.f32.mrf.mxu0
    %v2976 = vadd.f32 0.0, %v2975
    %v2977 = vpop.f32.mrf.mxu0
    %2978 = vdwg.mxu0
    %v2979 = vrcp.pop %v2976
    %2981 = vset.pattern.permute.xlu0 10
    %2982 = vperm.xlu0 %2981, %v2979
    %v2983 = vpop.permute.xlu0 %2982
    %v2985 = vmul.f32 %v2976, %v2983
    %2986 = vrot.lane.b32.xlu0 %v1804, 80
    %v2987 = vpop.permute.xlu0 %2986
    %2988 = vrot.lane.b32.xlu0 %v1804, 16
    %v2989 = vpop.permute.xlu0 %2988
    %v2990 = vsel %vm228, %v2987, 0
    %v2992 = vsel %vm228, %v2989, 0
    %2994 = vmatprep.subr.mxu0 0.0
    %2995 = vmatpush1.xpose.msra.mxu0 0.0
    %2996 = vmatprep.subr.mxu0 0.0
    %2997 = vmatpush1.xpose.msra.mxu0 0.0
    %2998 = vmatprep.subr.mxu0 0.0
    %2999 = vmatpush1.xpose.msra.mxu0 0.0
    %3000 = vmatprep.subr.mxu0 0.0
    %3001 = vmatpush1.xpose.msra.mxu0 0.0
    %3002 = vmatprep.subr.mxu0 0.0
    %3003 = vmatpush1.xpose.msra.mxu0 0.0
    %3004 = vmatprep.subr.mxu0 0.0
    %3005 = vmatpush1.xpose.msra.mxu0 0.0
    %3006 = vmatprep.subr.mxu0 0.0
    %3007 = vmatpush1.xpose.msra.mxu0 0.0
    %3008 = vmatprep.subr.mxu0 0.0
    %3009 = vmatpush1.xpose.msra.mxu0 0.0
    %3010 = vmatprep.subr.mxu0 0.0
    %3011 = vmatpush1.xpose.msra.mxu0 0.0
    %3012 = vmatprep.subr.mxu0 0.0
    %3013 = vmatpush1.xpose.msra.mxu0 0.0
    %3014 = vmatprep.subr.mxu0 0.0
    %3015 = vmatpush1.xpose.msra.mxu0 0.0
    %3016 = vmatprep.subr.mxu0 0.0
    %3017 = vmatpush1.xpose.msra.mxu0 0.0
    %3018 = vmatprep.subr.mxu0 0.0
    %3019 = vmatpush1.xpose.msra.mxu0 0.0
    %3020 = vmatprep.subr.mxu0 0.0
    %3021 = vmatpush1.xpose.msra.mxu0 0.0
    %3022 = vmatprep.subr.mxu0 0.0
    %3023 = vmatpush1.xpose.msra.mxu0 0.0
    %3024 = vmatprep.subr.mxu0 0.0
    %3025 = vmatpush1.xpose.msra.mxu0 %v2992
    %3026 = vmatprep.subr.mxu0 0.0
    %3027 = vmatpush2.xpose.msra.mxu0 0.0
    %3028 = vmatprep.subr.mxu0 0.0
    %3029 = vmatpush2.xpose.msra.mxu0 0.0
    %3030 = vmatprep.subr.mxu0 0.0
    %3031 = vmatpush2.xpose.msra.mxu0 0.0
    %3032 = vmatprep.subr.mxu0 0.0
    %3033 = vmatpush2.xpose.msra.mxu0 0.0
    %3034 = vmatprep.subr.mxu0 0.0
    %3035 = vmatpush2.xpose.msra.mxu0 0.0
    %3036 = vmatprep.subr.mxu0 0.0
    %3037 = vmatpush2.xpose.msra.mxu0 0.0
    %3038 = vmatprep.subr.mxu0 0.0
    %3039 = vmatpush2.xpose.msra.mxu0 0.0
    %3040 = vmatprep.subr.mxu0 0.0
    %3041 = vmatpush2.xpose.msra.mxu0 0.0
    %3042 = vmatprep.subr.mxu0 0.0
    %3043 = vmatpush2.xpose.msra.mxu0 0.0
    %3044 = vmatprep.subr.mxu0 0.0
    %3045 = vmatpush2.xpose.msra.mxu0 0.0
    %3046 = vmatprep.subr.mxu0 0.0
    %3047 = vmatpush2.xpose.msra.mxu0 0.0
    %3048 = vmatprep.subr.mxu0 0.0
    %3049 = vmatpush2.xpose.msra.mxu0 0.0
    %3050 = vmatprep.subr.mxu0 0.0
    %3051 = vmatpush2.xpose.msra.mxu0 0.0
    %3052 = vmatprep.subr.mxu0 0.0
    %3053 = vmatpush2.xpose.msra.mxu0 0.0
    %3054 = vmatprep.subr.mxu0 0.0
    %3055 = vmatpush2.xpose.msra.mxu0 0.0
    %3056 = vmatprep.subr.mxu0 0.0
    %3057 = vmatpush2.xpose.msra.mxu0 0.0
    %3058 = vmatprep.mubr.f32.mxu0 0.0
    %3059 = vmatmul.mubr.f32.gmra.mxu0 %v2990
    %v3060 = vpop.f32.mrf.mxu0
    %v3061 = vadd.f32 0.0, %v3060
    %v3062 = vpop.f32.mrf.mxu0
    %3063 = vdwg.mxu0
    %v3064 = vsel %vm305, %v3061, -inf
    %3065 = vmax.xlane.f32.xlu0 %v3064
    %v3066 = vpop.xlane.xlu0 %3065
    %v3067 = vsub.f32 %v3061, %v3066
    %v3068 = vmul.f32 %v3067, 1.442695
    %v3069 = vpow.pop %v3068
    %3070 = vrot.lane.b32.xlu0 %v1806, 80
    %v3071 = vpop.permute.xlu0 %3070
    %v3074 = vsel %vm305, %v3069, 0
    %3076 = vmatprep.subr.mxu0 0.0
    %3077 = vmatpush1.msra.mxu0 0.0
    %3078 = vmatprep.subr.mxu0 0.0
    %3079 = vmatpush1.msra.mxu0 0.0
    %3080 = vmatprep.subr.mxu0 0.0
    %3081 = vmatpush1.msra.mxu0 0.0
    %3082 = vmatprep.subr.mxu0 0.0
    %3083 = vmatpush1.msra.mxu0 0.0
    %3084 = vmatprep.subr.mxu0 0.0
    %3085 = vmatpush1.msra.mxu0 0.0
    %3086 = vmatprep.subr.mxu0 0.0
    %3087 = vmatpush1.msra.mxu0 0.0
    %3088 = vmatprep.subr.mxu0 0.0
    %3089 = vmatpush1.msra.mxu0 0.0
    %3090 = vmatprep.subr.mxu0 0.0
    %3091 = vmatpush1.msra.mxu0 0.0
    %3092 = vmatprep.subr.mxu0 0.0
    %3093 = vmatpush1.msra.mxu0 0.0
    %3094 = vmatprep.subr.mxu0 0.0
    %3095 = vmatpush1.msra.mxu0 0.0
    %3096 = vmatprep.subr.mxu0 0.0
    %3097 = vmatpush1.msra.mxu0 0.0
    %3098 = vmatprep.subr.mxu0 0.0
    %3099 = vmatpush1.msra.mxu0 0.0
    %3100 = vmatprep.subr.mxu0 0.0
    %3101 = vmatpush1.msra.mxu0 0.0
    %3102 = vmatprep.subr.mxu0 0.0
    %3103 = vmatpush1.msra.mxu0 0.0
    %3104 = vmatprep.subr.mxu0 0.0
    %3105 = vmatpush1.msra.mxu0 0.0
    %3106 = vmatprep.subr.mxu0 0.0
    %3107 = vmatpush1.msra.mxu0 %v3071
    %3108 = vmatprep.subr.mxu0 0.0
    %3109 = vmatpush2.msra.mxu0 0.0
    %3110 = vmatprep.subr.mxu0 0.0
    %3111 = vmatpush2.msra.mxu0 0.0
    %3112 = vmatprep.subr.mxu0 0.0
    %3113 = vmatpush2.msra.mxu0 0.0
    %3114 = vmatprep.subr.mxu0 0.0
    %3115 = vmatpush2.msra.mxu0 0.0
    %3116 = vmatprep.subr.mxu0 0.0
    %3117 = vmatpush2.msra.mxu0 0.0
    %3118 = vmatprep.subr.mxu0 0.0
    %3119 = vmatpush2.msra.mxu0 0.0
    %3120 = vmatprep.subr.mxu0 0.0
    %3121 = vmatpush2.msra.mxu0 0.0
    %3122 = vmatprep.subr.mxu0 0.0
    %3123 = vmatpush2.msra.mxu0 0.0
    %3124 = vmatprep.subr.mxu0 0.0
    %3125 = vmatpush2.msra.mxu0 0.0
    %3126 = vmatprep.subr.mxu0 0.0
    %3127 = vmatpush2.msra.mxu0 0.0
    %3128 = vmatprep.subr.mxu0 0.0
    %3129 = vmatpush2.msra.mxu0 0.0
    %3130 = vmatprep.subr.mxu0 0.0
    %3131 = vmatpush2.msra.mxu0 0.0
    %3132 = vmatprep.subr.mxu0 0.0
    %3133 = vmatpush2.msra.mxu0 0.0
    %3134 = vmatprep.subr.mxu0 0.0
    %3135 = vmatpush2.msra.mxu0 0.0
    %3136 = vmatprep.subr.mxu0 0.0
    %3137 = vmatpush2.msra.mxu0 0.0
    %3138 = vmatprep.subr.mxu0 0.0
    %3139 = vmatpush2.msra.mxu0 0.0
    %3140 = vmatprep.mubr.f32.mxu0 0.0
    %3141 = vmatmul.mubr.f32.gmra.mxu0 %v3074
    %v3142 = vpop.f32.mrf.mxu0
    %v3143 = vadd.f32 0.0, %v3142
    %v3144 = vpop.f32.mrf.mxu0
    %3145 = vdwg.mxu0
    %v3146 = vrcp.pop %v3143
    %3148 = vset.pattern.permute.xlu0 10
    %3149 = vperm.xlu0 %3148, %v3146
    %v3150 = vpop.permute.xlu0 %3149
    %v3152 = vmul.f32 %v3143, %v3150
    %3154 = vrot.lane.b32.xlu0 %v2818, 16
    %v3155 = vpop.permute.xlu0 %3154
    %3158 = vrot.lane.b32.xlu0 %v2985, 32
    %v3159 = vpop.permute.xlu0 %3158
    %3162 = vrot.lane.b32.xlu0 %v3152, 48
    %v3163 = vpop.permute.xlu0 %3162
    %v3165 = vsel %vm228, %v2650, %v3155
    %v3166 = vsel %vm1599, %v3165, %v3159
    %v3167 = vsel %vm1601, %v3166, %v3163
    %v3168 = vld [vmem:[%s3 + $0x60] sm:$0xff]
    %v3169 = vld [vmem:[%s3 + $0x70] sm:$0xff]
    %v3170 = vld [vmem:[%s3 + $0x80] sm:$0xff]
    %v3171 = vld [vmem:[%s3 + $0x90] sm:$0xff]
    %v3172 = vld [vmem:[%s3 + $0xa0] sm:$0xff]
    %v3173 = vld [vmem:[%s3 + $0xb0] sm:$0xff]
    %v3174 = vld [vmem:[%s3 + $0xc0] sm:$0xff]
    %v3175 = vld [vmem:[%s3 + $0xd0] sm:$0xff]
    %v3176 = vld [vmem:[%s3 + $0xe0] ss:$0 sm:$0xff]
    %v3178 = vsel %vm1603, %v2487, 0
    %v3181 = vsel %vm1603, %v3167, 0
    %3183 = vmatprep.subr.mxu0 0.0
    %3184 = vmatpush1.msra.mxu0 0.0
    %3185 = vmatprep.subr.mxu0 0.0
    %3186 = vmatpush1.msra.mxu0 0.0
    %3187 = vmatprep.subr.mxu0 0.0
    %3188 = vmatpush1.msra.mxu0 0.0
    %3189 = vmatprep.subr.mxu0 0.0
    %3190 = vmatpush1.msra.mxu0 0.0
    %3191 = vmatprep.subr.mxu0 0.0
    %3192 = vmatpush1.msra.mxu0 0.0
    %3193 = vmatprep.subr.mxu0 0.0
    %3194 = vmatpush1.msra.mxu0 0.0
    %3195 = vmatprep.subr.mxu0 0.0
    %3196 = vmatpush1.msra.mxu0 0.0
    %3197 = vmatprep.subr.mxu0 0.0
    %3198 = vmatpush1.msra.mxu0 0.0
    %3199 = vmatprep.subr.mxu0 0.0
    %3200 = vmatpush1.msra.mxu0 %v3175
    %3201 = vmatprep.subr.mxu0 0.0
    %3202 = vmatpush1.msra.mxu0 %v3174
    %3203 = vmatprep.subr.mxu0 0.0
    %3204 = vmatpush1.msra.mxu0 %v3173
    %3205 = vmatprep.subr.mxu0 0.0
    %3206 = vmatpush1.msra.mxu0 %v3172
    %3207 = vmatprep.subr.mxu0 0.0
    %3208 = vmatpush1.msra.mxu0 %v3171
    %3209 = vmatprep.subr.mxu0 0.0
    %3210 = vmatpush1.msra.mxu0 %v3170
    %3211 = vmatprep.subr.mxu0 0.0
    %3212 = vmatpush1.msra.mxu0 %v3169
    %3213 = vmatprep.subr.mxu0 0.0
    %3214 = vmatpush1.msra.mxu0 %v3168
    %3215 = vmatprep.subr.mxu0 0.0
    %3216 = vmatpush2.msra.mxu0 0.0
    %3217 = vmatprep.subr.mxu0 0.0
    %3218 = vmatpush2.msra.mxu0 0.0
    %3219 = vmatprep.subr.mxu0 0.0
    %3220 = vmatpush2.msra.mxu0 0.0
    %3221 = vmatprep.subr.mxu0 0.0
    %3222 = vmatpush2.msra.mxu0 0.0
    %3223 = vmatprep.subr.mxu0 0.0
    %3224 = vmatpush2.msra.mxu0 0.0
    %3225 = vmatprep.subr.mxu0 0.0
    %3226 = vmatpush2.msra.mxu0 0.0
    %3227 = vmatprep.subr.mxu0 0.0
    %3228 = vmatpush2.msra.mxu0 0.0
    %3229 = vmatprep.subr.mxu0 0.0
    %3230 = vmatpush2.msra.mxu0 0.0
    %3231 = vmatprep.subr.mxu0 0.0
    %3232 = vmatpush2.msra.mxu0 0.0
    %3233 = vmatprep.subr.mxu0 0.0
    %3234 = vmatpush2.msra.mxu0 0.0
    %3235 = vmatprep.subr.mxu0 0.0
    %3236 = vmatpush2.msra.mxu0 0.0
    %3237 = vmatprep.subr.mxu0 0.0
    %3238 = vmatpush2.msra.mxu0 0.0
    %3239 = vmatprep.subr.mxu0 0.0
    %3240 = vmatpush2.msra.mxu0 0.0
    %3241 = vmatprep.subr.mxu0 0.0
    %3242 = vmatpush2.msra.mxu0 0.0
    %3243 = vmatprep.subr.mxu0 0.0
    %3244 = vmatpush2.msra.mxu0 0.0
    %3245 = vmatprep.subr.mxu0 0.0
    %3246 = vmatpush2.msra.mxu0 0.0
    %3247 = vmatprep.mubr.f32.mxu0 0.0
    %3248 = vmatmul.mubr.f32.gmra.mxu0 %v3178
    %v3249 = vpop.f32.mrf.mxu0
    %v3250 = vadd.f32 %v3176, %v3249
    %v3251 = vpop.f32.mrf.mxu0
    %3252 = vmatprep.mubr.f32.mxu0 0.0
    %3253 = vmatmul.mubr.f32.gmra.mxu0 %v3181
    %v3254 = vpop.f32.mrf.mxu0
    %v3255 = vadd.f32 %v3176, %v3254
    %v3256 = vpop.f32.mrf.mxu0
    %3257 = vdwg.mxu0
    %3258 = vst.msk [vmem:[#allocation2] sm:$0xff] %vm1724, %v3250
    %3259 = vst.msk [vmem:[#allocation2 + $0x8] sm:$0xff] %vm1724, %v3255
    // Predicated region
    $region18: #{model_forward.1} parent=1 // pred_check
      _
    $region19: #{model_forward.1} parent=1 // pred_check_branch
      %3261 = sbr.rel (0) target = $region21
    $region20: #{model_forward.1} parent=1 // pred_region
      _
    $region21: #{model_forward.1} parent=1 // pred_fallthru
      _
    // Predicated region
    $region22: #{model_forward.1} parent=1 // pred_check
      _
    $region23: #{model_forward.1} parent=1 // pred_check_branch
      %3263 = sbr.rel (0) target = $region25
    $region24: #{model_forward.1} parent=1 // pred_region
      %s3265 = ssub.s32 256, 256
      %3266 = vsyncadd [#allocation3], %s3265
      %s3267 = sshll.u32 [#allocation2], 4
      %s3268 = int_to_ptr.vmem [resolvable:$true] %s3267
      %3273 = dma.vmem_to_hbm [thread:$0]  %s3268, 256, %s5, [#allocation3], 128, 128, 8
    $region25: #{model_forward.1} parent=1 // pred_fallthru
      _
    // Predicated region
    $region26: #{model_forward.1} parent=1 // pred_check
      _
    $region27: #{model_forward.1} parent=1 // pred_check_branch
      %3275 = sbr.rel (0) target = $region29
    $region28: #{model_forward.1} parent=1 // pred_region
      _
    $region29: #{model_forward.1} parent=1 // pred_fallthru
      _
    // Predicated region
    $region30: #{model_forward.1} parent=1 // pred_check
      _
    $region31: #{model_forward.1} parent=1 // pred_check_branch
      %3277 = sbr.rel (0) target = $region33
    $region32: #{model_forward.1} parent=1 // pred_region
      %3278 = dma.done [#allocation3], 256
    $region33: #{model_forward.1} parent=1 // pred_fallthru
      _
    %3279 = vsyncpa [#allocation3], 1

</llo_original>
